<compile_context>
chip_gen: v7x
topology: tpu7x:2x2x1
jax: 0.10.0
libtpu: 0.0.40
codegen_flags: <defaults>
</compile_context>

<pallas_src>
import functools
import math

import jax
import jax.numpy as jnp
from jax.experimental import pallas as pl
from jax.experimental.pallas import tpu as pltpu


# ----------------------------------------------------------------------------
# Helpers
# ----------------------------------------------------------------------------
def _pick_row_tile(M):
    # Prefer multi-step grids (software pipelining + megacore sharding) with the
    # largest tile that divides M; fall back to a single whole-array block.
    for t in (256, 128, 64, 32, 16, 8):
        if M % t == 0 and M // t >= 2:
            return t
    return M


_ROWTILE_PARAMS = pltpu.CompilerParams(
    dimension_semantics=("parallel",),
    vmem_limit_bytes=32 * 1024 * 1024,
)


# ----------------------------------------------------------------------------
# Pallas kernels
# ----------------------------------------------------------------------------
def _linear_kernel(x_ref, w_ref, b_ref, o_ref):
    # o = x @ w + b, bf16 operands, f32 accumulation.
    o_ref[...] = (
        jnp.dot(
            x_ref[...].astype(jnp.bfloat16),
            w_ref[...].astype(jnp.bfloat16),
            preferred_element_type=jnp.float32,
        )
        + b_ref[...]
    )


def _proj_add_ln_kernel(ctx_ref, res_ref, wo_ref, bo_ref, g_ref, b_ref, o_ref, *, eps):
    # LayerNorm(residual + ctx @ Wo + bo)  (matches torch LayerNorm, biased variance).
    y = (
        jnp.dot(
            ctx_ref[...].astype(jnp.bfloat16),
            wo_ref[...].astype(jnp.bfloat16),
            preferred_element_type=jnp.float32,
        )
        + bo_ref[...]
    )
    z = res_ref[...] + y
    mean = jnp.mean(z, axis=-1, keepdims=True)
    var = jnp.mean((z - mean) ** 2, axis=-1, keepdims=True)
    o_ref[...] = (z - mean) * jax.lax.rsqrt(var + eps) * g_ref[...] + b_ref[...]


def _ffn_add_ln_kernel(x_ref, w1_ref, b1_ref, w2_ref, b2_ref, g_ref, b_ref, o_ref, *, eps):
    # LayerNorm(x + relu(x @ W1 + b1) @ W2 + b2)
    # TODO(synk): for large d_ff on v7x (64 MiB VMEM) additionally tile the hidden
    # dim with a VMEM accumulator + pl.when init/finalize instead of holding the
    # full (D,F)/(F,D) weights per step.
    x = x_ref[...]
    h = (
        jnp.dot(
            x.astype(jnp.bfloat16),
            w1_ref[...].astype(jnp.bfloat16),
            preferred_element_type=jnp.float32,
        )
        + b1_ref[...]
    )
    h = jnp.maximum(h, 0.0)
    y = (
        jnp.dot(
            h.astype(jnp.bfloat16),
            w2_ref[...].astype(jnp.bfloat16),
            preferred_element_type=jnp.float32,
        )
        + b2_ref[...]
    )
    z = x + y
    mean = jnp.mean(z, axis=-1, keepdims=True)
    var = jnp.mean((z - mean) ** 2, axis=-1, keepdims=True)
    o_ref[...] = (z - mean) * jax.lax.rsqrt(var + eps) * g_ref[...] + b_ref[...]


def _mha_kernel(q_ref, k_ref, v_ref, m_ref, o_ref, p_ref, *, scale):
    # One batch element, ALL heads per grid step:
    #   q: (H, Sq, dk), k/v: (H, Sk, dk), mask: (Mq, Sk) with Mq in {1, Sq}.
    q = q_ref[...].astype(jnp.bfloat16)
    k = k_ref[...].astype(jnp.bfloat16)
    v = v_ref[...].astype(jnp.bfloat16)
    m = m_ref[...]  # float32 0/1 mask

    s = jnp.einsum("hqd,hkd->hqk", q, k, preferred_element_type=jnp.float32) * scale
    s = jnp.where(m == 0.0, jnp.float32(-1e9), s)  # masked_fill(mask==0, -1e9)

    s_max = jnp.max(s, axis=-1, keepdims=True)
    e = jnp.exp(s - s_max)
    p = e / jnp.sum(e, axis=-1, keepdims=True)  # softmax in f32

    p_ref[...] = p
    o_ref[...] = jnp.einsum(
        "hqk,hkd->hqd", p.astype(jnp.bfloat16), v, preferred_element_type=jnp.float32
    )


# ----------------------------------------------------------------------------
# Pallas wrappers
# ----------------------------------------------------------------------------
def pallas_linear(x2d, w, b):
    M, K = x2d.shape
    N = w.shape[1]
    tm = _pick_row_tile(M)
    return pl.pallas_call(
        _linear_kernel,
        out_shape=jax.ShapeDtypeStruct((M, N), jnp.float32),
        grid=(M // tm,),
        in_specs=[
            pl.BlockSpec((tm, K), lambda i: (i, 0)),
            pl.BlockSpec((K, N), lambda i: (0, 0)),
            pl.BlockSpec((1, N), lambda i: (0, 0)),
        ],
        out_specs=pl.BlockSpec((tm, N), lambda i: (i, 0)),
        compiler_params=_ROWTILE_PARAMS,
    )(x2d, w, b.reshape(1, N))


def pallas_proj_add_ln(ctx2d, res2d, wo, bo, gamma, beta, eps=1e-5):
    M, D = ctx2d.shape
    N = wo.shape[1]
    tm = _pick_row_tile(M)
    return pl.pallas_call(
        functools.partial(_proj_add_ln_kernel, eps=eps),
        out_shape=jax.ShapeDtypeStruct((M, N), jnp.float32),
        grid=(M // tm,),
        in_specs=[
            pl.BlockSpec((tm, D), lambda i: (i, 0)),
            pl.BlockSpec((tm, N), lambda i: (i, 0)),
            pl.BlockSpec((D, N), lambda i: (0, 0)),
            pl.BlockSpec((1, N), lambda i: (0, 0)),
            pl.BlockSpec((1, N), lambda i: (0, 0)),
            pl.BlockSpec((1, N), lambda i: (0, 0)),
        ],
        out_specs=pl.BlockSpec((tm, N), lambda i: (i, 0)),
        compiler_params=_ROWTILE_PARAMS,
    )(ctx2d, res2d, wo, bo.reshape(1, N), gamma.reshape(1, N), beta.reshape(1, N))


def pallas_ffn_add_ln(x2d, w1, b1, w2, b2, gamma, beta, eps=1e-5):
    M, D = x2d.shape
    F = w1.shape[1]
    tm = _pick_row_tile(M)
    return pl.pallas_call(
        functools.partial(_ffn_add_ln_kernel, eps=eps),
        out_shape=jax.ShapeDtypeStruct((M, D), jnp.float32),
        grid=(M // tm,),
        in_specs=[
            pl.BlockSpec((tm, D), lambda i: (i, 0)),
            pl.BlockSpec((D, F), lambda i: (0, 0)),
            pl.BlockSpec((1, F), lambda i: (0, 0)),
            pl.BlockSpec((F, D), lambda i: (0, 0)),
            pl.BlockSpec((1, D), lambda i: (0, 0)),
            pl.BlockSpec((1, D), lambda i: (0, 0)),
            pl.BlockSpec((1, D), lambda i: (0, 0)),
        ],
        out_specs=pl.BlockSpec((tm, D), lambda i: (i, 0)),
        compiler_params=_ROWTILE_PARAMS,
    )(x2d, w1, b1.reshape(1, F), w2, b2.reshape(1, D), gamma.reshape(1, D), beta.reshape(1, D))


def pallas_mha(qh, kh, vh, mask, scale):
    # qh/kh/vh: (B, H, S, dk); mask: (Bm, 1, Mq, Sk) with Bm in {1, B}, Mq in {1, Sq}.
    B, H, Sq, dk = qh.shape
    Sk = kh.shape[2]
    Bm, _, Mq, _ = mask.shape
    mask_idx = (lambda b: (b, 0, 0, 0)) if Bm == B else (lambda b: (0, 0, 0, 0))

    ctx, probs = pl.pallas_call(
        functools.partial(_mha_kernel, scale=scale),
        out_shape=(
            jax.ShapeDtypeStruct((B, H, Sq, dk), jnp.float32),
            jax.ShapeDtypeStruct((B, H, Sq, Sk), jnp.float32),
        ),
        grid=(B,),
        in_specs=[
            pl.BlockSpec((None, H, Sq, dk), lambda b: (b, 0, 0, 0)),
            pl.BlockSpec((None, H, Sk, dk), lambda b: (b, 0, 0, 0)),
            pl.BlockSpec((None, H, Sk, dk), lambda b: (b, 0, 0, 0)),
            pl.BlockSpec((None, None, Mq, Sk), mask_idx),
        ],
        out_specs=(
            pl.BlockSpec((None, H, Sq, dk), lambda b: (b, 0, 0, 0)),
            pl.BlockSpec((None, H, Sq, Sk), lambda b: (b, 0, 0, 0)),
        ),
        compiler_params=pltpu.CompilerParams(dimension_semantics=("parallel",)),
    )(qh, kh, vh, mask)
    return ctx, probs


# ----------------------------------------------------------------------------
# Model pieces (plain-JAX glue around the kernels)
# ----------------------------------------------------------------------------
def _split_heads(t2d, B, S, H):
    dk = t2d.shape[1] // H
    # (B*S, D) -> (B, H, S, dk); tiny XLA transpose so the attention kernel can use
    # the known-good leading-batch einsum form.
    return t2d.reshape(B, S, H, dk).transpose(0, 2, 1, 3)


def _merge_heads(ctx):
    B, H, S, dk = ctx.shape
    return ctx.transpose(0, 2, 1, 3).reshape(B * S, H * dk)


def decoder_layer(p, x, enc_output, src_mask, tgt_mask, num_heads):
    B, S, D = x.shape
    Se = enc_output.shape[1]
    dk = D // num_heads
    scale = 1.0 / math.sqrt(dk)
    x2 = x.reshape(B * S, D)

    # TODO(synk): nn.Dropout is an inference-time identity here (no RNG dropout applied).

    # --- self attention: fused QKV projection, all heads per grid step -------------
    sa = p["self_attn"]
    qkv = pallas_linear(x2, sa["wqkv"], sa["bqkv"])            # (M, 3D)
    q, k, v = qkv[:, :D], qkv[:, D:2 * D], qkv[:, 2 * D:]
    qh = _split_heads(q, B, S, num_heads)
    kh = _split_heads(k, B, S, num_heads)
    vh = _split_heads(v, B, S, num_heads)
    ctx, block1 = pallas_mha(qh, kh, vh, tgt_mask, scale)
    x2 = pallas_proj_add_ln(_merge_heads(ctx), x2, sa["wo"], sa["bo"],
                            p["ln1_g"], p["ln1_b"])            # norm1(x + attn)

    # --- cross attention: Q from x, fused KV from enc_output -----------------------
    ca = p["cross_attn"]
    q = pallas_linear(x2, ca["wq"], ca["bq"])                  # (M, D)
    kv = pallas_linear(enc_output.reshape(B * Se, D), ca["wkv"], ca["bkv"])  # (B*Se, 2D)
    k, v = kv[:, :D], kv[:, D:]
    qh = _split_heads(q, B, S, num_heads)
    kh = _split_heads(k, B, Se, num_heads)
    vh = _split_heads(v, B, Se, num_heads)
    ctx, block2 = pallas_mha(qh, kh, vh, src_mask, scale)
    x2 = pallas_proj_add_ln(_merge_heads(ctx), x2, ca["wo"], ca["bo"],
                            p["ln2_g"], p["ln2_b"])            # norm2(x + attn)

    # --- feed-forward fused with residual + LayerNorm -------------------------------
    x2 = pallas_ffn_add_ln(x2, p["w1"], p["b1"], p["w2"], p["b2"],
                           p["ln3_g"], p["ln3_b"])             # norm3(x + ffn)

    return x2.reshape(B, S, D), block1, block2


def decoder_forward(params, tokens, enc_output, src_mask, tgt_mask, num_heads, nclass):
    B, S = tokens.shape
    D = params["emb"].shape[1]

    x = params["emb"][tokens] * jnp.float32(math.sqrt(D))      # embedding * sqrt(d_model)
    x = x + params["pe"][:S][None, :, :]                       # positional encoding
    # dropout -> identity at inference

    attention_weights = {}
    for i, lp in enumerate(params["layers"]):
        x, b1, b2 = decoder_layer(lp, x, enc_output, src_mask, tgt_mask, num_heads)
        attention_weights[f"decoder_layer{i + 1}_block1"] = b1
        attention_weights[f"decoder_layer{i + 1}_block2"] = b2

    # Lane-dense (N=128-padded) classifier projection; slice back to nclass.
    logits = pallas_linear(x.reshape(B * S, D), params["fc_w"], params["fc_b"])
    logits = logits[:, :nclass].reshape(B, S, nclass)
    return logits, attention_weights


# ----------------------------------------------------------------------------
# Deterministic parameter construction
# ----------------------------------------------------------------------------
def make_positional_encoding(d_model, max_len):
    pos = jnp.arange(max_len, dtype=jnp.float32)[:, None]
    div = jnp.exp(jnp.arange(0, d_model, 2, dtype=jnp.float32) * (-math.log(10000.0) / d_model))
    pe = jnp.zeros((max_len, d_model), dtype=jnp.float32)
    pe = pe.at[:, 0::2].set(jnp.sin(pos * div))
    pe = pe.at[:, 1::2].set(jnp.cos(pos * div))
    return pe


def init_params(key, num_layers, d_model, num_heads, d_ff, vocab_size, nclass, max_len=64):
    def dense(k, fan_in, fan_out):
        kw, kb = jax.random.split(k)
        lim = 1.0 / math.sqrt(fan_in)
        w = jax.random.uniform(kw, (fan_in, fan_out), jnp.float32, -lim, lim)
        b = jax.random.uniform(kb, (fan_out,), jnp.float32, -lim, lim)
        return w, b

    keys = jax.random.split(key, 2 + num_layers)
    params = {
        "emb": jax.random.normal(keys[0], (vocab_size, d_model), jnp.float32) * 0.02,
        "pe": make_positional_encoding(d_model, max_len),
    }

    # Classifier weights padded to a lane-dense output width (>=128).
    fc_w, fc_b = dense(keys[1], d_model, nclass)
    n_pad = ((nclass + 127) // 128) * 128
    params["fc_w"] = jnp.zeros((d_model, n_pad), jnp.float32).at[:, :nclass].set(fc_w)
    params["fc_b"] = jnp.zeros((n_pad,), jnp.float32).at[:nclass].set(fc_b)

    layers = []
    for li in range(num_layers):
        lk = jax.random.split(keys[2 + li], 10)
        # Self-attention: pre-fused QKV weights (D, 3D).
        wq, bq = dense(lk[0], d_model, d_model)
        wk, bk = dense(lk[1], d_model, d_model)
        wv, bv = dense(lk[2], d_model, d_model)
        wo, bo = dense(lk[3], d_model, d_model)
        self_attn = {
            "wqkv": jnp.concatenate([wq, wk, wv], axis=1),
            "bqkv": jnp.concatenate([bq, bk, bv]),
            "wo": wo, "bo": bo,
        }
        # Cross-attention: Q separate, pre-fused KV weights (D, 2D).
        wq, bq = dense(lk[4], d_model, d_model)
        wk, bk = dense(lk[5], d_model, d_model)
        wv, bv = dense(lk[6], d_model, d_model)
        wo, bo = dense(lk[7], d_model, d_model)
        cross_attn = {
            "wq": wq, "bq": bq,
            "wkv": jnp.concatenate([wk, wv], axis=1),
            "bkv": jnp.concatenate([bk, bv]),
            "wo": wo, "bo": bo,
        }
        lp = {"self_attn": self_attn, "cross_attn": cross_attn}
        lp["w1"], lp["b1"] = dense(lk[8], d_model, d_ff)
        lp["w2"], lp["b2"] = dense(lk[9], d_ff, d_model)
        for n in ("ln1", "ln2", "ln3"):
            lp[n + "_g"] = jnp.ones((d_model,), jnp.float32)
            lp[n + "_b"] = jnp.zeros((d_model,), jnp.float32)
        layers.append(lp)
    params["layers"] = layers
    return params


# ----------------------------------------------------------------------------
# Main
# ----------------------------------------------------------------------------
if __name__ == "__main__":
    B, S = 2, 8
    d_model, num_heads, d_ff = 32, 4, 64
    num_layers, vocab_size, nclass = 2, 50, 5

    key = jax.random.PRNGKey(0)
    k_param, k_tok, k_enc = jax.random.split(key, 3)

    params = init_params(k_param, num_layers, d_model, num_heads, d_ff, vocab_size, nclass)

    tokens = jax.random.randint(k_tok, (B, S), 0, vocab_size, dtype=jnp.int32)
    enc_output = jax.random.normal(k_enc, (B, S, d_model), jnp.float32)

    # tgt_mask: causal lower-triangular (1,1,S,S); src_mask: all-ones (B,1,1,S)
    tgt_mask = jnp.tril(jnp.ones((S, S), jnp.float32))[None, None, :, :]
    src_mask = jnp.ones((B, 1, 1, S), jnp.float32)

    fwd = jax.jit(functools.partial(decoder_forward, num_heads=num_heads, nclass=nclass))
    logits, attn_weights = fwd(params, tokens, enc_output, src_mask, tgt_mask)

    jax.block_until_ready(logits)
    for v in attn_weights.values():
        jax.block_until_ready(v)

    assert logits.shape == (B, S, nclass)
    assert attn_weights["decoder_layer1_block1"].shape == (B, num_heads, S, S)
    assert attn_weights["decoder_layer1_block2"].shape == (B, num_heads, S, S)
    print("KERNEL_OK")
</pallas_src>

<mosaic_0001>
module attributes {stable_mosaic.version = 11 : i64} {
  func.func @_linear_kernel(%arg0: i32, %arg1: memref<8x32xf32, #tpu.memory_space<vmem>>, %arg2: memref<32x96xf32, #tpu.memory_space<vmem>>, %arg3: memref<1x96xf32, #tpu.memory_space<vmem>>, %arg4: memref<8x96xf32, #tpu.memory_space<vmem>>) attributes {dimension_semantics = [#tpu.dimension_semantics<parallel>], iteration_bounds = array<i64: 2>, scalar_prefetch = 0 : i64, scratch_operands = 0 : i64, tpu.core_type = #tpu.core_type<tc>, window_params = [{transform_indices = @transform_0, window_bounds = array<i64: 8, 32>}, {pipeline_mode = #tpu.pipeline_mode<synchronous>, transform_indices = @transform_1, window_bounds = array<i64: 32, 96>}, {pipeline_mode = #tpu.pipeline_mode<synchronous>, transform_indices = @transform_2, window_bounds = array<i64: 1, 96>}, {transform_indices = @transform_3, window_bounds = array<i64: 8, 96>}]} {
    %c0 = arith.constant 0 : index
    %c0_0 = arith.constant 0 : index
    %0 = vector.load %arg1[%c0, %c0_0] : memref<8x32xf32, #tpu.memory_space<vmem>>, vector<8x32xf32>
    %1 = arith.truncf %0 : vector<8x32xf32> to vector<8x32xbf16>
    %c0_1 = arith.constant 0 : index
    %c0_2 = arith.constant 0 : index
    %2 = vector.load %arg2[%c0_1, %c0_2] : memref<32x96xf32, #tpu.memory_space<vmem>>, vector<32x96xf32>
    %3 = arith.truncf %2 : vector<32x96xf32> to vector<32x96xbf16>
    %cst = arith.constant dense<0.000000e+00> : vector<8x96xf32>
    %4 = tpu.matmul %1, %3, %cst {dimension_numbers = #tpu.dot_dimension_numbers<[1], [0], [0], [1], [0, 0, 1, 1], [], []>} : vector<8x32xbf16>, vector<32x96xbf16>, vector<8x96xf32> -> vector<8x96xf32>
    %c0_3 = arith.constant 0 : index
    %c0_4 = arith.constant 0 : index
    %5 = vector.load %arg3[%c0_3, %c0_4] : memref<1x96xf32, #tpu.memory_space<vmem>>, vector<1x96xf32>
    %6 = vector.broadcast %5 : vector<1x96xf32> to vector<8x96xf32>
    %7 = arith.addf %4, %6 : vector<8x96xf32>
    %c0_5 = arith.constant 0 : index
    %c0_6 = arith.constant 0 : index
    %8 = vector.load %arg4[%c0_5, %c0_6] : memref<8x96xf32, #tpu.memory_space<vmem>>, vector<8x96xf32>
    tpu.vector_store %arg4[%c0_5, %c0_6], %7 {strides = array<i32>} : memref<8x96xf32, #tpu.memory_space<vmem>>, vector<8x96xf32>,
    return
  }
  func.func @transform_0(%arg0: i32) -> (i32, i32) {
    %c0_i32 = arith.constant 0 : i32
    %c0_i32_0 = arith.constant 0 : i32
    return %arg0, %c0_i32 : i32, i32
  }
  func.func @transform_1(%arg0: i32) -> (i32, i32) {
    %c0_i32 = arith.constant 0 : i32
    %c0_i32_0 = arith.constant 0 : i32
    %c0_i32_1 = arith.constant 0 : i32
    return %c0_i32, %c0_i32_0 : i32, i32
  }
  func.func @transform_2(%arg0: i32) -> (i32, i32) {
    %c0_i32 = arith.constant 0 : i32
    %c0_i32_0 = arith.constant 0 : i32
    %c0_i32_1 = arith.constant 0 : i32
    return %c0_i32, %c0_i32_0 : i32, i32
  }
  func.func @transform_3(%arg0: i32) -> (i32, i32) {
    %c0_i32 = arith.constant 0 : i32
    %c0_i32_0 = arith.constant 0 : i32
    return %arg0, %c0_i32 : i32, i32
  }
}

module attributes {stable_mosaic.version = 11 : i64} {
  func.func @_mha_kernel(%arg0: i32, %arg1: memref<1x4x8x8xf32, #tpu.memory_space<vmem>>, %arg2: memref<1x4x8x8xf32, #tpu.memory_space<vmem>>, %arg3: memref<1x4x8x8xf32, #tpu.memory_space<vmem>>, %arg4: memref<1x1x8x8xf32, #tpu.memory_space<vmem>>, %arg5: memref<1x4x8x8xf32, #tpu.memory_space<vmem>>, %arg6: memref<1x4x8x8xf32, #tpu.memory_space<vmem>>) attributes {dimension_semantics = [#tpu.dimension_semantics<parallel>], iteration_bounds = array<i64: 2>, scalar_prefetch = 0 : i64, scratch_operands = 0 : i64, tpu.core_type = #tpu.core_type<tc>, window_params = [{transform_indices = @transform_0, window_bounds = array<i64: 1, 4, 8, 8>}, {transform_indices = @transform_1, window_bounds = array<i64: 1, 4, 8, 8>}, {transform_indices = @transform_2, window_bounds = array<i64: 1, 4, 8, 8>}, {pipeline_mode = #tpu.pipeline_mode<synchronous>, transform_indices = @transform_3, window_bounds = array<i64: 1, 1, 8, 8>}, {transform_indices = @transform_4, window_bounds = array<i64: 1, 4, 8, 8>}, {transform_indices = @transform_5, window_bounds = array<i64: 1, 4, 8, 8>}]} {
    %c0 = arith.constant 0 : index
    %c0_0 = arith.constant 0 : index
    %c0_1 = arith.constant 0 : index
    %c0_2 = arith.constant 0 : index
    %0 = vector.load %arg1[%c0, %c0_0, %c0_1, %c0_2] : memref<1x4x8x8xf32, #tpu.memory_space<vmem>>, vector<1x4x8x8xf32>
    %1 = vector.shape_cast %0 : vector<1x4x8x8xf32> to vector<4x8x8xf32>
    %2 = arith.truncf %1 : vector<4x8x8xf32> to vector<4x8x8xbf16>
    %c0_3 = arith.constant 0 : index
    %c0_4 = arith.constant 0 : index
    %c0_5 = arith.constant 0 : index
    %c0_6 = arith.constant 0 : index
    %3 = vector.load %arg2[%c0_3, %c0_4, %c0_5, %c0_6] : memref<1x4x8x8xf32, #tpu.memory_space<vmem>>, vector<1x4x8x8xf32>
    %4 = vector.shape_cast %3 : vector<1x4x8x8xf32> to vector<4x8x8xf32>
    %5 = arith.truncf %4 : vector<4x8x8xf32> to vector<4x8x8xbf16>
    %c0_7 = arith.constant 0 : index
    %c0_8 = arith.constant 0 : index
    %c0_9 = arith.constant 0 : index
    %c0_10 = arith.constant 0 : index
    %6 = vector.load %arg3[%c0_7, %c0_8, %c0_9, %c0_10] : memref<1x4x8x8xf32, #tpu.memory_space<vmem>>, vector<1x4x8x8xf32>
    %7 = vector.shape_cast %6 : vector<1x4x8x8xf32> to vector<4x8x8xf32>
    %8 = arith.truncf %7 : vector<4x8x8xf32> to vector<4x8x8xbf16>
    %c0_11 = arith.constant 0 : index
    %c0_12 = arith.constant 0 : index
    %c0_13 = arith.constant 0 : index
    %c0_14 = arith.constant 0 : index
    %9 = vector.load %arg4[%c0_11, %c0_12, %c0_13, %c0_14] : memref<1x1x8x8xf32, #tpu.memory_space<vmem>>, vector<1x1x8x8xf32>
    %10 = vector.shape_cast %9 : vector<1x1x8x8xf32> to vector<8x8xf32>
    "tpu.trace_start"() <{level = 10 : i32, message = "hqd,hkd->hqk"}> : () -> ()
    %cst = arith.constant dense<0.000000e+00> : vector<4x8x8xf32>
    %11 = tpu.matmul %2, %5, %cst {dimension_numbers = #tpu.dot_dimension_numbers<[2], [2], [1], [1], [0, 0, 0, 1, 1, 1], [0], [0]>} : vector<4x8x8xbf16>, vector<4x8x8xbf16>, vector<4x8x8xf32> -> vector<4x8x8xf32>
    "tpu.trace_stop"() : () -> ()
    %cst_15 = arith.constant 0.353553385 : f32
    %12 = vector.broadcast %cst_15 : f32 to vector<4x8x8xf32>
    %13 = arith.mulf %11, %12 : vector<4x8x8xf32>
    %cst_16 = arith.constant 0.000000e+00 : f32
    %14 = vector.broadcast %cst_16 : f32 to vector<8x8xf32>
    %15 = arith.cmpf oeq, %10, %14 : vector<8x8xf32>
    %cst_17 = arith.constant -1.000000e+09 : f32
    %16 = vector.shape_cast %15 : vector<8x8xi1> to vector<1x8x8xi1>
    %17 = vector.broadcast %16 : vector<1x8x8xi1> to vector<4x8x8xi1>
    %18 = vector.broadcast %cst_17 : f32 to vector<4x8x8xf32>
    %19 = arith.select %17, %18, %13 : vector<4x8x8xi1>, vector<4x8x8xf32>
    %cst_18 = arith.constant dense<0xFF800000> : vector<4x8xf32>
    %20 = vector.multi_reduction <maximumf>, %19, %cst_18 [2] : vector<4x8x8xf32> to vector<4x8xf32>
    %21 = vector.shape_cast %20 : vector<4x8xf32> to vector<4x8x1xf32>
    %22 = vector.broadcast %21 : vector<4x8x1xf32> to vector<4x8x8xf32>
    %23 = arith.subf %19, %22 : vector<4x8x8xf32>
    %24 = math.exp %23 : vector<4x8x8xf32>
    %cst_19 = arith.constant dense<0.000000e+00> : vector<4x8xf32>
    %25 = vector.multi_reduction <add>, %24, %cst_19 [2] : vector<4x8x8xf32> to vector<4x8xf32>
    %26 = vector.shape_cast %25 : vector<4x8xf32> to vector<4x8x1xf32>
    %27 = vector.broadcast %26 : vector<4x8x1xf32> to vector<4x8x8xf32>
    %28 = arith.divf %24, %27 : vector<4x8x8xf32>
    %c0_20 = arith.constant 0 : index
    %c0_21 = arith.constant 0 : index
    %c0_22 = arith.constant 0 : index
    %c0_23 = arith.constant 0 : index
    %29 = vector.load %arg6[%c0_20, %c0_21, %c0_22, %c0_23] : memref<1x4x8x8xf32, #tpu.memory_space<vmem>>, vector<1x4x8x8xf32>
    %30 = vector.shape_cast %29 : vector<1x4x8x8xf32> to vector<4x8x8xf32>
    %31 = vector.shape_cast %28 : vector<4x8x8xf32> to vector<1x4x8x8xf32>
    tpu.vector_store %arg6[%c0_20, %c0_21, %c0_22, %c0_23], %31 {strides = array<i32>} : memref<1x4x8x8xf32, #tpu.memory_space<vmem>>, vector<1x4x8x8xf32>,
    %32 = arith.truncf %28 : vector<4x8x8xf32> to vector<4x8x8xbf16>
    "tpu.trace_start"() <{level = 10 : i32, message = "hqk,hkd->hqd"}> : () -> ()
    %cst_24 = arith.constant dense<0.000000e+00> : vector<4x8x8xf32>
    %33 = tpu.matmul %32, %8, %cst_24 {dimension_numbers = #tpu.dot_dimension_numbers<[2], [1], [1], [2], [0, 0, 0, 1, 1, 2], [0], [0]>} : vector<4x8x8xbf16>, vector<4x8x8xbf16>, vector<4x8x8xf32> -> vector<4x8x8xf32>
    "tpu.trace_stop"() : () -> ()
    %c0_25 = arith.constant 0 : index
    %c0_26 = arith.constant 0 : index
    %c0_27 = arith.constant 0 : index
    %c0_28 = arith.constant 0 : index
    %34 = vector.load %arg5[%c0_25, %c0_26, %c0_27, %c0_28] : memref<1x4x8x8xf32, #tpu.memory_space<vmem>>, vector<1x4x8x8xf32>
    %35 = vector.shape_cast %34 : vector<1x4x8x8xf32> to vector<4x8x8xf32>
    %36 = vector.shape_cast %33 : vector<4x8x8xf32> to vector<1x4x8x8xf32>
    tpu.vector_store %arg5[%c0_25, %c0_26, %c0_27, %c0_28], %36 {strides = array<i32>} : memref<1x4x8x8xf32, #tpu.memory_space<vmem>>, vector<1x4x8x8xf32>,
    return
  }
  func.func @transform_0(%arg0: i32) -> (i32, i32, i32, i32) {
    %c0_i32 = arith.constant 0 : i32
    %c0_i32_0 = arith.constant 0 : i32
    %c0_i32_1 = arith.constant 0 : i32
    %c0_i32_2 = arith.constant 0 : i32
    return %arg0, %c0_i32, %c0_i32_0, %c0_i32_1 : i32, i32, i32, i32
  }
  func.func @transform_1(%arg0: i32) -> (i32, i32, i32, i32) {
    %c0_i32 = arith.constant 0 : i32
    %c0_i32_0 = arith.constant 0 : i32
    %c0_i32_1 = arith.constant 0 : i32
    %c0_i32_2 = arith.constant 0 : i32
    return %arg0, %c0_i32, %c0_i32_0, %c0_i32_1 : i32, i32, i32, i32
  }
  func.func @transform_2(%arg0: i32) -> (i32, i32, i32, i32) {
    %c0_i32 = arith.constant 0 : i32
    %c0_i32_0 = arith.constant 0 : i32
    %c0_i32_1 = arith.constant 0 : i32
    %c0_i32_2 = arith.constant 0 : i32
    return %arg0, %c0_i32, %c0_i32_0, %c0_i32_1 : i32, i32, i32, i32
  }
  func.func @transform_3(%arg0: i32) -> (i32, i32, i32, i32) {
    %c0_i32 = arith.constant 0 : i32
    %c0_i32_0 = arith.constant 0 : i32
    %c0_i32_1 = arith.constant 0 : i32
    %c0_i32_2 = arith.constant 0 : i32
    %c0_i32_3 = arith.constant 0 : i32
    return %c0_i32, %c0_i32_0, %c0_i32_1, %c0_i32_2 : i32, i32, i32, i32
  }
  func.func @transform_4(%arg0: i32) -> (i32, i32, i32, i32) {
    %c0_i32 = arith.constant 0 : i32
    %c0_i32_0 = arith.constant 0 : i32
    %c0_i32_1 = arith.constant 0 : i32
    %c0_i32_2 = arith.constant 0 : i32
    return %arg0, %c0_i32, %c0_i32_0, %c0_i32_1 : i32, i32, i32, i32
  }
  func.func @transform_5(%arg0: i32) -> (i32, i32, i32, i32) {
    %c0_i32 = arith.constant 0 : i32
    %c0_i32_0 = arith.constant 0 : i32
    %c0_i32_1 = arith.constant 0 : i32
    %c0_i32_2 = arith.constant 0 : i32
    return %arg0, %c0_i32, %c0_i32_0, %c0_i32_1 : i32, i32, i32, i32
  }
}

module attributes {stable_mosaic.version = 11 : i64} {
  func.func @_proj_add_ln_kernel(%arg0: i32, %arg1: memref<8x32xf32, #tpu.memory_space<vmem>>, %arg2: memref<8x32xf32, #tpu.memory_space<vmem>>, %arg3: memref<32x32xf32, #tpu.memory_space<vmem>>, %arg4: memref<1x32xf32, #tpu.memory_space<vmem>>, %arg5: memref<1x32xf32, #tpu.memory_space<vmem>>, %arg6: memref<1x32xf32, #tpu.memory_space<vmem>>, %arg7: memref<8x32xf32, #tpu.memory_space<vmem>>) attributes {dimension_semantics = [#tpu.dimension_semantics<parallel>], iteration_bounds = array<i64: 2>, scalar_prefetch = 0 : i64, scratch_operands = 0 : i64, tpu.core_type = #tpu.core_type<tc>, window_params = [{transform_indices = @transform_0, window_bounds = array<i64: 8, 32>}, {transform_indices = @transform_1, window_bounds = array<i64: 8, 32>}, {pipeline_mode = #tpu.pipeline_mode<synchronous>, transform_indices = @transform_2, window_bounds = array<i64: 32, 32>}, {pipeline_mode = #tpu.pipeline_mode<synchronous>, transform_indices = @transform_3, window_bounds = array<i64: 1, 32>}, {pipeline_mode = #tpu.pipeline_mode<synchronous>, transform_indices = @transform_4, window_bounds = array<i64: 1, 32>}, {pipeline_mode = #tpu.pipeline_mode<synchronous>, transform_indices = @transform_5, window_bounds = array<i64: 1, 32>}, {transform_indices = @transform_6, window_bounds = array<i64: 8, 32>}]} {
    %c0 = arith.constant 0 : index
    %c0_0 = arith.constant 0 : index
    %0 = vector.load %arg1[%c0, %c0_0] : memref<8x32xf32, #tpu.memory_space<vmem>>, vector<8x32xf32>
    %1 = arith.truncf %0 : vector<8x32xf32> to vector<8x32xbf16>
    %c0_1 = arith.constant 0 : index
    %c0_2 = arith.constant 0 : index
    %2 = vector.load %arg3[%c0_1, %c0_2] : memref<32x32xf32, #tpu.memory_space<vmem>>, vector<32x32xf32>
    %3 = arith.truncf %2 : vector<32x32xf32> to vector<32x32xbf16>
    %cst = arith.constant dense<0.000000e+00> : vector<8x32xf32>
    %4 = tpu.matmul %1, %3, %cst {dimension_numbers = #tpu.dot_dimension_numbers<[1], [0], [0], [1], [0, 0, 1, 1], [], []>} : vector<8x32xbf16>, vector<32x32xbf16>, vector<8x32xf32> -> vector<8x32xf32>
    %c0_3 = arith.constant 0 : index
    %c0_4 = arith.constant 0 : index
    %5 = vector.load %arg4[%c0_3, %c0_4] : memref<1x32xf32, #tpu.memory_space<vmem>>, vector<1x32xf32>
    %6 = vector.broadcast %5 : vector<1x32xf32> to vector<8x32xf32>
    %7 = arith.addf %4, %6 : vector<8x32xf32>
    %c0_5 = arith.constant 0 : index
    %c0_6 = arith.constant 0 : index
    %8 = vector.load %arg2[%c0_5, %c0_6] : memref<8x32xf32, #tpu.memory_space<vmem>>, vector<8x32xf32>
    %9 = arith.addf %8, %7 : vector<8x32xf32>
    %cst_7 = arith.constant dense<0.000000e+00> : vector<8xf32>
    %10 = vector.multi_reduction <add>, %9, %cst_7 [1] : vector<8x32xf32> to vector<8xf32>
    %11 = vector.shape_cast %10 : vector<8xf32> to vector<8x1xf32>
    %cst_8 = arith.constant 3.200000e+01 : f32
    %12 = vector.broadcast %cst_8 : f32 to vector<8x1xf32>
    %13 = arith.divf %11, %12 : vector<8x1xf32>
    %14 = vector.broadcast %13 : vector<8x1xf32> to vector<8x32xf32>
    %15 = arith.subf %9, %14 : vector<8x32xf32>
    %16 = arith.mulf %15, %15 : vector<8x32xf32>
    %cst_9 = arith.constant dense<0.000000e+00> : vector<8xf32>
    %17 = vector.multi_reduction <add>, %16, %cst_9 [1] : vector<8x32xf32> to vector<8xf32>
    %18 = vector.shape_cast %17 : vector<8xf32> to vector<8x1xf32>
    %cst_10 = arith.constant 3.200000e+01 : f32
    %19 = vector.broadcast %cst_10 : f32 to vector<8x1xf32>
    %20 = arith.divf %18, %19 : vector<8x1xf32>
    %21 = vector.broadcast %13 : vector<8x1xf32> to vector<8x32xf32>
    %22 = arith.subf %9, %21 : vector<8x32xf32>
    %cst_11 = arith.constant 9.99999974E-6 : f32
    %23 = vector.broadcast %cst_11 : f32 to vector<8x1xf32>
    %24 = arith.addf %20, %23 : vector<8x1xf32>
    %25 = math.rsqrt %24 : vector<8x1xf32>
    %26 = vector.broadcast %25 : vector<8x1xf32> to vector<8x32xf32>
    %27 = arith.mulf %22, %26 : vector<8x32xf32>
    %c0_12 = arith.constant 0 : index
    %c0_13 = arith.constant 0 : index
    %28 = vector.load %arg5[%c0_12, %c0_13] : memref<1x32xf32, #tpu.memory_space<vmem>>, vector<1x32xf32>
    %29 = vector.broadcast %28 : vector<1x32xf32> to vector<8x32xf32>
    %30 = arith.mulf %27, %29 : vector<8x32xf32>
    %c0_14 = arith.constant 0 : index
    %c0_15 = arith.constant 0 : index
    %31 = vector.load %arg6[%c0_14, %c0_15] : memref<1x32xf32, #tpu.memory_space<vmem>>, vector<1x32xf32>
    %32 = vector.broadcast %31 : vector<1x32xf32> to vector<8x32xf32>
    %33 = arith.addf %30, %32 : vector<8x32xf32>
    %c0_16 = arith.constant 0 : index
    %c0_17 = arith.constant 0 : index
    %34 = vector.load %arg7[%c0_16, %c0_17] : memref<8x32xf32, #tpu.memory_space<vmem>>, vector<8x32xf32>
    tpu.vector_store %arg7[%c0_16, %c0_17], %33 {strides = array<i32>} : memref<8x32xf32, #tpu.memory_space<vmem>>, vector<8x32xf32>,
    return
  }
  func.func @transform_0(%arg0: i32) -> (i32, i32) {
    %c0_i32 = arith.constant 0 : i32
    %c0_i32_0 = arith.constant 0 : i32
    return %arg0, %c0_i32 : i32, i32
  }
  func.func @transform_1(%arg0: i32) -> (i32, i32) {
    %c0_i32 = arith.constant 0 : i32
    %c0_i32_0 = arith.constant 0 : i32
    return %arg0, %c0_i32 : i32, i32
  }
  func.func @transform_2(%arg0: i32) -> (i32, i32) {
    %c0_i32 = arith.constant 0 : i32
    %c0_i32_0 = arith.constant 0 : i32
    %c0_i32_1 = arith.constant 0 : i32
    return %c0_i32, %c0_i32_0 : i32, i32
  }
  func.func @transform_3(%arg0: i32) -> (i32, i32) {
    %c0_i32 = arith.constant 0 : i32
    %c0_i32_0 = arith.constant 0 : i32
    %c0_i32_1 = arith.constant 0 : i32
    return %c0_i32, %c0_i32_0 : i32, i32
  }
  func.func @transform_4(%arg0: i32) -> (i32, i32) {
    %c0_i32 = arith.constant 0 : i32
    %c0_i32_0 = arith.constant 0 : i32
    %c0_i32_1 = arith.constant 0 : i32
    return %c0_i32, %c0_i32_0 : i32, i32
  }
  func.func @transform_5(%arg0: i32) -> (i32, i32) {
    %c0_i32 = arith.constant 0 : i32
    %c0_i32_0 = arith.constant 0 : i32
    %c0_i32_1 = arith.constant 0 : i32
    return %c0_i32, %c0_i32_0 : i32, i32
  }
  func.func @transform_6(%arg0: i32) -> (i32, i32) {
    %c0_i32 = arith.constant 0 : i32
    %c0_i32_0 = arith.constant 0 : i32
    return %arg0, %c0_i32 : i32, i32
  }
}

module attributes {stable_mosaic.version = 11 : i64} {
  func.func @_linear_kernel(%arg0: i32, %arg1: memref<8x32xf32, #tpu.memory_space<vmem>>, %arg2: memref<32x32xf32, #tpu.memory_space<vmem>>, %arg3: memref<1x32xf32, #tpu.memory_space<vmem>>, %arg4: memref<8x32xf32, #tpu.memory_space<vmem>>) attributes {dimension_semantics = [#tpu.dimension_semantics<parallel>], iteration_bounds = array<i64: 2>, scalar_prefetch = 0 : i64, scratch_operands = 0 : i64, tpu.core_type = #tpu.core_type<tc>, window_params = [{transform_indices = @transform_0, window_bounds = array<i64: 8, 32>}, {pipeline_mode = #tpu.pipeline_mode<synchronous>, transform_indices = @transform_1, window_bounds = array<i64: 32, 32>}, {pipeline_mode = #tpu.pipeline_mode<synchronous>, transform_indices = @transform_2, window_bounds = array<i64: 1, 32>}, {transform_indices = @transform_3, window_bounds = array<i64: 8, 32>}]} {
    %c0 = arith.constant 0 : index
    %c0_0 = arith.constant 0 : index
    %0 = vector.load %arg1[%c0, %c0_0] : memref<8x32xf32, #tpu.memory_space<vmem>>, vector<8x32xf32>
    %1 = arith.truncf %0 : vector<8x32xf32> to vector<8x32xbf16>
    %c0_1 = arith.constant 0 : index
    %c0_2 = arith.constant 0 : index
    %2 = vector.load %arg2[%c0_1, %c0_2] : memref<32x32xf32, #tpu.memory_space<vmem>>, vector<32x32xf32>
    %3 = arith.truncf %2 : vector<32x32xf32> to vector<32x32xbf16>
    %cst = arith.constant dense<0.000000e+00> : vector<8x32xf32>
    %4 = tpu.matmul %1, %3, %cst {dimension_numbers = #tpu.dot_dimension_numbers<[1], [0], [0], [1], [0, 0, 1, 1], [], []>} : vector<8x32xbf16>, vector<32x32xbf16>, vector<8x32xf32> -> vector<8x32xf32>
    %c0_3 = arith.constant 0 : index
    %c0_4 = arith.constant 0 : index
    %5 = vector.load %arg3[%c0_3, %c0_4] : memref<1x32xf32, #tpu.memory_space<vmem>>, vector<1x32xf32>
    %6 = vector.broadcast %5 : vector<1x32xf32> to vector<8x32xf32>
    %7 = arith.addf %4, %6 : vector<8x32xf32>
    %c0_5 = arith.constant 0 : index
    %c0_6 = arith.constant 0 : index
    %8 = vector.load %arg4[%c0_5, %c0_6] : memref<8x32xf32, #tpu.memory_space<vmem>>, vector<8x32xf32>
    tpu.vector_store %arg4[%c0_5, %c0_6], %7 {strides = array<i32>} : memref<8x32xf32, #tpu.memory_space<vmem>>, vector<8x32xf32>,
    return
  }
  func.func @transform_0(%arg0: i32) -> (i32, i32) {
    %c0_i32 = arith.constant 0 : i32
    %c0_i32_0 = arith.constant 0 : i32
    return %arg0, %c0_i32 : i32, i32
  }
  func.func @transform_1(%arg0: i32) -> (i32, i32) {
    %c0_i32 = arith.constant 0 : i32
    %c0_i32_0 = arith.constant 0 : i32
    %c0_i32_1 = arith.constant 0 : i32
    return %c0_i32, %c0_i32_0 : i32, i32
  }
  func.func @transform_2(%arg0: i32) -> (i32, i32) {
    %c0_i32 = arith.constant 0 : i32
    %c0_i32_0 = arith.constant 0 : i32
    %c0_i32_1 = arith.constant 0 : i32
    return %c0_i32, %c0_i32_0 : i32, i32
  }
  func.func @transform_3(%arg0: i32) -> (i32, i32) {
    %c0_i32 = arith.constant 0 : i32
    %c0_i32_0 = arith.constant 0 : i32
    return %arg0, %c0_i32 : i32, i32
  }
}

module attributes {stable_mosaic.version = 11 : i64} {
  func.func @_mha_kernel(%arg0: i32, %arg1: memref<1x4x8x8xf32, #tpu.memory_space<vmem>>, %arg2: memref<1x4x8x8xf32, #tpu.memory_space<vmem>>, %arg3: memref<1x4x8x8xf32, #tpu.memory_space<vmem>>, %arg4: memref<1x1x1x8xf32, #tpu.memory_space<vmem>>, %arg5: memref<1x4x8x8xf32, #tpu.memory_space<vmem>>, %arg6: memref<1x4x8x8xf32, #tpu.memory_space<vmem>>) attributes {dimension_semantics = [#tpu.dimension_semantics<parallel>], iteration_bounds = array<i64: 2>, scalar_prefetch = 0 : i64, scratch_operands = 0 : i64, tpu.core_type = #tpu.core_type<tc>, window_params = [{transform_indices = @transform_0, window_bounds = array<i64: 1, 4, 8, 8>}, {transform_indices = @transform_1, window_bounds = array<i64: 1, 4, 8, 8>}, {transform_indices = @transform_2, window_bounds = array<i64: 1, 4, 8, 8>}, {transform_indices = @transform_3, window_bounds = array<i64: 1, 1, 1, 8>}, {transform_indices = @transform_4, window_bounds = array<i64: 1, 4, 8, 8>}, {transform_indices = @transform_5, window_bounds = array<i64: 1, 4, 8, 8>}]} {
    %c0 = arith.constant 0 : index
    %c0_0 = arith.constant 0 : index
    %c0_1 = arith.constant 0 : index
    %c0_2 = arith.constant 0 : index
    %0 = vector.load %arg1[%c0, %c0_0, %c0_1, %c0_2] : memref<1x4x8x8xf32, #tpu.memory_space<vmem>>, vector<1x4x8x8xf32>
    %1 = vector.shape_cast %0 : vector<1x4x8x8xf32> to vector<4x8x8xf32>
    %2 = arith.truncf %1 : vector<4x8x8xf32> to vector<4x8x8xbf16>
    %c0_3 = arith.constant 0 : index
    %c0_4 = arith.constant 0 : index
    %c0_5 = arith.constant 0 : index
    %c0_6 = arith.constant 0 : index
    %3 = vector.load %arg2[%c0_3, %c0_4, %c0_5, %c0_6] : memref<1x4x8x8xf32, #tpu.memory_space<vmem>>, vector<1x4x8x8xf32>
    %4 = vector.shape_cast %3 : vector<1x4x8x8xf32> to vector<4x8x8xf32>
    %5 = arith.truncf %4 : vector<4x8x8xf32> to vector<4x8x8xbf16>
    %c0_7 = arith.constant 0 : index
    %c0_8 = arith.constant 0 : index
    %c0_9 = arith.constant 0 : index
    %c0_10 = arith.constant 0 : index
    %6 = vector.load %arg3[%c0_7, %c0_8, %c0_9, %c0_10] : memref<1x4x8x8xf32, #tpu.memory_space<vmem>>, vector<1x4x8x8xf32>
    %7 = vector.shape_cast %6 : vector<1x4x8x8xf32> to vector<4x8x8xf32>
    %8 = arith.truncf %7 : vector<4x8x8xf32> to vector<4x8x8xbf16>
    %c0_11 = arith.constant 0 : index
    %c0_12 = arith.constant 0 : index
    %c0_13 = arith.constant 0 : index
    %c0_14 = arith.constant 0 : index
    %9 = vector.load %arg4[%c0_11, %c0_12, %c0_13, %c0_14] : memref<1x1x1x8xf32, #tpu.memory_space<vmem>>, vector<1x1x1x8xf32>
    %10 = vector.shape_cast %9 : vector<1x1x1x8xf32> to vector<1x8xf32>
    "tpu.trace_start"() <{level = 10 : i32, message = "hqd,hkd->hqk"}> : () -> ()
    %cst = arith.constant dense<0.000000e+00> : vector<4x8x8xf32>
    %11 = tpu.matmul %2, %5, %cst {dimension_numbers = #tpu.dot_dimension_numbers<[2], [2], [1], [1], [0, 0, 0, 1, 1, 1], [0], [0]>} : vector<4x8x8xbf16>, vector<4x8x8xbf16>, vector<4x8x8xf32> -> vector<4x8x8xf32>
    "tpu.trace_stop"() : () -> ()
    %cst_15 = arith.constant 0.353553385 : f32
    %12 = vector.broadcast %cst_15 : f32 to vector<4x8x8xf32>
    %13 = arith.mulf %11, %12 : vector<4x8x8xf32>
    %cst_16 = arith.constant 0.000000e+00 : f32
    %14 = vector.broadcast %cst_16 : f32 to vector<1x8xf32>
    %15 = arith.cmpf oeq, %10, %14 : vector<1x8xf32>
    %cst_17 = arith.constant -1.000000e+09 : f32
    %16 = vector.shape_cast %15 : vector<1x8xi1> to vector<1x1x8xi1>
    %17 = vector.broadcast %16 : vector<1x1x8xi1> to vector<4x8x8xi1>
    %18 = vector.broadcast %cst_17 : f32 to vector<4x8x8xf32>
    %19 = arith.select %17, %18, %13 : vector<4x8x8xi1>, vector<4x8x8xf32>
    %cst_18 = arith.constant dense<0xFF800000> : vector<4x8xf32>
    %20 = vector.multi_reduction <maximumf>, %19, %cst_18 [2] : vector<4x8x8xf32> to vector<4x8xf32>
    %21 = vector.shape_cast %20 : vector<4x8xf32> to vector<4x8x1xf32>
    %22 = vector.broadcast %21 : vector<4x8x1xf32> to vector<4x8x8xf32>
    %23 = arith.subf %19, %22 : vector<4x8x8xf32>
    %24 = math.exp %23 : vector<4x8x8xf32>
    %cst_19 = arith.constant dense<0.000000e+00> : vector<4x8xf32>
    %25 = vector.multi_reduction <add>, %24, %cst_19 [2] : vector<4x8x8xf32> to vector<4x8xf32>
    %26 = vector.shape_cast %25 : vector<4x8xf32> to vector<4x8x1xf32>
    %27 = vector.broadcast %26 : vector<4x8x1xf32> to vector<4x8x8xf32>
    %28 = arith.divf %24, %27 : vector<4x8x8xf32>
    %c0_20 = arith.constant 0 : index
    %c0_21 = arith.constant 0 : index
    %c0_22 = arith.constant 0 : index
    %c0_23 = arith.constant 0 : index
    %29 = vector.load %arg6[%c0_20, %c0_21, %c0_22, %c0_23] : memref<1x4x8x8xf32, #tpu.memory_space<vmem>>, vector<1x4x8x8xf32>
    %30 = vector.shape_cast %29 : vector<1x4x8x8xf32> to vector<4x8x8xf32>
    %31 = vector.shape_cast %28 : vector<4x8x8xf32> to vector<1x4x8x8xf32>
    tpu.vector_store %arg6[%c0_20, %c0_21, %c0_22, %c0_23], %31 {strides = array<i32>} : memref<1x4x8x8xf32, #tpu.memory_space<vmem>>, vector<1x4x8x8xf32>,
    %32 = arith.truncf %28 : vector<4x8x8xf32> to vector<4x8x8xbf16>
    "tpu.trace_start"() <{level = 10 : i32, message = "hqk,hkd->hqd"}> : () -> ()
    %cst_24 = arith.constant dense<0.000000e+00> : vector<4x8x8xf32>
    %33 = tpu.matmul %32, %8, %cst_24 {dimension_numbers = #tpu.dot_dimension_numbers<[2], [1], [1], [2], [0, 0, 0, 1, 1, 2], [0], [0]>} : vector<4x8x8xbf16>, vector<4x8x8xbf16>, vector<4x8x8xf32> -> vector<4x8x8xf32>
    "tpu.trace_stop"() : () -> ()
    %c0_25 = arith.constant 0 : index
    %c0_26 = arith.constant 0 : index
    %c0_27 = arith.constant 0 : index
    %c0_28 = arith.constant 0 : index
    %34 = vector.load %arg5[%c0_25, %c0_26, %c0_27, %c0_28] : memref<1x4x8x8xf32, #tpu.memory_space<vmem>>, vector<1x4x8x8xf32>
    %35 = vector.shape_cast %34 : vector<1x4x8x8xf32> to vector<4x8x8xf32>
    %36 = vector.shape_cast %33 : vector<4x8x8xf32> to vector<1x4x8x8xf32>
    tpu.vector_store %arg5[%c0_25, %c0_26, %c0_27, %c0_28], %36 {strides = array<i32>} : memref<1x4x8x8xf32, #tpu.memory_space<vmem>>, vector<1x4x8x8xf32>,
    return
  }
  func.func @transform_0(%arg0: i32) -> (i32, i32, i32, i32) {
    %c0_i32 = arith.constant 0 : i32
    %c0_i32_0 = arith.constant 0 : i32
    %c0_i32_1 = arith.constant 0 : i32
    %c0_i32_2 = arith.constant 0 : i32
    return %arg0, %c0_i32, %c0_i32_0, %c0_i32_1 : i32, i32, i32, i32
  }
  func.func @transform_1(%arg0: i32) -> (i32, i32, i32, i32) {
    %c0_i32 = arith.constant 0 : i32
    %c0_i32_0 = arith.constant 0 : i32
    %c0_i32_1 = arith.constant 0 : i32
    %c0_i32_2 = arith.constant 0 : i32
    return %arg0, %c0_i32, %c0_i32_0, %c0_i32_1 : i32, i32, i32, i32
  }
  func.func @transform_2(%arg0: i32) -> (i32, i32, i32, i32) {
    %c0_i32 = arith.constant 0 : i32
    %c0_i32_0 = arith.constant 0 : i32
    %c0_i32_1 = arith.constant 0 : i32
    %c0_i32_2 = arith.constant 0 : i32
    return %arg0, %c0_i32, %c0_i32_0, %c0_i32_1 : i32, i32, i32, i32
  }
  func.func @transform_3(%arg0: i32) -> (i32, i32, i32, i32) {
    %c0_i32 = arith.constant 0 : i32
    %c0_i32_0 = arith.constant 0 : i32
    %c0_i32_1 = arith.constant 0 : i32
    %c0_i32_2 = arith.constant 0 : i32
    return %arg0, %c0_i32, %c0_i32_0, %c0_i32_1 : i32, i32, i32, i32
  }
  func.func @transform_4(%arg0: i32) -> (i32, i32, i32, i32) {
    %c0_i32 = arith.constant 0 : i32
    %c0_i32_0 = arith.constant 0 : i32
    %c0_i32_1 = arith.constant 0 : i32
    %c0_i32_2 = arith.constant 0 : i32
    return %arg0, %c0_i32, %c0_i32_0, %c0_i32_1 : i32, i32, i32, i32
  }
  func.func @transform_5(%arg0: i32) -> (i32, i32, i32, i32) {
    %c0_i32 = arith.constant 0 : i32
    %c0_i32_0 = arith.constant 0 : i32
    %c0_i32_1 = arith.constant 0 : i32
    %c0_i32_2 = arith.constant 0 : i32
    return %arg0, %c0_i32, %c0_i32_0, %c0_i32_1 : i32, i32, i32, i32
  }
}

module attributes {stable_mosaic.version = 11 : i64} {
  func.func @_linear_kernel(%arg0: i32, %arg1: memref<8x32xf32, #tpu.memory_space<vmem>>, %arg2: memref<32x64xf32, #tpu.memory_space<vmem>>, %arg3: memref<1x64xf32, #tpu.memory_space<vmem>>, %arg4: memref<8x64xf32, #tpu.memory_space<vmem>>) attributes {dimension_semantics = [#tpu.dimension_semantics<parallel>], iteration_bounds = array<i64: 2>, scalar_prefetch = 0 : i64, scratch_operands = 0 : i64, tpu.core_type = #tpu.core_type<tc>, window_params = [{transform_indices = @transform_0, window_bounds = array<i64: 8, 32>}, {pipeline_mode = #tpu.pipeline_mode<synchronous>, transform_indices = @transform_1, window_bounds = array<i64: 32, 64>}, {pipeline_mode = #tpu.pipeline_mode<synchronous>, transform_indices = @transform_2, window_bounds = array<i64: 1, 64>}, {transform_indices = @transform_3, window_bounds = array<i64: 8, 64>}]} {
    %c0 = arith.constant 0 : index
    %c0_0 = arith.constant 0 : index
    %0 = vector.load %arg1[%c0, %c0_0] : memref<8x32xf32, #tpu.memory_space<vmem>>, vector<8x32xf32>
    %1 = arith.truncf %0 : vector<8x32xf32> to vector<8x32xbf16>
    %c0_1 = arith.constant 0 : index
    %c0_2 = arith.constant 0 : index
    %2 = vector.load %arg2[%c0_1, %c0_2] : memref<32x64xf32, #tpu.memory_space<vmem>>, vector<32x64xf32>
    %3 = arith.truncf %2 : vector<32x64xf32> to vector<32x64xbf16>
    %cst = arith.constant dense<0.000000e+00> : vector<8x64xf32>
    %4 = tpu.matmul %1, %3, %cst {dimension_numbers = #tpu.dot_dimension_numbers<[1], [0], [0], [1], [0, 0, 1, 1], [], []>} : vector<8x32xbf16>, vector<32x64xbf16>, vector<8x64xf32> -> vector<8x64xf32>
    %c0_3 = arith.constant 0 : index
    %c0_4 = arith.constant 0 : index
    %5 = vector.load %arg3[%c0_3, %c0_4] : memref<1x64xf32, #tpu.memory_space<vmem>>, vector<1x64xf32>
    %6 = vector.broadcast %5 : vector<1x64xf32> to vector<8x64xf32>
    %7 = arith.addf %4, %6 : vector<8x64xf32>
    %c0_5 = arith.constant 0 : index
    %c0_6 = arith.constant 0 : index
    %8 = vector.load %arg4[%c0_5, %c0_6] : memref<8x64xf32, #tpu.memory_space<vmem>>, vector<8x64xf32>
    tpu.vector_store %arg4[%c0_5, %c0_6], %7 {strides = array<i32>} : memref<8x64xf32, #tpu.memory_space<vmem>>, vector<8x64xf32>,
    return
  }
  func.func @transform_0(%arg0: i32) -> (i32, i32) {
    %c0_i32 = arith.constant 0 : i32
    %c0_i32_0 = arith.constant 0 : i32
    return %arg0, %c0_i32 : i32, i32
  }
  func.func @transform_1(%arg0: i32) -> (i32, i32) {
    %c0_i32 = arith.constant 0 : i32
    %c0_i32_0 = arith.constant 0 : i32
    %c0_i32_1 = arith.constant 0 : i32
    return %c0_i32, %c0_i32_0 : i32, i32
  }
  func.func @transform_2(%arg0: i32) -> (i32, i32) {
    %c0_i32 = arith.constant 0 : i32
    %c0_i32_0 = arith.constant 0 : i32
    %c0_i32_1 = arith.constant 0 : i32
    return %c0_i32, %c0_i32_0 : i32, i32
  }
  func.func @transform_3(%arg0: i32) -> (i32, i32) {
    %c0_i32 = arith.constant 0 : i32
    %c0_i32_0 = arith.constant 0 : i32
    return %arg0, %c0_i32 : i32, i32
  }
}

module attributes {stable_mosaic.version = 11 : i64} {
  func.func @_ffn_add_ln_kernel(%arg0: i32, %arg1: memref<8x32xf32, #tpu.memory_space<vmem>>, %arg2: memref<32x64xf32, #tpu.memory_space<vmem>>, %arg3: memref<1x64xf32, #tpu.memory_space<vmem>>, %arg4: memref<64x32xf32, #tpu.memory_space<vmem>>, %arg5: memref<1x32xf32, #tpu.memory_space<vmem>>, %arg6: memref<1x32xf32, #tpu.memory_space<vmem>>, %arg7: memref<1x32xf32, #tpu.memory_space<vmem>>, %arg8: memref<8x32xf32, #tpu.memory_space<vmem>>) attributes {dimension_semantics = [#tpu.dimension_semantics<parallel>], iteration_bounds = array<i64: 2>, scalar_prefetch = 0 : i64, scratch_operands = 0 : i64, tpu.core_type = #tpu.core_type<tc>, window_params = [{transform_indices = @transform_0, window_bounds = array<i64: 8, 32>}, {pipeline_mode = #tpu.pipeline_mode<synchronous>, transform_indices = @transform_1, window_bounds = array<i64: 32, 64>}, {pipeline_mode = #tpu.pipeline_mode<synchronous>, transform_indices = @transform_2, window_bounds = array<i64: 1, 64>}, {pipeline_mode = #tpu.pipeline_mode<synchronous>, transform_indices = @transform_3, window_bounds = array<i64: 64, 32>}, {pipeline_mode = #tpu.pipeline_mode<synchronous>, transform_indices = @transform_4, window_bounds = array<i64: 1, 32>}, {pipeline_mode = #tpu.pipeline_mode<synchronous>, transform_indices = @transform_5, window_bounds = array<i64: 1, 32>}, {pipeline_mode = #tpu.pipeline_mode<synchronous>, transform_indices = @transform_6, window_bounds = array<i64: 1, 32>}, {transform_indices = @transform_7, window_bounds = array<i64: 8, 32>}]} {
    %c0 = arith.constant 0 : index
    %c0_0 = arith.constant 0 : index
    %0 = vector.load %arg1[%c0, %c0_0] : memref<8x32xf32, #tpu.memory_space<vmem>>, vector<8x32xf32>
    %1 = arith.truncf %0 : vector<8x32xf32> to vector<8x32xbf16>
    %c0_1 = arith.constant 0 : index
    %c0_2 = arith.constant 0 : index
    %2 = vector.load %arg2[%c0_1, %c0_2] : memref<32x64xf32, #tpu.memory_space<vmem>>, vector<32x64xf32>
    %3 = arith.truncf %2 : vector<32x64xf32> to vector<32x64xbf16>
    %cst = arith.constant dense<0.000000e+00> : vector<8x64xf32>
    %4 = tpu.matmul %1, %3, %cst {dimension_numbers = #tpu.dot_dimension_numbers<[1], [0], [0], [1], [0, 0, 1, 1], [], []>} : vector<8x32xbf16>, vector<32x64xbf16>, vector<8x64xf32> -> vector<8x64xf32>
    %c0_3 = arith.constant 0 : index
    %c0_4 = arith.constant 0 : index
    %5 = vector.load %arg3[%c0_3, %c0_4] : memref<1x64xf32, #tpu.memory_space<vmem>>, vector<1x64xf32>
    %6 = vector.broadcast %5 : vector<1x64xf32> to vector<8x64xf32>
    %7 = arith.addf %4, %6 : vector<8x64xf32>
    %cst_5 = arith.constant 0.000000e+00 : f32
    %8 = vector.broadcast %cst_5 : f32 to vector<8x64xf32>
    %9 = arith.maximumf %7, %8 : vector<8x64xf32>
    %10 = arith.truncf %9 : vector<8x64xf32> to vector<8x64xbf16>
    %c0_6 = arith.constant 0 : index
    %c0_7 = arith.constant 0 : index
    %11 = vector.load %arg4[%c0_6, %c0_7] : memref<64x32xf32, #tpu.memory_space<vmem>>, vector<64x32xf32>
    %12 = arith.truncf %11 : vector<64x32xf32> to vector<64x32xbf16>
    %cst_8 = arith.constant dense<0.000000e+00> : vector<8x32xf32>
    %13 = tpu.matmul %10, %12, %cst_8 {dimension_numbers = #tpu.dot_dimension_numbers<[1], [0], [0], [1], [0, 0, 1, 1], [], []>} : vector<8x64xbf16>, vector<64x32xbf16>, vector<8x32xf32> -> vector<8x32xf32>
    %c0_9 = arith.constant 0 : index
    %c0_10 = arith.constant 0 : index
    %14 = vector.load %arg5[%c0_9, %c0_10] : memref<1x32xf32, #tpu.memory_space<vmem>>, vector<1x32xf32>
    %15 = vector.broadcast %14 : vector<1x32xf32> to vector<8x32xf32>
    %16 = arith.addf %13, %15 : vector<8x32xf32>
    %17 = arith.addf %0, %16 : vector<8x32xf32>
    %cst_11 = arith.constant dense<0.000000e+00> : vector<8xf32>
    %18 = vector.multi_reduction <add>, %17, %cst_11 [1] : vector<8x32xf32> to vector<8xf32>
    %19 = vector.shape_cast %18 : vector<8xf32> to vector<8x1xf32>
    %cst_12 = arith.constant 3.200000e+01 : f32
    %20 = vector.broadcast %cst_12 : f32 to vector<8x1xf32>
    %21 = arith.divf %19, %20 : vector<8x1xf32>
    %22 = vector.broadcast %21 : vector<8x1xf32> to vector<8x32xf32>
    %23 = arith.subf %17, %22 : vector<8x32xf32>
    %24 = arith.mulf %23, %23 : vector<8x32xf32>
    %cst_13 = arith.constant dense<0.000000e+00> : vector<8xf32>
    %25 = vector.multi_reduction <add>, %24, %cst_13 [1] : vector<8x32xf32> to vector<8xf32>
    %26 = vector.shape_cast %25 : vector<8xf32> to vector<8x1xf32>
    %cst_14 = arith.constant 3.200000e+01 : f32
    %27 = vector.broadcast %cst_14 : f32 to vector<8x1xf32>
    %28 = arith.divf %26, %27 : vector<8x1xf32>
    %29 = vector.broadcast %21 : vector<8x1xf32> to vector<8x32xf32>
    %30 = arith.subf %17, %29 : vector<8x32xf32>
    %cst_15 = arith.constant 9.99999974E-6 : f32
    %31 = vector.broadcast %cst_15 : f32 to vector<8x1xf32>
    %32 = arith.addf %28, %31 : vector<8x1xf32>
    %33 = math.rsqrt %32 : vector<8x1xf32>
    %34 = vector.broadcast %33 : vector<8x1xf32> to vector<8x32xf32>
    %35 = arith.mulf %30, %34 : vector<8x32xf32>
    %c0_16 = arith.constant 0 : index
    %c0_17 = arith.constant 0 : index
    %36 = vector.load %arg6[%c0_16, %c0_17] : memref<1x32xf32, #tpu.memory_space<vmem>>, vector<1x32xf32>
    %37 = vector.broadcast %36 : vector<1x32xf32> to vector<8x32xf32>
    %38 = arith.mulf %35, %37 : vector<8x32xf32>
    %c0_18 = arith.constant 0 : index
    %c0_19 = arith.constant 0 : index
    %39 = vector.load %arg7[%c0_18, %c0_19] : memref<1x32xf32, #tpu.memory_space<vmem>>, vector<1x32xf32>
    %40 = vector.broadcast %39 : vector<1x32xf32> to vector<8x32xf32>
    %41 = arith.addf %38, %40 : vector<8x32xf32>
    %c0_20 = arith.constant 0 : index
    %c0_21 = arith.constant 0 : index
    %42 = vector.load %arg8[%c0_20, %c0_21] : memref<8x32xf32, #tpu.memory_space<vmem>>, vector<8x32xf32>
    tpu.vector_store %arg8[%c0_20, %c0_21], %41 {strides = array<i32>} : memref<8x32xf32, #tpu.memory_space<vmem>>, vector<8x32xf32>,
    return
  }
  func.func @transform_0(%arg0: i32) -> (i32, i32) {
    %c0_i32 = arith.constant 0 : i32
    %c0_i32_0 = arith.constant 0 : i32
    return %arg0, %c0_i32 : i32, i32
  }
  func.func @transform_1(%arg0: i32) -> (i32, i32) {
    %c0_i32 = arith.constant 0 : i32
    %c0_i32_0 = arith.constant 0 : i32
    %c0_i32_1 = arith.constant 0 : i32
    return %c0_i32, %c0_i32_0 : i32, i32
  }
  func.func @transform_2(%arg0: i32) -> (i32, i32) {
    %c0_i32 = arith.constant 0 : i32
    %c0_i32_0 = arith.constant 0 : i32
    %c0_i32_1 = arith.constant 0 : i32
    return %c0_i32, %c0_i32_0 : i32, i32
  }
  func.func @transform_3(%arg0: i32) -> (i32, i32) {
    %c0_i32 = arith.constant 0 : i32
    %c0_i32_0 = arith.constant 0 : i32
    %c0_i32_1 = arith.constant 0 : i32
    return %c0_i32, %c0_i32_0 : i32, i32
  }
  func.func @transform_4(%arg0: i32) -> (i32, i32) {
    %c0_i32 = arith.constant 0 : i32
    %c0_i32_0 = arith.constant 0 : i32
    %c0_i32_1 = arith.constant 0 : i32
    return %c0_i32, %c0_i32_0 : i32, i32
  }
  func.func @transform_5(%arg0: i32) -> (i32, i32) {
    %c0_i32 = arith.constant 0 : i32
    %c0_i32_0 = arith.constant 0 : i32
    %c0_i32_1 = arith.constant 0 : i32
    return %c0_i32, %c0_i32_0 : i32, i32
  }
  func.func @transform_6(%arg0: i32) -> (i32, i32) {
    %c0_i32 = arith.constant 0 : i32
    %c0_i32_0 = arith.constant 0 : i32
    %c0_i32_1 = arith.constant 0 : i32
    return %c0_i32, %c0_i32_0 : i32, i32
  }
  func.func @transform_7(%arg0: i32) -> (i32, i32) {
    %c0_i32 = arith.constant 0 : i32
    %c0_i32_0 = arith.constant 0 : i32
    return %arg0, %c0_i32 : i32, i32
  }
}

module attributes {stable_mosaic.version = 11 : i64} {
  func.func @_linear_kernel(%arg0: i32, %arg1: memref<8x32xf32, #tpu.memory_space<vmem>>, %arg2: memref<32x128xf32, #tpu.memory_space<vmem>>, %arg3: memref<1x128xf32, #tpu.memory_space<vmem>>, %arg4: memref<8x128xf32, #tpu.memory_space<vmem>>) attributes {dimension_semantics = [#tpu.dimension_semantics<parallel>], iteration_bounds = array<i64: 2>, scalar_prefetch = 0 : i64, scratch_operands = 0 : i64, tpu.core_type = #tpu.core_type<tc>, window_params = [{transform_indices = @transform_0, window_bounds = array<i64: 8, 32>}, {pipeline_mode = #tpu.pipeline_mode<synchronous>, transform_indices = @transform_1, window_bounds = array<i64: 32, 128>}, {pipeline_mode = #tpu.pipeline_mode<synchronous>, transform_indices = @transform_2, window_bounds = array<i64: 1, 128>}, {transform_indices = @transform_3, window_bounds = array<i64: 8, 128>}]} {
    %c0 = arith.constant 0 : index
    %c0_0 = arith.constant 0 : index
    %0 = vector.load %arg1[%c0, %c0_0] : memref<8x32xf32, #tpu.memory_space<vmem>>, vector<8x32xf32>
    %1 = arith.truncf %0 : vector<8x32xf32> to vector<8x32xbf16>
    %c0_1 = arith.constant 0 : index
    %c0_2 = arith.constant 0 : index
    %2 = vector.load %arg2[%c0_1, %c0_2] : memref<32x128xf32, #tpu.memory_space<vmem>>, vector<32x128xf32>
    %3 = arith.truncf %2 : vector<32x128xf32> to vector<32x128xbf16>
    %cst = arith.constant dense<0.000000e+00> : vector<8x128xf32>
    %4 = tpu.matmul %1, %3, %cst {dimension_numbers = #tpu.dot_dimension_numbers<[1], [0], [0], [1], [0, 0, 1, 1], [], []>} : vector<8x32xbf16>, vector<32x128xbf16>, vector<8x128xf32> -> vector<8x128xf32>
    %c0_3 = arith.constant 0 : index
    %c0_4 = arith.constant 0 : index
    %5 = vector.load %arg3[%c0_3, %c0_4] : memref<1x128xf32, #tpu.memory_space<vmem>>, vector<1x128xf32>
    %6 = vector.broadcast %5 : vector<1x128xf32> to vector<8x128xf32>
    %7 = arith.addf %4, %6 : vector<8x128xf32>
    %c0_5 = arith.constant 0 : index
    %c0_6 = arith.constant 0 : index
    %8 = vector.load %arg4[%c0_5, %c0_6] : memref<8x128xf32, #tpu.memory_space<vmem>>, vector<8x128xf32>
    tpu.vector_store %arg4[%c0_5, %c0_6], %7 {strides = array<i32>} : memref<8x128xf32, #tpu.memory_space<vmem>>, vector<8x128xf32>,
    return
  }
  func.func @transform_0(%arg0: i32) -> (i32, i32) {
    %c0_i32 = arith.constant 0 : i32
    %c0_i32_0 = arith.constant 0 : i32
    return %arg0, %c0_i32 : i32, i32
  }
  func.func @transform_1(%arg0: i32) -> (i32, i32) {
    %c0_i32 = arith.constant 0 : i32
    %c0_i32_0 = arith.constant 0 : i32
    %c0_i32_1 = arith.constant 0 : i32
    return %c0_i32, %c0_i32_0 : i32, i32
  }
  func.func @transform_2(%arg0: i32) -> (i32, i32) {
    %c0_i32 = arith.constant 0 : i32
    %c0_i32_0 = arith.constant 0 : i32
    %c0_i32_1 = arith.constant 0 : i32
    return %c0_i32, %c0_i32_0 : i32, i32
  }
  func.func @transform_3(%arg0: i32) -> (i32, i32) {
    %c0_i32 = arith.constant 0 : i32
    %c0_i32_0 = arith.constant 0 : i32
    return %arg0, %c0_i32 : i32, i32
  }
}

</mosaic_0001>

<llo_original>
// kernel: decoder_forward.20
$region0: #{decoder_forward.20}
  #allocation0 [shape = 'u32[]', space=smem, size = 0x4, offset = 0x4, fixed_abs, tag = 'smem constant byte address 0x4 - core index']
  #allocation1 [shape = 'u32[144,128]{1,0:T(1,128)}', space=vmem, size = 0x12000, scoped, tag = 'internal scratch']
  %s0 = inlined_call_operand.vmem [shape: f32[16,32], index: 0, kind: input, shape index: {}]
  %s1 = inlined_call_operand.vmem [shape: f32[32,32], index: 1, kind: input, shape index: {}]
  %s2 = inlined_call_operand.vmem [shape: f32[1,32], index: 2, kind: input, shape index: {}]
  %s3 = inlined_call_operand.vmem [shape: f32[16,32], index: 3, kind: output, shape index: {}]
  %s4 = sld [smem:[#allocation0]]
  $region45: #{decoder_forward.20} parent=0
    _
  %s6 = ssub.s32 1, %s4
  %s7 = scalar_select 0, %s6, %s4
  loop: start=0, step=1, limit=4
  $region2: #{decoder_forward.20} parent=0 // loop_pre_header
    _
  $region3: #{decoder_forward.20} parent=0 // loop_header
    %s9 = sphi 0, %s13
    %p10 = scmp.ge.s32.totalorder %s9, 4
    %s19 = sphi 0, %s21
    %s22 = sphi 0, %s19
    %s23 = sphi 0, %s22
    %s39 = sphi 0, %s23
    %s43 = sphi 0, %s43
    %s45 = sphi 0, %s43
    %s46 = sphi 0, %s45
    %s60 = sphi 0, %s46
    %s64 = sphi 0, %s64
    %s66 = sphi 0, %s64
    %s67 = sphi 0, %s66
    %s81 = sphi 0, %s67
    %s87 = sphi 0, %s89
    %s90 = sphi 0, %s87
    %s91 = sphi 0, %s90
    %s107 = sphi 0, %s91
  $region4: #{decoder_forward.20} parent=0 // loop_header_branch
    %12 = sbr.rel (%p10) target = $region8
  $region5: #{decoder_forward.20} parent=0 // loop_body
    %s14 = ssub.s32 %s9, 1
    %s15 = ssub.s32 %s9, 2
    %s16 = sadd.s32 %s9, 1
    %s17 = ssub.s32 %s9, %s16
    %p18 = scmp.eq.s32.totalorder %s17, 0
    %s20 = sadd.s32 %s19, 1
    %s21 = scalar_select %p18, %s19, %s20
    %p24 = pneg %p18
    %p25 = scmp.eq.s32.totalorder %s9, 1
    %p26 = por %p24, %p25
    %p27 = scmp.ne.s32.totalorder %s19, %s22
    %p28 = scmp.eq.s32.totalorder %s9, 0
    %p29 = por %p27, %p28
    %p30 = scmp.ne.s32.totalorder %s19, %s22
    %p31 = scmp.eq.s32.totalorder %s14, 1
    %p32 = por %p30, %p31
    %p33 = scmp.ne.s32.totalorder %s22, %s23
    %p34 = scmp.eq.s32.totalorder %s14, 0
    %p35 = por %p33, %p34
    %p36 = scmp.ne.s32.totalorder %s22, %s23
    %p37 = scmp.eq.s32.totalorder %s15, 1
    %p38 = por %p36, %p37
    %p40 = scmp.ne.s32.totalorder %s23, %s39
    %p41 = scmp.eq.s32.totalorder %s15, 0
    %p42 = por %p40, %p41
    %s44 = sadd.s32 %s43, 1
    %p47 = scmp.eq.s32.totalorder %s9, 1
    %p48 = scmp.ne.s32.totalorder %s43, %s45
    %p49 = scmp.eq.s32.totalorder %s9, 0
    %p50 = por %p48, %p49
    %p51 = scmp.ne.s32.totalorder %s43, %s45
    %p52 = scmp.eq.s32.totalorder %s14, 1
    %p53 = por %p51, %p52
    %p54 = scmp.ne.s32.totalorder %s45, %s46
    %p55 = scmp.eq.s32.totalorder %s14, 0
    %p56 = por %p54, %p55
    %p57 = scmp.ne.s32.totalorder %s45, %s46
    %p58 = scmp.eq.s32.totalorder %s15, 1
    %p59 = por %p57, %p58
    %p61 = scmp.ne.s32.totalorder %s46, %s60
    %p62 = scmp.eq.s32.totalorder %s15, 0
    %p63 = por %p61, %p62
    %s65 = sadd.s32 %s64, 1
    %p68 = scmp.eq.s32.totalorder %s9, 1
    %p69 = scmp.ne.s32.totalorder %s64, %s66
    %p70 = scmp.eq.s32.totalorder %s9, 0
    %p71 = por %p69, %p70
    %p72 = scmp.ne.s32.totalorder %s64, %s66
    %p73 = scmp.eq.s32.totalorder %s14, 1
    %p74 = por %p72, %p73
    %p75 = scmp.ne.s32.totalorder %s66, %s67
    %p76 = scmp.eq.s32.totalorder %s14, 0
    %p77 = por %p75, %p76
    %p78 = scmp.ne.s32.totalorder %s66, %s67
    %p79 = scmp.eq.s32.totalorder %s15, 1
    %p80 = por %p78, %p79
    %p82 = scmp.ne.s32.totalorder %s67, %s81
    %p83 = scmp.eq.s32.totalorder %s15, 0
    %p84 = por %p82, %p83
    %s85 = ssub.s32 %s9, %s16
    %p86 = scmp.eq.s32.totalorder %s85, 0
    %s88 = sadd.s32 %s87, 1
    %s89 = scalar_select %p86, %s87, %s88
    %p92 = pneg %p86
    %p93 = scmp.eq.s32.totalorder %s9, 1
    %p94 = por %p92, %p93
    %p95 = scmp.ne.s32.totalorder %s87, %s90
    %p96 = scmp.eq.s32.totalorder %s9, 0
    %p97 = por %p95, %p96
    %p98 = scmp.ne.s32.totalorder %s87, %s90
    %p99 = scmp.eq.s32.totalorder %s14, 1
    %p100 = por %p98, %p99
    %p101 = scmp.ne.s32.totalorder %s90, %s91
    %p102 = scmp.eq.s32.totalorder %s14, 0
    %p103 = por %p101, %p102
    %p104 = scmp.ne.s32.totalorder %s90, %s91
    %p105 = scmp.eq.s32.totalorder %s15, 1
    %p106 = por %p104, %p105
    %p108 = scmp.ne.s32.totalorder %s91, %s107
    %p109 = scmp.eq.s32.totalorder %s15, 0
    %p110 = por %p108, %p109
    %p111 = scmp.le.s32.totalorder 1, %s9
    %p112 = scmp.lt.s32.totalorder %s9, 3
    %p113 = pnand %p111, %p112
    %p114 = pneg %p113
    // Predicated region
    $region9: #{decoder_forward.20} parent=5 // pred_check
      _
    $region10: #{decoder_forward.20} parent=5 // pred_check_branch
      %116 = sbr.rel (%p113) target = $region12
    $region11: #{decoder_forward.20} parent=5 // pred_region
      %s117 = ssub.s32 %s9, 1
      // Predicated region
      $region13: #{decoder_forward.20} parent=11 // pred_check
        %p118 = pneg %p56
      $region14: #{decoder_forward.20} parent=11 // pred_check_branch
        %120 = sbr.rel (%p118) target = $region16
      $region15: #{decoder_forward.20} parent=11 // pred_region
        _
      $region16: #{decoder_forward.20} parent=11 // pred_fallthru
        _
      // Predicated region
      $region17: #{decoder_forward.20} parent=11 // pred_check
        %p121 = pneg %p77
      $region18: #{decoder_forward.20} parent=11 // pred_check_branch
        %123 = sbr.rel (%p121) target = $region20
      $region19: #{decoder_forward.20} parent=11 // pred_region
        _
      $region20: #{decoder_forward.20} parent=11 // pred_fallthru
        _
    $region12: #{decoder_forward.20} parent=5 // pred_fallthru
      _
    %p124 = scmp.lt.s32.totalorder %s9, 2
    // Predicated region
    $region21: #{decoder_forward.20} parent=5 // pred_check
      %p125 = pneg %p124
    $region22: #{decoder_forward.20} parent=5 // pred_check_branch
      %127 = sbr.rel (%p125) target = $region24
    $region23: #{decoder_forward.20} parent=5 // pred_region
      // Predicated region
      $region25: #{decoder_forward.20} parent=23 // pred_check
        %p128 = pneg %p29
      $region26: #{decoder_forward.20} parent=23 // pred_check_branch
        %130 = sbr.rel (%p128) target = $region28
      $region27: #{decoder_forward.20} parent=23 // pred_region
        %p131 = scmp.lt.s32.totalorder %s9, 1
        %s132 = scalar_select %p131, %s9, 1
        %s133 = smul.addr %s132, 8
        %s134 = scalar_lea.vmem %s0, %s133
      $region28: #{decoder_forward.20} parent=23 // pred_fallthru
        _
    $region24: #{decoder_forward.20} parent=5 // pred_fallthru
      _
    %p135 = scmp.le.s32.totalorder 1, %s9
    %p136 = scmp.lt.s32.totalorder %s9, 3
    %p137 = pnand %p135, %p136
    %p138 = pneg %p137
    // Predicated region
    $region29: #{decoder_forward.20} parent=5 // pred_check
      _
    $region30: #{decoder_forward.20} parent=5 // pred_check_branch
      %140 = sbr.rel (%p137) target = $region32
    $region31: #{decoder_forward.20} parent=5 // pred_region
      %s141 = ssub.s32 %s9, 1
      %p142 = scmp.lt.s32.totalorder %s14, 1
      %s143 = scalar_select %p142, %s14, 1
      %s144 = smul.addr %s143, 8
      %s145 = scalar_lea.vmem %s0, %s144
      %p146 = pneg %p35
      %p147 = pneg %p32
      %p148 = pneg %p56
      %p149 = pneg %p53
      %p150 = pneg %p77
      %p151 = pneg %p74
      %p152 = pneg %p103
      %p153 = pneg %p100
      %p154 = scmp.lt.s32.totalorder %s14, 1
      %s155 = scalar_select %p154, %s14, 1
      %s156 = smul.addr %s155, 8
      %s157 = scalar_lea.vmem %s3, %s156
      %p158 = scmp.lt.s32.totalorder %s14, 1
      %s159 = scalar_select %p158, %s14, 1
      %s160 = smul.addr %s159, 8
      %s161 = scalar_lea.vmem %s0, %s160
      %p162 = scmp.lt.s32.totalorder %s14, 1
      %s163 = scalar_select %p162, %s14, 1
      %s164 = smul.addr %s163, 8
      %s165 = scalar_lea.vmem %s3, %s164
      %v167 = vld [vmem:[%s161] sm:$0xff]
      %v168 = vpack.c.bf16 %v167, %v167
      %v169 = vld [vmem:[%s1] sm:$0xff]
      %v170 = vld [vmem:[%s1 + $0x8] sm:$0xff]
      %v171 = vld [vmem:[%s1 + $0x10] sm:$0xff]
      %v172 = vld [vmem:[%s1 + $0x18] sm:$0xff]
      %v173 = vpack.c.bf16 %v170, %v169
      %v174 = vpack.c.bf16 %v172, %v171
      %v175 = vld [vmem:[%s2] sm:$0x1]
      %v177 = vlaneseq
      %v178 = vshrl.u32 %v177, 7
      %v179 = vsub.s32 0, %v178
      %v180 = vrot.slane %v175, %v179
      %vm182 = vcmask 261120
      %v184 = vsel %vm182, %v168, 0
      %186 = vmatprep.subr.bf16.mxu0 0
      %187 = vmatpush1.bf16.msra.mxu0 %v173
      %188 = vmatprep.subr.bf16.mxu0 0
      %189 = vmatpush1.bf16.msra.mxu0 %v174
      %190 = vmatprep.subr.bf16.mxu0 0
      %191 = vmatpush1.bf16.msra.mxu0 0
      %192 = vmatprep.subr.bf16.mxu0 0
      %193 = vmatpush1.bf16.msra.mxu0 0
      %194 = vmatprep.subr.bf16.mxu0 0
      %195 = vmatpush1.bf16.msra.mxu0 0
      %196 = vmatprep.subr.bf16.mxu0 0
      %197 = vmatpush1.bf16.msra.mxu0 0
      %198 = vmatprep.subr.bf16.mxu0 0
      %199 = vmatpush1.bf16.msra.mxu0 0
      %200 = vmatprep.subr.bf16.mxu0 0
      %201 = vmatpush1.bf16.msra.mxu0 0
      %202 = vmatprep.subr.bf16.mxu0 0
      %203 = vmatpush1.bf16.msra.mxu0 0
      %204 = vmatprep.subr.bf16.mxu0 0
      %205 = vmatpush1.bf16.msra.mxu0 0
      %206 = vmatprep.subr.bf16.mxu0 0
      %207 = vmatpush1.bf16.msra.mxu0 0
      %208 = vmatprep.subr.bf16.mxu0 0
      %209 = vmatpush1.bf16.msra.mxu0 0
      %210 = vmatprep.subr.bf16.mxu0 0
      %211 = vmatpush1.bf16.msra.mxu0 0
      %212 = vmatprep.subr.bf16.mxu0 0
      %213 = vmatpush1.bf16.msra.mxu0 0
      %214 = vmatprep.subr.bf16.mxu0 0
      %215 = vmatpush1.bf16.msra.mxu0 0
      %216 = vmatprep.subr.bf16.mxu0 0
      %217 = vmatpush1.bf16.msra.mxu0 0
      %218 = vmatprep.mubr.bf16.mxu0 0
      %219 = vmatmul.mubr.bf16.gmra.mrb[0].mxu0 %v184
      %v220 = vpop.f32.mrb[0].mxu0
      %v221 = vadd.f32 %v180, %v220
      %v222 = vpop.f32.mrb[0].mxu0
      %v223 = vpop.f32.mrb[0].mxu0
      %v224 = vpop.f32.mrb[0].mxu0
      %225 = vdwg.mxu0
      %226 = vst.msk [vmem:[%s165] sm:$0xff] %vm182, %v221
      %p227 = scmp.lt.s32.totalorder %s14, 1
      %s228 = scalar_select %p227, %s14, 1
      %s229 = smul.addr %s228, 8
      %s230 = scalar_lea.vmem %s3, %s229
      // Predicated region
      $region33: #{decoder_forward.20} parent=31 // pred_check
        %p231 = pneg %p100
      $region34: #{decoder_forward.20} parent=31 // pred_check_branch
        %233 = sbr.rel (%p231) target = $region36
      $region35: #{decoder_forward.20} parent=31 // pred_region
        _
      $region36: #{decoder_forward.20} parent=31 // pred_fallthru
        _
    $region32: #{decoder_forward.20} parent=5 // pred_fallthru
      _
    %p234 = scmp.le.s32.totalorder 2, %s9
    // Predicated region
    $region37: #{decoder_forward.20} parent=5 // pred_check
      %p235 = pneg %p234
    $region38: #{decoder_forward.20} parent=5 // pred_check_branch
      %237 = sbr.rel (%p235) target = $region40
    $region39: #{decoder_forward.20} parent=5 // pred_region
      %s238 = ssub.s32 %s9, 2
      // Predicated region
      $region41: #{decoder_forward.20} parent=39 // pred_check
        %p239 = pneg %p106
      $region42: #{decoder_forward.20} parent=39 // pred_check_branch
        %241 = sbr.rel (%p239) target = $region44
      $region43: #{decoder_forward.20} parent=39 // pred_region
        %p242 = scmp.lt.s32.totalorder %s15, 1
        %s243 = scalar_select %p242, %s15, 1
        %s244 = smul.addr %s243, 8
        %s245 = scalar_lea.vmem %s3, %s244
      $region44: #{decoder_forward.20} parent=39 // pred_fallthru
        _
    $region40: #{decoder_forward.20} parent=5 // pred_fallthru
      _
  $region6: #{decoder_forward.20} parent=0 // loop_footer
    %s13 = sadd.s32 1, %s9
  $region7: #{decoder_forward.20} parent=0 // loop_footer_branch
    %8 = sbr.rel target = $region3
  $region8: #{decoder_forward.20} parent=0 // loop_exit
    _

// kernel: decoder_forward.19
$region0: #{decoder_forward.19}
  #allocation0 [shape = 'u32[]', space=smem, size = 0x4, offset = 0x4, fixed_abs, tag = 'smem constant byte address 0x4 - core index']
  #allocation1 [shape = 'u32[144,128]{1,0:T(1,128)}', space=vmem, size = 0x12000, scoped, tag = 'internal scratch']
  %s0 = inlined_call_operand.vmem [shape: f32[16,32], index: 0, kind: input, shape index: {}]
  %s1 = inlined_call_operand.vmem [shape: f32[16,32], index: 1, kind: input, shape index: {}]
  %s2 = inlined_call_operand.vmem [shape: f32[32,32], index: 2, kind: input, shape index: {}]
  %s3 = inlined_call_operand.vmem [shape: f32[1,32], index: 3, kind: input, shape index: {}]
  %s4 = inlined_call_operand.vmem [shape: f32[1,32], index: 4, kind: input, shape index: {}]
  %s5 = inlined_call_operand.vmem [shape: f32[1,32], index: 5, kind: input, shape index: {}]
  %s6 = inlined_call_operand.vmem [shape: f32[16,32], index: 6, kind: output, shape index: {}]
  %s7 = sld [smem:[#allocation0]]
  $region57: #{decoder_forward.19} parent=0
    _
  %s9 = ssub.s32 1, %s7
  %s10 = scalar_select 0, %s9, %s7
  loop: start=0, step=1, limit=4
  $region2: #{decoder_forward.19} parent=0 // loop_pre_header
    _
  $region3: #{decoder_forward.19} parent=0 // loop_header
    %s12 = sphi 0, %s16
    %p13 = scmp.ge.s32.totalorder %s12, 4
    %s22 = sphi 0, %s24
    %s25 = sphi 0, %s22
    %s26 = sphi 0, %s25
    %s42 = sphi 0, %s26
    %s48 = sphi 0, %s50
    %s51 = sphi 0, %s48
    %s52 = sphi 0, %s51
    %s68 = sphi 0, %s52
    %s72 = sphi 0, %s72
    %s74 = sphi 0, %s72
    %s75 = sphi 0, %s74
    %s89 = sphi 0, %s75
    %s93 = sphi 0, %s93
    %s95 = sphi 0, %s93
    %s96 = sphi 0, %s95
    %s110 = sphi 0, %s96
    %s114 = sphi 0, %s114
    %s116 = sphi 0, %s114
    %s117 = sphi 0, %s116
    %s131 = sphi 0, %s117
    %s135 = sphi 0, %s135
    %s137 = sphi 0, %s135
    %s138 = sphi 0, %s137
    %s152 = sphi 0, %s138
    %s158 = sphi 0, %s160
    %s161 = sphi 0, %s158
    %s162 = sphi 0, %s161
    %s178 = sphi 0, %s162
  $region4: #{decoder_forward.19} parent=0 // loop_header_branch
    %15 = sbr.rel (%p13) target = $region8
  $region5: #{decoder_forward.19} parent=0 // loop_body
    %s17 = ssub.s32 %s12, 1
    %s18 = ssub.s32 %s12, 2
    %s19 = sadd.s32 %s12, 1
    %s20 = ssub.s32 %s12, %s19
    %p21 = scmp.eq.s32.totalorder %s20, 0
    %s23 = sadd.s32 %s22, 1
    %s24 = scalar_select %p21, %s22, %s23
    %p27 = pneg %p21
    %p28 = scmp.eq.s32.totalorder %s12, 1
    %p29 = por %p27, %p28
    %p30 = scmp.ne.s32.totalorder %s22, %s25
    %p31 = scmp.eq.s32.totalorder %s12, 0
    %p32 = por %p30, %p31
    %p33 = scmp.ne.s32.totalorder %s22, %s25
    %p34 = scmp.eq.s32.totalorder %s17, 1
    %p35 = por %p33, %p34
    %p36 = scmp.ne.s32.totalorder %s25, %s26
    %p37 = scmp.eq.s32.totalorder %s17, 0
    %p38 = por %p36, %p37
    %p39 = scmp.ne.s32.totalorder %s25, %s26
    %p40 = scmp.eq.s32.totalorder %s18, 1
    %p41 = por %p39, %p40
    %p43 = scmp.ne.s32.totalorder %s26, %s42
    %p44 = scmp.eq.s32.totalorder %s18, 0
    %p45 = por %p43, %p44
    %s46 = ssub.s32 %s12, %s19
    %p47 = scmp.eq.s32.totalorder %s46, 0
    %s49 = sadd.s32 %s48, 1
    %s50 = scalar_select %p47, %s48, %s49
    %p53 = pneg %p47
    %p54 = scmp.eq.s32.totalorder %s12, 1
    %p55 = por %p53, %p54
    %p56 = scmp.ne.s32.totalorder %s48, %s51
    %p57 = scmp.eq.s32.totalorder %s12, 0
    %p58 = por %p56, %p57
    %p59 = scmp.ne.s32.totalorder %s48, %s51
    %p60 = scmp.eq.s32.totalorder %s17, 1
    %p61 = por %p59, %p60
    %p62 = scmp.ne.s32.totalorder %s51, %s52
    %p63 = scmp.eq.s32.totalorder %s17, 0
    %p64 = por %p62, %p63
    %p65 = scmp.ne.s32.totalorder %s51, %s52
    %p66 = scmp.eq.s32.totalorder %s18, 1
    %p67 = por %p65, %p66
    %p69 = scmp.ne.s32.totalorder %s52, %s68
    %p70 = scmp.eq.s32.totalorder %s18, 0
    %p71 = por %p69, %p70
    %s73 = sadd.s32 %s72, 1
    %p76 = scmp.eq.s32.totalorder %s12, 1
    %p77 = scmp.ne.s32.totalorder %s72, %s74
    %p78 = scmp.eq.s32.totalorder %s12, 0
    %p79 = por %p77, %p78
    %p80 = scmp.ne.s32.totalorder %s72, %s74
    %p81 = scmp.eq.s32.totalorder %s17, 1
    %p82 = por %p80, %p81
    %p83 = scmp.ne.s32.totalorder %s74, %s75
    %p84 = scmp.eq.s32.totalorder %s17, 0
    %p85 = por %p83, %p84
    %p86 = scmp.ne.s32.totalorder %s74, %s75
    %p87 = scmp.eq.s32.totalorder %s18, 1
    %p88 = por %p86, %p87
    %p90 = scmp.ne.s32.totalorder %s75, %s89
    %p91 = scmp.eq.s32.totalorder %s18, 0
    %p92 = por %p90, %p91
    %s94 = sadd.s32 %s93, 1
    %p97 = scmp.eq.s32.totalorder %s12, 1
    %p98 = scmp.ne.s32.totalorder %s93, %s95
    %p99 = scmp.eq.s32.totalorder %s12, 0
    %p100 = por %p98, %p99
    %p101 = scmp.ne.s32.totalorder %s93, %s95
    %p102 = scmp.eq.s32.totalorder %s17, 1
    %p103 = por %p101, %p102
    %p104 = scmp.ne.s32.totalorder %s95, %s96
    %p105 = scmp.eq.s32.totalorder %s17, 0
    %p106 = por %p104, %p105
    %p107 = scmp.ne.s32.totalorder %s95, %s96
    %p108 = scmp.eq.s32.totalorder %s18, 1
    %p109 = por %p107, %p108
    %p111 = scmp.ne.s32.totalorder %s96, %s110
    %p112 = scmp.eq.s32.totalorder %s18, 0
    %p113 = por %p111, %p112
    %s115 = sadd.s32 %s114, 1
    %p118 = scmp.eq.s32.totalorder %s12, 1
    %p119 = scmp.ne.s32.totalorder %s114, %s116
    %p120 = scmp.eq.s32.totalorder %s12, 0
    %p121 = por %p119, %p120
    %p122 = scmp.ne.s32.totalorder %s114, %s116
    %p123 = scmp.eq.s32.totalorder %s17, 1
    %p124 = por %p122, %p123
    %p125 = scmp.ne.s32.totalorder %s116, %s117
    %p126 = scmp.eq.s32.totalorder %s17, 0
    %p127 = por %p125, %p126
    %p128 = scmp.ne.s32.totalorder %s116, %s117
    %p129 = scmp.eq.s32.totalorder %s18, 1
    %p130 = por %p128, %p129
    %p132 = scmp.ne.s32.totalorder %s117, %s131
    %p133 = scmp.eq.s32.totalorder %s18, 0
    %p134 = por %p132, %p133
    %s136 = sadd.s32 %s135, 1
    %p139 = scmp.eq.s32.totalorder %s12, 1
    %p140 = scmp.ne.s32.totalorder %s135, %s137
    %p141 = scmp.eq.s32.totalorder %s12, 0
    %p142 = por %p140, %p141
    %p143 = scmp.ne.s32.totalorder %s135, %s137
    %p144 = scmp.eq.s32.totalorder %s17, 1
    %p145 = por %p143, %p144
    %p146 = scmp.ne.s32.totalorder %s137, %s138
    %p147 = scmp.eq.s32.totalorder %s17, 0
    %p148 = por %p146, %p147
    %p149 = scmp.ne.s32.totalorder %s137, %s138
    %p150 = scmp.eq.s32.totalorder %s18, 1
    %p151 = por %p149, %p150
    %p153 = scmp.ne.s32.totalorder %s138, %s152
    %p154 = scmp.eq.s32.totalorder %s18, 0
    %p155 = por %p153, %p154
    %s156 = ssub.s32 %s12, %s19
    %p157 = scmp.eq.s32.totalorder %s156, 0
    %s159 = sadd.s32 %s158, 1
    %s160 = scalar_select %p157, %s158, %s159
    %p163 = pneg %p157
    %p164 = scmp.eq.s32.totalorder %s12, 1
    %p165 = por %p163, %p164
    %p166 = scmp.ne.s32.totalorder %s158, %s161
    %p167 = scmp.eq.s32.totalorder %s12, 0
    %p168 = por %p166, %p167
    %p169 = scmp.ne.s32.totalorder %s158, %s161
    %p170 = scmp.eq.s32.totalorder %s17, 1
    %p171 = por %p169, %p170
    %p172 = scmp.ne.s32.totalorder %s161, %s162
    %p173 = scmp.eq.s32.totalorder %s17, 0
    %p174 = por %p172, %p173
    %p175 = scmp.ne.s32.totalorder %s161, %s162
    %p176 = scmp.eq.s32.totalorder %s18, 1
    %p177 = por %p175, %p176
    %p179 = scmp.ne.s32.totalorder %s162, %s178
    %p180 = scmp.eq.s32.totalorder %s18, 0
    %p181 = por %p179, %p180
    %p182 = scmp.le.s32.totalorder 1, %s12
    %p183 = scmp.lt.s32.totalorder %s12, 3
    %p184 = pnand %p182, %p183
    %p185 = pneg %p184
    // Predicated region
    $region9: #{decoder_forward.19} parent=5 // pred_check
      _
    $region10: #{decoder_forward.19} parent=5 // pred_check_branch
      %187 = sbr.rel (%p184) target = $region12
    $region11: #{decoder_forward.19} parent=5 // pred_region
      %s188 = ssub.s32 %s12, 1
      // Predicated region
      $region13: #{decoder_forward.19} parent=11 // pred_check
        %p189 = pneg %p85
      $region14: #{decoder_forward.19} parent=11 // pred_check_branch
        %191 = sbr.rel (%p189) target = $region16
      $region15: #{decoder_forward.19} parent=11 // pred_region
        _
      $region16: #{decoder_forward.19} parent=11 // pred_fallthru
        _
      // Predicated region
      $region17: #{decoder_forward.19} parent=11 // pred_check
        %p192 = pneg %p106
      $region18: #{decoder_forward.19} parent=11 // pred_check_branch
        %194 = sbr.rel (%p192) target = $region20
      $region19: #{decoder_forward.19} parent=11 // pred_region
        _
      $region20: #{decoder_forward.19} parent=11 // pred_fallthru
        _
      // Predicated region
      $region21: #{decoder_forward.19} parent=11 // pred_check
        %p195 = pneg %p127
      $region22: #{decoder_forward.19} parent=11 // pred_check_branch
        %197 = sbr.rel (%p195) target = $region24
      $region23: #{decoder_forward.19} parent=11 // pred_region
        _
      $region24: #{decoder_forward.19} parent=11 // pred_fallthru
        _
      // Predicated region
      $region25: #{decoder_forward.19} parent=11 // pred_check
        %p198 = pneg %p148
      $region26: #{decoder_forward.19} parent=11 // pred_check_branch
        %200 = sbr.rel (%p198) target = $region28
      $region27: #{decoder_forward.19} parent=11 // pred_region
        _
      $region28: #{decoder_forward.19} parent=11 // pred_fallthru
        _
    $region12: #{decoder_forward.19} parent=5 // pred_fallthru
      _
    %p201 = scmp.lt.s32.totalorder %s12, 2
    // Predicated region
    $region29: #{decoder_forward.19} parent=5 // pred_check
      %p202 = pneg %p201
    $region30: #{decoder_forward.19} parent=5 // pred_check_branch
      %204 = sbr.rel (%p202) target = $region32
    $region31: #{decoder_forward.19} parent=5 // pred_region
      // Predicated region
      $region33: #{decoder_forward.19} parent=31 // pred_check
        %p205 = pneg %p32
      $region34: #{decoder_forward.19} parent=31 // pred_check_branch
        %207 = sbr.rel (%p205) target = $region36
      $region35: #{decoder_forward.19} parent=31 // pred_region
        %p208 = scmp.lt.s32.totalorder %s12, 1
        %s209 = scalar_select %p208, %s12, 1
        %s210 = smul.addr %s209, 8
        %s211 = scalar_lea.vmem %s0, %s210
      $region36: #{decoder_forward.19} parent=31 // pred_fallthru
        _
      // Predicated region
      $region37: #{decoder_forward.19} parent=31 // pred_check
        %p212 = pneg %p58
      $region38: #{decoder_forward.19} parent=31 // pred_check_branch
        %214 = sbr.rel (%p212) target = $region40
      $region39: #{decoder_forward.19} parent=31 // pred_region
        %p215 = scmp.lt.s32.totalorder %s12, 1
        %s216 = scalar_select %p215, %s12, 1
        %s217 = smul.addr %s216, 8
        %s218 = scalar_lea.vmem %s1, %s217
      $region40: #{decoder_forward.19} parent=31 // pred_fallthru
        _
    $region32: #{decoder_forward.19} parent=5 // pred_fallthru
      _
    %p219 = scmp.le.s32.totalorder 1, %s12
    %p220 = scmp.lt.s32.totalorder %s12, 3
    %p221 = pnand %p219, %p220
    %p222 = pneg %p221
    // Predicated region
    $region41: #{decoder_forward.19} parent=5 // pred_check
      _
    $region42: #{decoder_forward.19} parent=5 // pred_check_branch
      %224 = sbr.rel (%p221) target = $region44
    $region43: #{decoder_forward.19} parent=5 // pred_region
      %s225 = ssub.s32 %s12, 1
      %p226 = scmp.lt.s32.totalorder %s17, 1
      %s227 = scalar_select %p226, %s17, 1
      %s228 = smul.addr %s227, 8
      %s229 = scalar_lea.vmem %s0, %s228
      %p230 = pneg %p38
      %p231 = pneg %p35
      %p232 = scmp.lt.s32.totalorder %s17, 1
      %s233 = scalar_select %p232, %s17, 1
      %s234 = smul.addr %s233, 8
      %s235 = scalar_lea.vmem %s1, %s234
      %p236 = pneg %p64
      %p237 = pneg %p61
      %p238 = pneg %p85
      %p239 = pneg %p82
      %p240 = pneg %p106
      %p241 = pneg %p103
      %p242 = pneg %p127
      %p243 = pneg %p124
      %p244 = pneg %p148
      %p245 = pneg %p145
      %p246 = pneg %p174
      %p247 = pneg %p171
      %p248 = scmp.lt.s32.totalorder %s17, 1
      %s249 = scalar_select %p248, %s17, 1
      %s250 = smul.addr %s249, 8
      %s251 = scalar_lea.vmem %s6, %s250
      %p252 = scmp.lt.s32.totalorder %s17, 1
      %s253 = scalar_select %p252, %s17, 1
      %s254 = smul.addr %s253, 8
      %s255 = scalar_lea.vmem %s0, %s254
      %p256 = scmp.lt.s32.totalorder %s17, 1
      %s257 = scalar_select %p256, %s17, 1
      %s258 = smul.addr %s257, 8
      %s259 = scalar_lea.vmem %s1, %s258
      %p260 = scmp.lt.s32.totalorder %s17, 1
      %s261 = scalar_select %p260, %s17, 1
      %s262 = smul.addr %s261, 8
      %s263 = scalar_lea.vmem %s6, %s262
      %v265 = vld [vmem:[%s255] sm:$0xff]
      %v266 = vpack.c.bf16 %v265, %v265
      %v267 = vld [vmem:[%s2] sm:$0xff]
      %v268 = vld [vmem:[%s2 + $0x8] sm:$0xff]
      %v269 = vld [vmem:[%s2 + $0x10] sm:$0xff]
      %v270 = vld [vmem:[%s2 + $0x18] sm:$0xff]
      %v271 = vpack.c.bf16 %v268, %v267
      %v272 = vpack.c.bf16 %v270, %v269
      %v273 = vld [vmem:[%s3] sm:$0x1]
      %v275 = vlaneseq
      %v276 = vshrl.u32 %v275, 7
      %v277 = vsub.s32 0, %v276
      %v278 = vrot.slane %v273, %v277
      %vm280 = vcmask 261120
      %v282 = vsel %vm280, %v266, 0
      %284 = vmatprep.subr.bf16.mxu0 0
      %285 = vmatpush1.bf16.msra.mxu0 %v271
      %286 = vmatprep.subr.bf16.mxu0 0
      %287 = vmatpush1.bf16.msra.mxu0 %v272
      %288 = vmatprep.subr.bf16.mxu0 0
      %289 = vmatpush1.bf16.msra.mxu0 0
      %290 = vmatprep.subr.bf16.mxu0 0
      %291 = vmatpush1.bf16.msra.mxu0 0
      %292 = vmatprep.subr.bf16.mxu0 0
      %293 = vmatpush1.bf16.msra.mxu0 0
      %294 = vmatprep.subr.bf16.mxu0 0
      %295 = vmatpush1.bf16.msra.mxu0 0
      %296 = vmatprep.subr.bf16.mxu0 0
      %297 = vmatpush1.bf16.msra.mxu0 0
      %298 = vmatprep.subr.bf16.mxu0 0
      %299 = vmatpush1.bf16.msra.mxu0 0
      %300 = vmatprep.subr.bf16.mxu0 0
      %301 = vmatpush1.bf16.msra.mxu0 0
      %302 = vmatprep.subr.bf16.mxu0 0
      %303 = vmatpush1.bf16.msra.mxu0 0
      %304 = vmatprep.subr.bf16.mxu0 0
      %305 = vmatpush1.bf16.msra.mxu0 0
      %306 = vmatprep.subr.bf16.mxu0 0
      %307 = vmatpush1.bf16.msra.mxu0 0
      %308 = vmatprep.subr.bf16.mxu0 0
      %309 = vmatpush1.bf16.msra.mxu0 0
      %310 = vmatprep.subr.bf16.mxu0 0
      %311 = vmatpush1.bf16.msra.mxu0 0
      %312 = vmatprep.subr.bf16.mxu0 0
      %313 = vmatpush1.bf16.msra.mxu0 0
      %314 = vmatprep.subr.bf16.mxu0 0
      %315 = vmatpush1.bf16.msra.mxu0 0
      %316 = vmatprep.mubr.bf16.mxu0 0
      %317 = vmatmul.mubr.bf16.gmra.mrb[0].mxu0 %v282
      %v318 = vpop.f32.mrb[0].mxu0
      %v319 = vadd.f32 %v278, %v318
      %v320 = vpop.f32.mrb[0].mxu0
      %v321 = vpop.f32.mrb[0].mxu0
      %v322 = vpop.f32.mrb[0].mxu0
      %323 = vdwg.mxu0
      %v324 = vld [vmem:[%s259] sm:$0xff]
      %v325 = vadd.f32 %v324, %v319
      %v326 = vsel %vm280, %v325, 0.0
      %327 = vadd.xlane.f32.xlu0 %v326
      %v328 = vpop.xlane.xlu0 %327
      %v329 = vrcp.pop 32.0
      %v330 = vmul.f32 %v328, %v329
      %v331 = vsub.f32 %v325, %v330
      %v332 = vmul.f32 %v331, %v331
      %v333 = vsel %vm280, %v332, 0.0
      %334 = vadd.xlane.f32.xlu0 %v333
      %v335 = vpop.xlane.xlu0 %334
      %v336 = vmul.f32 %v335, %v329
      %v337 = vadd.f32 %v336, 1e-05
      %v338 = vrsqrt.pop %v337
      %v339 = vmul.f32 %v331, %v338
      %v340 = vld [vmem:[%s4] sm:$0x1]
      %v342 = vlaneseq
      %v343 = vshrl.u32 %v342, 7
      %v344 = vsub.s32 0, %v343
      %v345 = vrot.slane %v340, %v344
      %v347 = vmul.f32 %v339, %v345
      %v348 = vld [vmem:[%s5] sm:$0x1]
      %v350 = vlaneseq
      %v351 = vshrl.u32 %v350, 7
      %v352 = vsub.s32 0, %v351
      %v353 = vrot.slane %v348, %v352
      %v355 = vadd.f32 %v347, %v353
      %356 = vst.msk [vmem:[%s263] sm:$0xff] %vm280, %v355
      %p357 = scmp.lt.s32.totalorder %s17, 1
      %s358 = scalar_select %p357, %s17, 1
      %s359 = smul.addr %s358, 8
      %s360 = scalar_lea.vmem %s6, %s359
      // Predicated region
      $region45: #{decoder_forward.19} parent=43 // pred_check
        %p361 = pneg %p171
      $region46: #{decoder_forward.19} parent=43 // pred_check_branch
        %363 = sbr.rel (%p361) target = $region48
      $region47: #{decoder_forward.19} parent=43 // pred_region
        _
      $region48: #{decoder_forward.19} parent=43 // pred_fallthru
        _
    $region44: #{decoder_forward.19} parent=5 // pred_fallthru
      _
    %p364 = scmp.le.s32.totalorder 2, %s12
    // Predicated region
    $region49: #{decoder_forward.19} parent=5 // pred_check
      %p365 = pneg %p364
    $region50: #{decoder_forward.19} parent=5 // pred_check_branch
      %367 = sbr.rel (%p365) target = $region52
    $region51: #{decoder_forward.19} parent=5 // pred_region
      %s368 = ssub.s32 %s12, 2
      // Predicated region
      $region53: #{decoder_forward.19} parent=51 // pred_check
        %p369 = pneg %p177
      $region54: #{decoder_forward.19} parent=51 // pred_check_branch
        %371 = sbr.rel (%p369) target = $region56
      $region55: #{decoder_forward.19} parent=51 // pred_region
        %p372 = scmp.lt.s32.totalorder %s18, 1
        %s373 = scalar_select %p372, %s18, 1
        %s374 = smul.addr %s373, 8
        %s375 = scalar_lea.vmem %s6, %s374
      $region56: #{decoder_forward.19} parent=51 // pred_fallthru
        _
    $region52: #{decoder_forward.19} parent=5 // pred_fallthru
      _
  $region6: #{decoder_forward.19} parent=0 // loop_footer
    %s16 = sadd.s32 1, %s12
  $region7: #{decoder_forward.19} parent=0 // loop_footer_branch
    %11 = sbr.rel target = $region3
  $region8: #{decoder_forward.19} parent=0 // loop_exit
    _

// kernel: decoder_forward.17
$region0: #{decoder_forward.17}
  #allocation0 [shape = 'u32[]', space=smem, size = 0x4, offset = 0x4, fixed_abs, tag = 'smem constant byte address 0x4 - core index']
  #allocation1 [shape = 'u32[144,128]{1,0:T(1,128)}', space=vmem, size = 0x12000, scoped, tag = 'internal scratch']
  %s0 = inlined_call_operand.vmem [shape: f32[16,32], index: 0, kind: input, shape index: {}]
  %s1 = inlined_call_operand.vmem [shape: f32[32,96], index: 1, kind: input, shape index: {}]
  %s2 = inlined_call_operand.vmem [shape: f32[1,96], index: 2, kind: input, shape index: {}]
  %s3 = inlined_call_operand.vmem [shape: f32[16,96], index: 3, kind: output, shape index: {}]
  %s4 = sld [smem:[#allocation0]]
  $region45: #{decoder_forward.17} parent=0
    _
  %s6 = ssub.s32 1, %s4
  %s7 = scalar_select 0, %s6, %s4
  loop: start=0, step=1, limit=4
  $region2: #{decoder_forward.17} parent=0 // loop_pre_header
    _
  $region3: #{decoder_forward.17} parent=0 // loop_header
    %s9 = sphi 0, %s13
    %p10 = scmp.ge.s32.totalorder %s9, 4
    %s19 = sphi 0, %s21
    %s22 = sphi 0, %s19
    %s23 = sphi 0, %s22
    %s39 = sphi 0, %s23
    %s43 = sphi 0, %s43
    %s45 = sphi 0, %s43
    %s46 = sphi 0, %s45
    %s60 = sphi 0, %s46
    %s64 = sphi 0, %s64
    %s66 = sphi 0, %s64
    %s67 = sphi 0, %s66
    %s81 = sphi 0, %s67
    %s87 = sphi 0, %s89
    %s90 = sphi 0, %s87
    %s91 = sphi 0, %s90
    %s107 = sphi 0, %s91
  $region4: #{decoder_forward.17} parent=0 // loop_header_branch
    %12 = sbr.rel (%p10) target = $region8
  $region5: #{decoder_forward.17} parent=0 // loop_body
    %s14 = ssub.s32 %s9, 1
    %s15 = ssub.s32 %s9, 2
    %s16 = sadd.s32 %s9, 1
    %s17 = ssub.s32 %s9, %s16
    %p18 = scmp.eq.s32.totalorder %s17, 0
    %s20 = sadd.s32 %s19, 1
    %s21 = scalar_select %p18, %s19, %s20
    %p24 = pneg %p18
    %p25 = scmp.eq.s32.totalorder %s9, 1
    %p26 = por %p24, %p25
    %p27 = scmp.ne.s32.totalorder %s19, %s22
    %p28 = scmp.eq.s32.totalorder %s9, 0
    %p29 = por %p27, %p28
    %p30 = scmp.ne.s32.totalorder %s19, %s22
    %p31 = scmp.eq.s32.totalorder %s14, 1
    %p32 = por %p30, %p31
    %p33 = scmp.ne.s32.totalorder %s22, %s23
    %p34 = scmp.eq.s32.totalorder %s14, 0
    %p35 = por %p33, %p34
    %p36 = scmp.ne.s32.totalorder %s22, %s23
    %p37 = scmp.eq.s32.totalorder %s15, 1
    %p38 = por %p36, %p37
    %p40 = scmp.ne.s32.totalorder %s23, %s39
    %p41 = scmp.eq.s32.totalorder %s15, 0
    %p42 = por %p40, %p41
    %s44 = sadd.s32 %s43, 1
    %p47 = scmp.eq.s32.totalorder %s9, 1
    %p48 = scmp.ne.s32.totalorder %s43, %s45
    %p49 = scmp.eq.s32.totalorder %s9, 0
    %p50 = por %p48, %p49
    %p51 = scmp.ne.s32.totalorder %s43, %s45
    %p52 = scmp.eq.s32.totalorder %s14, 1
    %p53 = por %p51, %p52
    %p54 = scmp.ne.s32.totalorder %s45, %s46
    %p55 = scmp.eq.s32.totalorder %s14, 0
    %p56 = por %p54, %p55
    %p57 = scmp.ne.s32.totalorder %s45, %s46
    %p58 = scmp.eq.s32.totalorder %s15, 1
    %p59 = por %p57, %p58
    %p61 = scmp.ne.s32.totalorder %s46, %s60
    %p62 = scmp.eq.s32.totalorder %s15, 0
    %p63 = por %p61, %p62
    %s65 = sadd.s32 %s64, 1
    %p68 = scmp.eq.s32.totalorder %s9, 1
    %p69 = scmp.ne.s32.totalorder %s64, %s66
    %p70 = scmp.eq.s32.totalorder %s9, 0
    %p71 = por %p69, %p70
    %p72 = scmp.ne.s32.totalorder %s64, %s66
    %p73 = scmp.eq.s32.totalorder %s14, 1
    %p74 = por %p72, %p73
    %p75 = scmp.ne.s32.totalorder %s66, %s67
    %p76 = scmp.eq.s32.totalorder %s14, 0
    %p77 = por %p75, %p76
    %p78 = scmp.ne.s32.totalorder %s66, %s67
    %p79 = scmp.eq.s32.totalorder %s15, 1
    %p80 = por %p78, %p79
    %p82 = scmp.ne.s32.totalorder %s67, %s81
    %p83 = scmp.eq.s32.totalorder %s15, 0
    %p84 = por %p82, %p83
    %s85 = ssub.s32 %s9, %s16
    %p86 = scmp.eq.s32.totalorder %s85, 0
    %s88 = sadd.s32 %s87, 1
    %s89 = scalar_select %p86, %s87, %s88
    %p92 = pneg %p86
    %p93 = scmp.eq.s32.totalorder %s9, 1
    %p94 = por %p92, %p93
    %p95 = scmp.ne.s32.totalorder %s87, %s90
    %p96 = scmp.eq.s32.totalorder %s9, 0
    %p97 = por %p95, %p96
    %p98 = scmp.ne.s32.totalorder %s87, %s90
    %p99 = scmp.eq.s32.totalorder %s14, 1
    %p100 = por %p98, %p99
    %p101 = scmp.ne.s32.totalorder %s90, %s91
    %p102 = scmp.eq.s32.totalorder %s14, 0
    %p103 = por %p101, %p102
    %p104 = scmp.ne.s32.totalorder %s90, %s91
    %p105 = scmp.eq.s32.totalorder %s15, 1
    %p106 = por %p104, %p105
    %p108 = scmp.ne.s32.totalorder %s91, %s107
    %p109 = scmp.eq.s32.totalorder %s15, 0
    %p110 = por %p108, %p109
    %p111 = scmp.le.s32.totalorder 1, %s9
    %p112 = scmp.lt.s32.totalorder %s9, 3
    %p113 = pnand %p111, %p112
    %p114 = pneg %p113
    // Predicated region
    $region9: #{decoder_forward.17} parent=5 // pred_check
      _
    $region10: #{decoder_forward.17} parent=5 // pred_check_branch
      %116 = sbr.rel (%p113) target = $region12
    $region11: #{decoder_forward.17} parent=5 // pred_region
      %s117 = ssub.s32 %s9, 1
      // Predicated region
      $region13: #{decoder_forward.17} parent=11 // pred_check
        %p118 = pneg %p56
      $region14: #{decoder_forward.17} parent=11 // pred_check_branch
        %120 = sbr.rel (%p118) target = $region16
      $region15: #{decoder_forward.17} parent=11 // pred_region
        _
      $region16: #{decoder_forward.17} parent=11 // pred_fallthru
        _
      // Predicated region
      $region17: #{decoder_forward.17} parent=11 // pred_check
        %p121 = pneg %p77
      $region18: #{decoder_forward.17} parent=11 // pred_check_branch
        %123 = sbr.rel (%p121) target = $region20
      $region19: #{decoder_forward.17} parent=11 // pred_region
        _
      $region20: #{decoder_forward.17} parent=11 // pred_fallthru
        _
    $region12: #{decoder_forward.17} parent=5 // pred_fallthru
      _
    %p124 = scmp.lt.s32.totalorder %s9, 2
    // Predicated region
    $region21: #{decoder_forward.17} parent=5 // pred_check
      %p125 = pneg %p124
    $region22: #{decoder_forward.17} parent=5 // pred_check_branch
      %127 = sbr.rel (%p125) target = $region24
    $region23: #{decoder_forward.17} parent=5 // pred_region
      // Predicated region
      $region25: #{decoder_forward.17} parent=23 // pred_check
        %p128 = pneg %p29
      $region26: #{decoder_forward.17} parent=23 // pred_check_branch
        %130 = sbr.rel (%p128) target = $region28
      $region27: #{decoder_forward.17} parent=23 // pred_region
        %p131 = scmp.lt.s32.totalorder %s9, 1
        %s132 = scalar_select %p131, %s9, 1
        %s133 = smul.addr %s132, 8
        %s134 = scalar_lea.vmem %s0, %s133
      $region28: #{decoder_forward.17} parent=23 // pred_fallthru
        _
    $region24: #{decoder_forward.17} parent=5 // pred_fallthru
      _
    %p135 = scmp.le.s32.totalorder 1, %s9
    %p136 = scmp.lt.s32.totalorder %s9, 3
    %p137 = pnand %p135, %p136
    %p138 = pneg %p137
    // Predicated region
    $region29: #{decoder_forward.17} parent=5 // pred_check
      _
    $region30: #{decoder_forward.17} parent=5 // pred_check_branch
      %140 = sbr.rel (%p137) target = $region32
    $region31: #{decoder_forward.17} parent=5 // pred_region
      %s141 = ssub.s32 %s9, 1
      %p142 = scmp.lt.s32.totalorder %s14, 1
      %s143 = scalar_select %p142, %s14, 1
      %s144 = smul.addr %s143, 8
      %s145 = scalar_lea.vmem %s0, %s144
      %p146 = pneg %p35
      %p147 = pneg %p32
      %p148 = pneg %p56
      %p149 = pneg %p53
      %p150 = pneg %p77
      %p151 = pneg %p74
      %p152 = pneg %p103
      %p153 = pneg %p100
      %p154 = scmp.lt.s32.totalorder %s14, 1
      %s155 = scalar_select %p154, %s14, 1
      %s156 = smul.addr %s155, 8
      %s157 = scalar_lea.vmem %s3, %s156
      %p158 = scmp.lt.s32.totalorder %s14, 1
      %s159 = scalar_select %p158, %s14, 1
      %s160 = smul.addr %s159, 8
      %s161 = scalar_lea.vmem %s0, %s160
      %p162 = scmp.lt.s32.totalorder %s14, 1
      %s163 = scalar_select %p162, %s14, 1
      %s164 = smul.addr %s163, 8
      %s165 = scalar_lea.vmem %s3, %s164
      %v167 = vld [vmem:[%s161] sm:$0xff]
      %v168 = vpack.c.bf16 %v167, %v167
      %v169 = vld [vmem:[%s1] sm:$0xff]
      %v170 = vld [vmem:[%s1 + $0x8] sm:$0xff]
      %v171 = vld [vmem:[%s1 + $0x10] sm:$0xff]
      %v172 = vld [vmem:[%s1 + $0x18] sm:$0xff]
      %v173 = vpack.c.bf16 %v170, %v169
      %v174 = vpack.c.bf16 %v172, %v171
      %v175 = vld [vmem:[%s2] sm:$0x1]
      %v177 = vlaneseq
      %v178 = vshrl.u32 %v177, 7
      %v179 = vsub.s32 0, %v178
      %v180 = vrot.slane %v175, %v179
      %vm182 = vcmask 261120
      %v184 = vsel %vm182, %v168, 0
      %186 = vmatprep.subr.bf16.mxu0 0
      %187 = vmatpush1.bf16.msra.mxu0 %v173
      %188 = vmatprep.subr.bf16.mxu0 0
      %189 = vmatpush1.bf16.msra.mxu0 %v174
      %190 = vmatprep.subr.bf16.mxu0 0
      %191 = vmatpush1.bf16.msra.mxu0 0
      %192 = vmatprep.subr.bf16.mxu0 0
      %193 = vmatpush1.bf16.msra.mxu0 0
      %194 = vmatprep.subr.bf16.mxu0 0
      %195 = vmatpush1.bf16.msra.mxu0 0
      %196 = vmatprep.subr.bf16.mxu0 0
      %197 = vmatpush1.bf16.msra.mxu0 0
      %198 = vmatprep.subr.bf16.mxu0 0
      %199 = vmatpush1.bf16.msra.mxu0 0
      %200 = vmatprep.subr.bf16.mxu0 0
      %201 = vmatpush1.bf16.msra.mxu0 0
      %202 = vmatprep.subr.bf16.mxu0 0
      %203 = vmatpush1.bf16.msra.mxu0 0
      %204 = vmatprep.subr.bf16.mxu0 0
      %205 = vmatpush1.bf16.msra.mxu0 0
      %206 = vmatprep.subr.bf16.mxu0 0
      %207 = vmatpush1.bf16.msra.mxu0 0
      %208 = vmatprep.subr.bf16.mxu0 0
      %209 = vmatpush1.bf16.msra.mxu0 0
      %210 = vmatprep.subr.bf16.mxu0 0
      %211 = vmatpush1.bf16.msra.mxu0 0
      %212 = vmatprep.subr.bf16.mxu0 0
      %213 = vmatpush1.bf16.msra.mxu0 0
      %214 = vmatprep.subr.bf16.mxu0 0
      %215 = vmatpush1.bf16.msra.mxu0 0
      %216 = vmatprep.subr.bf16.mxu0 0
      %217 = vmatpush1.bf16.msra.mxu0 0
      %218 = vmatprep.mubr.bf16.mxu0 0
      %219 = vmatmul.mubr.bf16.gmra.mrb[0].mxu0 %v184
      %v220 = vpop.f32.mrb[0].mxu0
      %v221 = vadd.f32 %v180, %v220
      %v222 = vpop.f32.mrb[0].mxu0
      %v223 = vpop.f32.mrb[0].mxu0
      %v224 = vpop.f32.mrb[0].mxu0
      %225 = vdwg.mxu0
      %vm226 = vcmask 785408
      %227 = vst.msk [vmem:[%s165] sm:$0xff] %vm226, %v221
      %p228 = scmp.lt.s32.totalorder %s14, 1
      %s229 = scalar_select %p228, %s14, 1
      %s230 = smul.addr %s229, 8
      %s231 = scalar_lea.vmem %s3, %s230
      // Predicated region
      $region33: #{decoder_forward.17} parent=31 // pred_check
        %p232 = pneg %p100
      $region34: #{decoder_forward.17} parent=31 // pred_check_branch
        %234 = sbr.rel (%p232) target = $region36
      $region35: #{decoder_forward.17} parent=31 // pred_region
        _
      $region36: #{decoder_forward.17} parent=31 // pred_fallthru
        _
    $region32: #{decoder_forward.17} parent=5 // pred_fallthru
      _
    %p235 = scmp.le.s32.totalorder 2, %s9
    // Predicated region
    $region37: #{decoder_forward.17} parent=5 // pred_check
      %p236 = pneg %p235
    $region38: #{decoder_forward.17} parent=5 // pred_check_branch
      %238 = sbr.rel (%p236) target = $region40
    $region39: #{decoder_forward.17} parent=5 // pred_region
      %s239 = ssub.s32 %s9, 2
      // Predicated region
      $region41: #{decoder_forward.17} parent=39 // pred_check
        %p240 = pneg %p106
      $region42: #{decoder_forward.17} parent=39 // pred_check_branch
        %242 = sbr.rel (%p240) target = $region44
      $region43: #{decoder_forward.17} parent=39 // pred_region
        %p243 = scmp.lt.s32.totalorder %s15, 1
        %s244 = scalar_select %p243, %s15, 1
        %s245 = smul.addr %s244, 8
        %s246 = scalar_lea.vmem %s3, %s245
      $region44: #{decoder_forward.17} parent=39 // pred_fallthru
        _
    $region40: #{decoder_forward.17} parent=5 // pred_fallthru
      _
  $region6: #{decoder_forward.17} parent=0 // loop_footer
    %s13 = sadd.s32 1, %s9
  $region7: #{decoder_forward.17} parent=0 // loop_footer_branch
    %8 = sbr.rel target = $region3
  $region8: #{decoder_forward.17} parent=0 // loop_exit
    _

// kernel: decoder_forward.18
$region0: #{decoder_forward.18}
  #allocation0 [shape = 'u32[]', space=smem, size = 0x4, offset = 0x4, fixed_abs, tag = 'smem constant byte address 0x4 - core index']
  #allocation1 [shape = 'u32[144,128]{1,0:T(1,128)}', space=vmem, size = 0x12000, scoped, tag = 'internal scratch']
  %s0 = inlined_call_operand.vmem [shape: f32[2,4,8,8], index: 0, kind: input, shape index: {}]
  %s1 = inlined_call_operand.vmem [shape: f32[2,4,8,8], index: 1, kind: input, shape index: {}]
  %s2 = inlined_call_operand.vmem [shape: f32[2,4,8,8], index: 2, kind: input, shape index: {}]
  %s3 = inlined_call_operand.vmem [shape: f32[1,1,8,8], index: 3, kind: input, shape index: {}]
  %s4 = inlined_call_operand.vmem [shape: f32[2,4,8,8], index: 4, kind: output, shape index: {0}]
  %s5 = inlined_call_operand.hbm [shape: f32[2,4,8,8], index: 5, kind: output, shape index: {1}]
  %6 = xla_tuple %s4, %s5
  %s7 = sld [smem:[#allocation0]]
  $region57: #{decoder_forward.18} parent=0
    _
  %s9 = ssub.s32 1, %s7
  %s10 = scalar_select 0, %s9, %s7
  $region1: #{decoder_forward.18} parent=0
    #allocation2 [shape = 'u8[32768]{0}', space=vmem, size = 0x8000, scoped, tag = 'output window, operand 1']
    #allocation3 [shape = 's32[2]{0}', space=sflag, size = 0x8, scoped, tag = 'scoped memory for decoder_forward.18']
    %11 = vsyncpa [#allocation3], 0
    %s12 = scalar_lea.sflag [#allocation3], 1
    %13 = vsyncpa %s12, 0
    loop: start=0, step=1, limit=4
    $region2: #{decoder_forward.18} parent=1 // loop_pre_header
      _
    $region3: #{decoder_forward.18} parent=1 // loop_header
      %s15 = sphi 0, %s19
      %p16 = scmp.ge.s32.totalorder %s15, 4
      %s25 = sphi 0, %s27
      %s28 = sphi 0, %s25
      %s29 = sphi 0, %s28
      %s45 = sphi 0, %s29
      %s51 = sphi 0, %s53
      %s54 = sphi 0, %s51
      %s55 = sphi 0, %s54
      %s71 = sphi 0, %s55
      %s77 = sphi 0, %s79
      %s80 = sphi 0, %s77
      %s81 = sphi 0, %s80
      %s97 = sphi 0, %s81
      %s101 = sphi 0, %s101
      %s103 = sphi 0, %s101
      %s104 = sphi 0, %s103
      %s118 = sphi 0, %s104
      %s124 = sphi 0, %s126
      %s127 = sphi 0, %s124
      %s128 = sphi 0, %s127
      %s144 = sphi 0, %s128
      %s150 = sphi 0, %s152
      %s153 = sphi 0, %s150
      %s154 = sphi 0, %s153
      %s170 = sphi 0, %s154
    $region4: #{decoder_forward.18} parent=1 // loop_header_branch
      %18 = sbr.rel (%p16) target = $region8
    $region5: #{decoder_forward.18} parent=1 // loop_body
      %s20 = ssub.s32 %s15, 1
      %s21 = ssub.s32 %s15, 2
      %s22 = sadd.s32 %s15, 1
      %s23 = ssub.s32 %s15, %s22
      %p24 = scmp.eq.s32.totalorder %s23, 0
      %s26 = sadd.s32 %s25, 1
      %s27 = scalar_select %p24, %s25, %s26
      %p30 = pneg %p24
      %p31 = scmp.eq.s32.totalorder %s15, 1
      %p32 = por %p30, %p31
      %p33 = scmp.ne.s32.totalorder %s25, %s28
      %p34 = scmp.eq.s32.totalorder %s15, 0
      %p35 = por %p33, %p34
      %p36 = scmp.ne.s32.totalorder %s25, %s28
      %p37 = scmp.eq.s32.totalorder %s20, 1
      %p38 = por %p36, %p37
      %p39 = scmp.ne.s32.totalorder %s28, %s29
      %p40 = scmp.eq.s32.totalorder %s20, 0
      %p41 = por %p39, %p40
      %p42 = scmp.ne.s32.totalorder %s28, %s29
      %p43 = scmp.eq.s32.totalorder %s21, 1
      %p44 = por %p42, %p43
      %p46 = scmp.ne.s32.totalorder %s29, %s45
      %p47 = scmp.eq.s32.totalorder %s21, 0
      %p48 = por %p46, %p47
      %s49 = ssub.s32 %s15, %s22
      %p50 = scmp.eq.s32.totalorder %s49, 0
      %s52 = sadd.s32 %s51, 1
      %s53 = scalar_select %p50, %s51, %s52
      %p56 = pneg %p50
      %p57 = scmp.eq.s32.totalorder %s15, 1
      %p58 = por %p56, %p57
      %p59 = scmp.ne.s32.totalorder %s51, %s54
      %p60 = scmp.eq.s32.totalorder %s15, 0
      %p61 = por %p59, %p60
      %p62 = scmp.ne.s32.totalorder %s51, %s54
      %p63 = scmp.eq.s32.totalorder %s20, 1
      %p64 = por %p62, %p63
      %p65 = scmp.ne.s32.totalorder %s54, %s55
      %p66 = scmp.eq.s32.totalorder %s20, 0
      %p67 = por %p65, %p66
      %p68 = scmp.ne.s32.totalorder %s54, %s55
      %p69 = scmp.eq.s32.totalorder %s21, 1
      %p70 = por %p68, %p69
      %p72 = scmp.ne.s32.totalorder %s55, %s71
      %p73 = scmp.eq.s32.totalorder %s21, 0
      %p74 = por %p72, %p73
      %s75 = ssub.s32 %s15, %s22
      %p76 = scmp.eq.s32.totalorder %s75, 0
      %s78 = sadd.s32 %s77, 1
      %s79 = scalar_select %p76, %s77, %s78
      %p82 = pneg %p76
      %p83 = scmp.eq.s32.totalorder %s15, 1
      %p84 = por %p82, %p83
      %p85 = scmp.ne.s32.totalorder %s77, %s80
      %p86 = scmp.eq.s32.totalorder %s15, 0
      %p87 = por %p85, %p86
      %p88 = scmp.ne.s32.totalorder %s77, %s80
      %p89 = scmp.eq.s32.totalorder %s20, 1
      %p90 = por %p88, %p89
      %p91 = scmp.ne.s32.totalorder %s80, %s81
      %p92 = scmp.eq.s32.totalorder %s20, 0
      %p93 = por %p91, %p92
      %p94 = scmp.ne.s32.totalorder %s80, %s81
      %p95 = scmp.eq.s32.totalorder %s21, 1
      %p96 = por %p94, %p95
      %p98 = scmp.ne.s32.totalorder %s81, %s97
      %p99 = scmp.eq.s32.totalorder %s21, 0
      %p100 = por %p98, %p99
      %s102 = sadd.s32 %s101, 1
      %p105 = scmp.eq.s32.totalorder %s15, 1
      %p106 = scmp.ne.s32.totalorder %s101, %s103
      %p107 = scmp.eq.s32.totalorder %s15, 0
      %p108 = por %p106, %p107
      %p109 = scmp.ne.s32.totalorder %s101, %s103
      %p110 = scmp.eq.s32.totalorder %s20, 1
      %p111 = por %p109, %p110
      %p112 = scmp.ne.s32.totalorder %s103, %s104
      %p113 = scmp.eq.s32.totalorder %s20, 0
      %p114 = por %p112, %p113
      %p115 = scmp.ne.s32.totalorder %s103, %s104
      %p116 = scmp.eq.s32.totalorder %s21, 1
      %p117 = por %p115, %p116
      %p119 = scmp.ne.s32.totalorder %s104, %s118
      %p120 = scmp.eq.s32.totalorder %s21, 0
      %p121 = por %p119, %p120
      %s122 = ssub.s32 %s15, %s22
      %p123 = scmp.eq.s32.totalorder %s122, 0
      %s125 = sadd.s32 %s124, 1
      %s126 = scalar_select %p123, %s124, %s125
      %p129 = pneg %p123
      %p130 = scmp.eq.s32.totalorder %s15, 1
      %p131 = por %p129, %p130
      %p132 = scmp.ne.s32.totalorder %s124, %s127
      %p133 = scmp.eq.s32.totalorder %s15, 0
      %p134 = por %p132, %p133
      %p135 = scmp.ne.s32.totalorder %s124, %s127
      %p136 = scmp.eq.s32.totalorder %s20, 1
      %p137 = por %p135, %p136
      %p138 = scmp.ne.s32.totalorder %s127, %s128
      %p139 = scmp.eq.s32.totalorder %s20, 0
      %p140 = por %p138, %p139
      %p141 = scmp.ne.s32.totalorder %s127, %s128
      %p142 = scmp.eq.s32.totalorder %s21, 1
      %p143 = por %p141, %p142
      %p145 = scmp.ne.s32.totalorder %s128, %s144
      %p146 = scmp.eq.s32.totalorder %s21, 0
      %p147 = por %p145, %p146
      %s148 = ssub.s32 %s15, %s22
      %p149 = scmp.eq.s32.totalorder %s148, 0
      %s151 = sadd.s32 %s150, 1
      %s152 = scalar_select %p149, %s150, %s151
      %p155 = pneg %p149
      %p156 = scmp.eq.s32.totalorder %s15, 1
      %p157 = por %p155, %p156
      %p158 = scmp.ne.s32.totalorder %s150, %s153
      %p159 = scmp.eq.s32.totalorder %s15, 0
      %p160 = por %p158, %p159
      %p161 = scmp.ne.s32.totalorder %s150, %s153
      %p162 = scmp.eq.s32.totalorder %s20, 1
      %p163 = por %p161, %p162
      %p164 = scmp.ne.s32.totalorder %s153, %s154
      %p165 = scmp.eq.s32.totalorder %s20, 0
      %p166 = por %p164, %p165
      %p167 = scmp.ne.s32.totalorder %s153, %s154
      %p168 = scmp.eq.s32.totalorder %s21, 1
      %p169 = por %p167, %p168
      %p171 = scmp.ne.s32.totalorder %s154, %s170
      %p172 = scmp.eq.s32.totalorder %s21, 0
      %p173 = por %p171, %p172
      %p174 = scmp.le.s32.totalorder 1, %s15
      %p175 = scmp.lt.s32.totalorder %s15, 3
      %p176 = pnand %p174, %p175
      %p177 = pneg %p176
      // Predicated region
      $region9: #{decoder_forward.18} parent=5 // pred_check
        _
      $region10: #{decoder_forward.18} parent=5 // pred_check_branch
        %179 = sbr.rel (%p176) target = $region12
      $region11: #{decoder_forward.18} parent=5 // pred_region
        %s180 = ssub.s32 %s15, 1
        // Predicated region
        $region13: #{decoder_forward.18} parent=11 // pred_check
          %p181 = pneg %p114
        $region14: #{decoder_forward.18} parent=11 // pred_check_branch
          %183 = sbr.rel (%p181) target = $region16
        $region15: #{decoder_forward.18} parent=11 // pred_region
          _
        $region16: #{decoder_forward.18} parent=11 // pred_fallthru
          _
      $region12: #{decoder_forward.18} parent=5 // pred_fallthru
        _
      %p184 = scmp.lt.s32.totalorder %s15, 2
      // Predicated region
      $region17: #{decoder_forward.18} parent=5 // pred_check
        %p185 = pneg %p184
      $region18: #{decoder_forward.18} parent=5 // pred_check_branch
        %187 = sbr.rel (%p185) target = $region20
      $region19: #{decoder_forward.18} parent=5 // pred_region
        // Predicated region
        $region21: #{decoder_forward.18} parent=19 // pred_check
          %p188 = pneg %p35
        $region22: #{decoder_forward.18} parent=19 // pred_check_branch
          %190 = sbr.rel (%p188) target = $region24
        $region23: #{decoder_forward.18} parent=19 // pred_region
          %p191 = scmp.lt.s32.totalorder %s15, 1
          %s192 = scalar_select %p191, %s15, 1
          %s193 = smul.addr %s192, 4
          %s194 = smul.addr %s193, 8
          %s195 = scalar_lea.vmem %s0, %s194
        $region24: #{decoder_forward.18} parent=19 // pred_fallthru
          _
        // Predicated region
        $region25: #{decoder_forward.18} parent=19 // pred_check
          %p196 = pneg %p61
        $region26: #{decoder_forward.18} parent=19 // pred_check_branch
          %198 = sbr.rel (%p196) target = $region28
        $region27: #{decoder_forward.18} parent=19 // pred_region
          %p199 = scmp.lt.s32.totalorder %s15, 1
          %s200 = scalar_select %p199, %s15, 1
          %s201 = smul.addr %s200, 4
          %s202 = smul.addr %s201, 8
          %s203 = scalar_lea.vmem %s1, %s202
        $region28: #{decoder_forward.18} parent=19 // pred_fallthru
          _
        // Predicated region
        $region29: #{decoder_forward.18} parent=19 // pred_check
          %p204 = pneg %p87
        $region30: #{decoder_forward.18} parent=19 // pred_check_branch
          %206 = sbr.rel (%p204) target = $region32
        $region31: #{decoder_forward.18} parent=19 // pred_region
          %p207 = scmp.lt.s32.totalorder %s15, 1
          %s208 = scalar_select %p207, %s15, 1
          %s209 = smul.addr %s208, 4
          %s210 = smul.addr %s209, 8
          %s211 = scalar_lea.vmem %s2, %s210
        $region32: #{decoder_forward.18} parent=19 // pred_fallthru
          _
      $region20: #{decoder_forward.18} parent=5 // pred_fallthru
        _
      %p212 = scmp.le.s32.totalorder 1, %s15
      %p213 = scmp.lt.s32.totalorder %s15, 3
      %p214 = pnand %p212, %p213
      %p215 = pneg %p214
      // Predicated region
      $region33: #{decoder_forward.18} parent=5 // pred_check
        _
      $region34: #{decoder_forward.18} parent=5 // pred_check_branch
        %217 = sbr.rel (%p214) target = $region36
      $region35: #{decoder_forward.18} parent=5 // pred_region
        %s218 = ssub.s32 %s15, 1
        %p219 = scmp.lt.s32.totalorder %s20, 1
        %s220 = scalar_select %p219, %s20, 1
        %s221 = smul.addr %s220, 4
        %s222 = smul.addr %s221, 8
        %s223 = scalar_lea.vmem %s0, %s222
        %p224 = pneg %p41
        %p225 = pneg %p38
        %p226 = scmp.lt.s32.totalorder %s20, 1
        %s227 = scalar_select %p226, %s20, 1
        %s228 = smul.addr %s227, 4
        %s229 = smul.addr %s228, 8
        %s230 = scalar_lea.vmem %s1, %s229
        %p231 = pneg %p67
        %p232 = pneg %p64
        %p233 = scmp.lt.s32.totalorder %s20, 1
        %s234 = scalar_select %p233, %s20, 1
        %s235 = smul.addr %s234, 4
        %s236 = smul.addr %s235, 8
        %s237 = scalar_lea.vmem %s2, %s236
        %p238 = pneg %p93
        %p239 = pneg %p90
        %p240 = pneg %p114
        %p241 = pneg %p111
        %p242 = pneg %p140
        %p243 = pneg %p137
        %p244 = scmp.lt.s32.totalorder %s20, 1
        %s245 = scalar_select %p244, %s20, 1
        %s246 = smul.addr %s245, 4
        %s247 = smul.addr %s246, 8
        %s248 = scalar_lea.vmem %s4, %s247
        %p249 = pneg %p166
        %p250 = pneg %p163
        %s251 = sand.u32 %s153, 1
        %s252 = scalar_lea.sflag [#allocation3], %s251
        %s253 = sand.u32 %s153, 1
        %s254 = smul.addr %s253, 32
        %s255 = scalar_lea.vmem [#allocation2], %s254
        %p256 = scmp.lt.s32.totalorder %s20, 1
        %s257 = scalar_select %p256, %s20, 1
        %s258 = smul.addr %s257, 4
        %s259 = smul.addr %s258, 8
        %s260 = scalar_lea.vmem %s0, %s259
        %p261 = scmp.lt.s32.totalorder %s20, 1
        %s262 = scalar_select %p261, %s20, 1
        %s263 = smul.addr %s262, 4
        %s264 = smul.addr %s263, 8
        %s265 = scalar_lea.vmem %s1, %s264
        %p266 = scmp.lt.s32.totalorder %s20, 1
        %s267 = scalar_select %p266, %s20, 1
        %s268 = smul.addr %s267, 4
        %s269 = smul.addr %s268, 8
        %s270 = scalar_lea.vmem %s2, %s269
        %p271 = scmp.lt.s32.totalorder %s20, 1
        %s272 = scalar_select %p271, %s20, 1
        %s273 = smul.addr %s272, 4
        %s274 = smul.addr %s273, 8
        %s275 = scalar_lea.vmem %s4, %s274
        %v277 = vld [vmem:[%s260] sm:$0xff]
        %v278 = vld [vmem:[%s260 + $0x8] sm:$0xff]
        %v279 = vld [vmem:[%s260 + $0x10] sm:$0xff]
        %v280 = vld [vmem:[%s260 + $0x18] sm:$0xff]
        %v281 = vpack.c.bf16 %v277, %v277
        %v282 = vpack.c.bf16 %v278, %v278
        %v283 = vpack.c.bf16 %v279, %v279
        %v284 = vpack.c.bf16 %v280, %v280
        %v285 = vld [vmem:[%s265] sm:$0xff]
        %v286 = vld [vmem:[%s265 + $0x8] sm:$0xff]
        %v287 = vld [vmem:[%s265 + $0x10] sm:$0xff]
        %v288 = vld [vmem:[%s265 + $0x18] sm:$0xff]
        %v289 = vpack.c.bf16 %v285, %v285
        %v290 = vpack.c.bf16 %v286, %v286
        %v291 = vpack.c.bf16 %v287, %v287
        %v292 = vpack.c.bf16 %v288, %v288
        %v293 = vld [vmem:[%s270] sm:$0xff]
        %v294 = vld [vmem:[%s270 + $0x8] sm:$0xff]
        %v295 = vld [vmem:[%s270 + $0x10] sm:$0xff]
        %v296 = vld [vmem:[%s270 + $0x18] sm:$0xff]
        %v297 = vpack.c.bf16 %v293, %v293
        %v298 = vpack.c.bf16 %v294, %v294
        %v299 = vpack.c.bf16 %v295, %v295
        %v300 = vpack.c.bf16 %v296, %v296
        %v301 = vld [vmem:[%s3] sm:$0xff]
        %vm302 = vcmask 64512
        %v304 = vsel %vm302, %v281, 0
        %v307 = vsel %vm302, %v289, 0
        %309 = vmatprep.subr.bf16.mxu0 0
        %310 = vmatpush1.bf16.xpose.msra.mxu0 %v307
        %311 = vmatprep.subr.bf16.mxu0 0
        %312 = vmatpush1.bf16.xpose.msra.mxu0 0
        %313 = vmatprep.subr.bf16.mxu0 0
        %314 = vmatpush1.bf16.xpose.msra.mxu0 0
        %315 = vmatprep.subr.bf16.mxu0 0
        %316 = vmatpush1.bf16.xpose.msra.mxu0 0
        %317 = vmatprep.subr.bf16.mxu0 0
        %318 = vmatpush1.bf16.xpose.msra.mxu0 0
        %319 = vmatprep.subr.bf16.mxu0 0
        %320 = vmatpush1.bf16.xpose.msra.mxu0 0
        %321 = vmatprep.subr.bf16.mxu0 0
        %322 = vmatpush1.bf16.xpose.msra.mxu0 0
        %323 = vmatprep.subr.bf16.mxu0 0
        %324 = vmatpush1.bf16.xpose.msra.mxu0 0
        %325 = vmatprep.subr.bf16.mxu0 0
        %326 = vmatpush1.bf16.xpose.msra.mxu0 0
        %327 = vmatprep.subr.bf16.mxu0 0
        %328 = vmatpush1.bf16.xpose.msra.mxu0 0
        %329 = vmatprep.subr.bf16.mxu0 0
        %330 = vmatpush1.bf16.xpose.msra.mxu0 0
        %331 = vmatprep.subr.bf16.mxu0 0
        %332 = vmatpush1.bf16.xpose.msra.mxu0 0
        %333 = vmatprep.subr.bf16.mxu0 0
        %334 = vmatpush1.bf16.xpose.msra.mxu0 0
        %335 = vmatprep.subr.bf16.mxu0 0
        %336 = vmatpush1.bf16.xpose.msra.mxu0 0
        %337 = vmatprep.subr.bf16.mxu0 0
        %338 = vmatpush1.bf16.xpose.msra.mxu0 0
        %339 = vmatprep.subr.bf16.mxu0 0
        %340 = vmatpush1.bf16.xpose.msra.mxu0 0
        %341 = vmatprep.mubr.bf16.mxu0 0
        %342 = vmatmul.mubr.bf16.gmra.mrb[0].mxu0 %v304
        %v343 = vpop.f32.mrb[0].mxu0
        %v344 = vadd.f32 0.0, %v343
        %v345 = vpop.f32.mrb[0].mxu0
        %v346 = vpop.f32.mrb[0].mxu0
        %v347 = vpop.f32.mrb[0].mxu0
        %348 = vdwg.mxu0
        %v350 = vsel %vm302, %v282, 0
        %v353 = vsel %vm302, %v290, 0
        %355 = vmatprep.subr.bf16.mxu0 0
        %356 = vmatpush1.bf16.xpose.msra.mxu0 %v353
        %357 = vmatprep.subr.bf16.mxu0 0
        %358 = vmatpush1.bf16.xpose.msra.mxu0 0
        %359 = vmatprep.subr.bf16.mxu0 0
        %360 = vmatpush1.bf16.xpose.msra.mxu0 0
        %361 = vmatprep.subr.bf16.mxu0 0
        %362 = vmatpush1.bf16.xpose.msra.mxu0 0
        %363 = vmatprep.subr.bf16.mxu0 0
        %364 = vmatpush1.bf16.xpose.msra.mxu0 0
        %365 = vmatprep.subr.bf16.mxu0 0
        %366 = vmatpush1.bf16.xpose.msra.mxu0 0
        %367 = vmatprep.subr.bf16.mxu0 0
        %368 = vmatpush1.bf16.xpose.msra.mxu0 0
        %369 = vmatprep.subr.bf16.mxu0 0
        %370 = vmatpush1.bf16.xpose.msra.mxu0 0
        %371 = vmatprep.subr.bf16.mxu0 0
        %372 = vmatpush1.bf16.xpose.msra.mxu0 0
        %373 = vmatprep.subr.bf16.mxu0 0
        %374 = vmatpush1.bf16.xpose.msra.mxu0 0
        %375 = vmatprep.subr.bf16.mxu0 0
        %376 = vmatpush1.bf16.xpose.msra.mxu0 0
        %377 = vmatprep.subr.bf16.mxu0 0
        %378 = vmatpush1.bf16.xpose.msra.mxu0 0
        %379 = vmatprep.subr.bf16.mxu0 0
        %380 = vmatpush1.bf16.xpose.msra.mxu0 0
        %381 = vmatprep.subr.bf16.mxu0 0
        %382 = vmatpush1.bf16.xpose.msra.mxu0 0
        %383 = vmatprep.subr.bf16.mxu0 0
        %384 = vmatpush1.bf16.xpose.msra.mxu0 0
        %385 = vmatprep.subr.bf16.mxu0 0
        %386 = vmatpush1.bf16.xpose.msra.mxu0 0
        %387 = vmatprep.mubr.bf16.mxu0 0
        %388 = vmatmul.mubr.bf16.gmra.mrb[0].mxu0 %v350
        %v389 = vpop.f32.mrb[0].mxu0
        %v390 = vadd.f32 0.0, %v389
        %v391 = vpop.f32.mrb[0].mxu0
        %v392 = vpop.f32.mrb[0].mxu0
        %v393 = vpop.f32.mrb[0].mxu0
        %394 = vdwg.mxu0
        %v396 = vsel %vm302, %v283, 0
        %v399 = vsel %vm302, %v291, 0
        %401 = vmatprep.subr.bf16.mxu0 0
        %402 = vmatpush1.bf16.xpose.msra.mxu0 %v399
        %403 = vmatprep.subr.bf16.mxu0 0
        %404 = vmatpush1.bf16.xpose.msra.mxu0 0
        %405 = vmatprep.subr.bf16.mxu0 0
        %406 = vmatpush1.bf16.xpose.msra.mxu0 0
        %407 = vmatprep.subr.bf16.mxu0 0
        %408 = vmatpush1.bf16.xpose.msra.mxu0 0
        %409 = vmatprep.subr.bf16.mxu0 0
        %410 = vmatpush1.bf16.xpose.msra.mxu0 0
        %411 = vmatprep.subr.bf16.mxu0 0
        %412 = vmatpush1.bf16.xpose.msra.mxu0 0
        %413 = vmatprep.subr.bf16.mxu0 0
        %414 = vmatpush1.bf16.xpose.msra.mxu0 0
        %415 = vmatprep.subr.bf16.mxu0 0
        %416 = vmatpush1.bf16.xpose.msra.mxu0 0
        %417 = vmatprep.subr.bf16.mxu0 0
        %418 = vmatpush1.bf16.xpose.msra.mxu0 0
        %419 = vmatprep.subr.bf16.mxu0 0
        %420 = vmatpush1.bf16.xpose.msra.mxu0 0
        %421 = vmatprep.subr.bf16.mxu0 0
        %422 = vmatpush1.bf16.xpose.msra.mxu0 0
        %423 = vmatprep.subr.bf16.mxu0 0
        %424 = vmatpush1.bf16.xpose.msra.mxu0 0
        %425 = vmatprep.subr.bf16.mxu0 0
        %426 = vmatpush1.bf16.xpose.msra.mxu0 0
        %427 = vmatprep.subr.bf16.mxu0 0
        %428 = vmatpush1.bf16.xpose.msra.mxu0 0
        %429 = vmatprep.subr.bf16.mxu0 0
        %430 = vmatpush1.bf16.xpose.msra.mxu0 0
        %431 = vmatprep.subr.bf16.mxu0 0
        %432 = vmatpush1.bf16.xpose.msra.mxu0 0
        %433 = vmatprep.mubr.bf16.mxu0 0
        %434 = vmatmul.mubr.bf16.gmra.mrb[0].mxu0 %v396
        %v435 = vpop.f32.mrb[0].mxu0
        %v436 = vadd.f32 0.0, %v435
        %v437 = vpop.f32.mrb[0].mxu0
        %v438 = vpop.f32.mrb[0].mxu0
        %v439 = vpop.f32.mrb[0].mxu0
        %440 = vdwg.mxu0
        %v442 = vsel %vm302, %v284, 0
        %v445 = vsel %vm302, %v292, 0
        %447 = vmatprep.subr.bf16.mxu0 0
        %448 = vmatpush1.bf16.xpose.msra.mxu0 %v445
        %449 = vmatprep.subr.bf16.mxu0 0
        %450 = vmatpush1.bf16.xpose.msra.mxu0 0
        %451 = vmatprep.subr.bf16.mxu0 0
        %452 = vmatpush1.bf16.xpose.msra.mxu0 0
        %453 = vmatprep.subr.bf16.mxu0 0
        %454 = vmatpush1.bf16.xpose.msra.mxu0 0
        %455 = vmatprep.subr.bf16.mxu0 0
        %456 = vmatpush1.bf16.xpose.msra.mxu0 0
        %457 = vmatprep.subr.bf16.mxu0 0
        %458 = vmatpush1.bf16.xpose.msra.mxu0 0
        %459 = vmatprep.subr.bf16.mxu0 0
        %460 = vmatpush1.bf16.xpose.msra.mxu0 0
        %461 = vmatprep.subr.bf16.mxu0 0
        %462 = vmatpush1.bf16.xpose.msra.mxu0 0
        %463 = vmatprep.subr.bf16.mxu0 0
        %464 = vmatpush1.bf16.xpose.msra.mxu0 0
        %465 = vmatprep.subr.bf16.mxu0 0
        %466 = vmatpush1.bf16.xpose.msra.mxu0 0
        %467 = vmatprep.subr.bf16.mxu0 0
        %468 = vmatpush1.bf16.xpose.msra.mxu0 0
        %469 = vmatprep.subr.bf16.mxu0 0
        %470 = vmatpush1.bf16.xpose.msra.mxu0 0
        %471 = vmatprep.subr.bf16.mxu0 0
        %472 = vmatpush1.bf16.xpose.msra.mxu0 0
        %473 = vmatprep.subr.bf16.mxu0 0
        %474 = vmatpush1.bf16.xpose.msra.mxu0 0
        %475 = vmatprep.subr.bf16.mxu0 0
        %476 = vmatpush1.bf16.xpose.msra.mxu0 0
        %477 = vmatprep.subr.bf16.mxu0 0
        %478 = vmatpush1.bf16.xpose.msra.mxu0 0
        %479 = vmatprep.mubr.bf16.mxu0 0
        %480 = vmatmul.mubr.bf16.gmra.mrb[0].mxu0 %v442
        %v481 = vpop.f32.mrb[0].mxu0
        %v482 = vadd.f32 0.0, %v481
        %v483 = vpop.f32.mrb[0].mxu0
        %v484 = vpop.f32.mrb[0].mxu0
        %v485 = vpop.f32.mrb[0].mxu0
        %486 = vdwg.mxu0
        %v487 = vmul.f32 %v344, 0.35355338
        %v488 = vmul.f32 %v390, 0.35355338
        %v489 = vmul.f32 %v436, 0.35355338
        %v490 = vmul.f32 %v482, 0.35355338
        %vm491 = vcmp.eq.f32.partialorder %v301, 0.0
        %v492 = vsel %vm491, 1, 0
        %vm493 = vcmp.eq.s32.totalorder %v492, 1
        %v494 = vsel %vm493, -1e+09, %v487
        %v495 = vsel %vm493, -1e+09, %v488
        %v496 = vsel %vm493, -1e+09, %v489
        %v497 = vsel %vm493, -1e+09, %v490
        %v498 = vsel %vm302, %v494, -inf
        %499 = vmax.xlane.f32.xlu0 %v498
        %v500 = vpop.xlane.xlu0 %499
        %v501 = vsel %vm302, %v495, -inf
        %502 = vmax.xlane.f32.xlu0 %v501
        %v503 = vpop.xlane.xlu0 %502
        %v504 = vsel %vm302, %v496, -inf
        %505 = vmax.xlane.f32.xlu0 %v504
        %v506 = vpop.xlane.xlu0 %505
        %v507 = vsel %vm302, %v497, -inf
        %508 = vmax.xlane.f32.xlu0 %v507
        %v509 = vpop.xlane.xlu0 %508
        %v510 = vsub.f32 %v494, %v500
        %v511 = vsub.f32 %v495, %v503
        %v512 = vsub.f32 %v496, %v506
        %v513 = vsub.f32 %v497, %v509
        %v514 = vmul.f32 %v510, 1.442695
        %v515 = vpow.pop %v514
        %v516 = vmul.f32 %v511, 1.442695
        %v517 = vpow.pop %v516
        %v518 = vmul.f32 %v512, 1.442695
        %v519 = vpow.pop %v518
        %v520 = vmul.f32 %v513, 1.442695
        %v521 = vpow.pop %v520
        %v522 = vsel %vm302, %v515, 0.0
        %523 = vadd.xlane.f32.xlu0 %v522
        %v524 = vpop.xlane.xlu0 %523
        %v525 = vsel %vm302, %v517, 0.0
        %526 = vadd.xlane.f32.xlu0 %v525
        %v527 = vpop.xlane.xlu0 %526
        %v528 = vsel %vm302, %v519, 0.0
        %529 = vadd.xlane.f32.xlu0 %v528
        %v530 = vpop.xlane.xlu0 %529
        %v531 = vsel %vm302, %v521, 0.0
        %532 = vadd.xlane.f32.xlu0 %v531
        %v533 = vpop.xlane.xlu0 %532
        %v534 = vrcp.pop %v524
        %v535 = vmul.f32 %v515, %v534
        %v536 = vrcp.pop %v527
        %v537 = vmul.f32 %v517, %v536
        %v538 = vrcp.pop %v530
        %v539 = vmul.f32 %v519, %v538
        %v540 = vrcp.pop %v533
        %v541 = vmul.f32 %v521, %v540
        %542 = vst.msk [vmem:[%s255] sm:$0xff] %vm302, %v535
        %543 = vst.msk [vmem:[%s255 + $0x8] sm:$0xff] %vm302, %v537
        %544 = vst.msk [vmem:[%s255 + $0x10] sm:$0xff] %vm302, %v539
        %545 = vst.msk [vmem:[%s255 + $0x18] sm:$0xff] %vm302, %v541
        %v546 = vpack.c.bf16 %v535, %v535
        %v547 = vpack.c.bf16 %v537, %v537
        %v548 = vpack.c.bf16 %v539, %v539
        %v549 = vpack.c.bf16 %v541, %v541
        %v551 = vsel %vm302, %v546, 0
        %vm553 = vcmask 1043456
        %v555 = vsel %vm553, %v297, 0
        %557 = vmatprep.subr.bf16.mxu0 0
        %558 = vmatpush1.bf16.msra.mxu0 %v555
        %559 = vmatprep.subr.bf16.mxu0 0
        %560 = vmatpush1.bf16.msra.mxu0 0
        %561 = vmatprep.subr.bf16.mxu0 0
        %562 = vmatpush1.bf16.msra.mxu0 0
        %563 = vmatprep.subr.bf16.mxu0 0
        %564 = vmatpush1.bf16.msra.mxu0 0
        %565 = vmatprep.subr.bf16.mxu0 0
        %566 = vmatpush1.bf16.msra.mxu0 0
        %567 = vmatprep.subr.bf16.mxu0 0
        %568 = vmatpush1.bf16.msra.mxu0 0
        %569 = vmatprep.subr.bf16.mxu0 0
        %570 = vmatpush1.bf16.msra.mxu0 0
        %571 = vmatprep.subr.bf16.mxu0 0
        %572 = vmatpush1.bf16.msra.mxu0 0
        %573 = vmatprep.subr.bf16.mxu0 0
        %574 = vmatpush1.bf16.msra.mxu0 0
        %575 = vmatprep.subr.bf16.mxu0 0
        %576 = vmatpush1.bf16.msra.mxu0 0
        %577 = vmatprep.subr.bf16.mxu0 0
        %578 = vmatpush1.bf16.msra.mxu0 0
        %579 = vmatprep.subr.bf16.mxu0 0
        %580 = vmatpush1.bf16.msra.mxu0 0
        %581 = vmatprep.subr.bf16.mxu0 0
        %582 = vmatpush1.bf16.msra.mxu0 0
        %583 = vmatprep.subr.bf16.mxu0 0
        %584 = vmatpush1.bf16.msra.mxu0 0
        %585 = vmatprep.subr.bf16.mxu0 0
        %586 = vmatpush1.bf16.msra.mxu0 0
        %587 = vmatprep.subr.bf16.mxu0 0
        %588 = vmatpush1.bf16.msra.mxu0 0
        %589 = vmatprep.mubr.bf16.mxu0 0
        %590 = vmatmul.mubr.bf16.gmra.mrb[0].mxu0 %v551
        %v591 = vpop.f32.mrb[0].mxu0
        %v592 = vadd.f32 0.0, %v591
        %v593 = vpop.f32.mrb[0].mxu0
        %v594 = vpop.f32.mrb[0].mxu0
        %v595 = vpop.f32.mrb[0].mxu0
        %596 = vdwg.mxu0
        %v598 = vsel %vm302, %v547, 0
        %v601 = vsel %vm553, %v298, 0
        %603 = vmatprep.subr.bf16.mxu0 0
        %604 = vmatpush1.bf16.msra.mxu0 %v601
        %605 = vmatprep.subr.bf16.mxu0 0
        %606 = vmatpush1.bf16.msra.mxu0 0
        %607 = vmatprep.subr.bf16.mxu0 0
        %608 = vmatpush1.bf16.msra.mxu0 0
        %609 = vmatprep.subr.bf16.mxu0 0
        %610 = vmatpush1.bf16.msra.mxu0 0
        %611 = vmatprep.subr.bf16.mxu0 0
        %612 = vmatpush1.bf16.msra.mxu0 0
        %613 = vmatprep.subr.bf16.mxu0 0
        %614 = vmatpush1.bf16.msra.mxu0 0
        %615 = vmatprep.subr.bf16.mxu0 0
        %616 = vmatpush1.bf16.msra.mxu0 0
        %617 = vmatprep.subr.bf16.mxu0 0
        %618 = vmatpush1.bf16.msra.mxu0 0
        %619 = vmatprep.subr.bf16.mxu0 0
        %620 = vmatpush1.bf16.msra.mxu0 0
        %621 = vmatprep.subr.bf16.mxu0 0
        %622 = vmatpush1.bf16.msra.mxu0 0
        %623 = vmatprep.subr.bf16.mxu0 0
        %624 = vmatpush1.bf16.msra.mxu0 0
        %625 = vmatprep.subr.bf16.mxu0 0
        %626 = vmatpush1.bf16.msra.mxu0 0
        %627 = vmatprep.subr.bf16.mxu0 0
        %628 = vmatpush1.bf16.msra.mxu0 0
        %629 = vmatprep.subr.bf16.mxu0 0
        %630 = vmatpush1.bf16.msra.mxu0 0
        %631 = vmatprep.subr.bf16.mxu0 0
        %632 = vmatpush1.bf16.msra.mxu0 0
        %633 = vmatprep.subr.bf16.mxu0 0
        %634 = vmatpush1.bf16.msra.mxu0 0
        %635 = vmatprep.mubr.bf16.mxu0 0
        %636 = vmatmul.mubr.bf16.gmra.mrb[0].mxu0 %v598
        %v637 = vpop.f32.mrb[0].mxu0
        %v638 = vadd.f32 0.0, %v637
        %v639 = vpop.f32.mrb[0].mxu0
        %v640 = vpop.f32.mrb[0].mxu0
        %v641 = vpop.f32.mrb[0].mxu0
        %642 = vdwg.mxu0
        %v644 = vsel %vm302, %v548, 0
        %v647 = vsel %vm553, %v299, 0
        %649 = vmatprep.subr.bf16.mxu0 0
        %650 = vmatpush1.bf16.msra.mxu0 %v647
        %651 = vmatprep.subr.bf16.mxu0 0
        %652 = vmatpush1.bf16.msra.mxu0 0
        %653 = vmatprep.subr.bf16.mxu0 0
        %654 = vmatpush1.bf16.msra.mxu0 0
        %655 = vmatprep.subr.bf16.mxu0 0
        %656 = vmatpush1.bf16.msra.mxu0 0
        %657 = vmatprep.subr.bf16.mxu0 0
        %658 = vmatpush1.bf16.msra.mxu0 0
        %659 = vmatprep.subr.bf16.mxu0 0
        %660 = vmatpush1.bf16.msra.mxu0 0
        %661 = vmatprep.subr.bf16.mxu0 0
        %662 = vmatpush1.bf16.msra.mxu0 0
        %663 = vmatprep.subr.bf16.mxu0 0
        %664 = vmatpush1.bf16.msra.mxu0 0
        %665 = vmatprep.subr.bf16.mxu0 0
        %666 = vmatpush1.bf16.msra.mxu0 0
        %667 = vmatprep.subr.bf16.mxu0 0
        %668 = vmatpush1.bf16.msra.mxu0 0
        %669 = vmatprep.subr.bf16.mxu0 0
        %670 = vmatpush1.bf16.msra.mxu0 0
        %671 = vmatprep.subr.bf16.mxu0 0
        %672 = vmatpush1.bf16.msra.mxu0 0
        %673 = vmatprep.subr.bf16.mxu0 0
        %674 = vmatpush1.bf16.msra.mxu0 0
        %675 = vmatprep.subr.bf16.mxu0 0
        %676 = vmatpush1.bf16.msra.mxu0 0
        %677 = vmatprep.subr.bf16.mxu0 0
        %678 = vmatpush1.bf16.msra.mxu0 0
        %679 = vmatprep.subr.bf16.mxu0 0
        %680 = vmatpush1.bf16.msra.mxu0 0
        %681 = vmatprep.mubr.bf16.mxu0 0
        %682 = vmatmul.mubr.bf16.gmra.mrb[0].mxu0 %v644
        %v683 = vpop.f32.mrb[0].mxu0
        %v684 = vadd.f32 0.0, %v683
        %v685 = vpop.f32.mrb[0].mxu0
        %v686 = vpop.f32.mrb[0].mxu0
        %v687 = vpop.f32.mrb[0].mxu0
        %688 = vdwg.mxu0
        %v690 = vsel %vm302, %v549, 0
        %v693 = vsel %vm553, %v300, 0
        %695 = vmatprep.subr.bf16.mxu0 0
        %696 = vmatpush1.bf16.msra.mxu0 %v693
        %697 = vmatprep.subr.bf16.mxu0 0
        %698 = vmatpush1.bf16.msra.mxu0 0
        %699 = vmatprep.subr.bf16.mxu0 0
        %700 = vmatpush1.bf16.msra.mxu0 0
        %701 = vmatprep.subr.bf16.mxu0 0
        %702 = vmatpush1.bf16.msra.mxu0 0
        %703 = vmatprep.subr.bf16.mxu0 0
        %704 = vmatpush1.bf16.msra.mxu0 0
        %705 = vmatprep.subr.bf16.mxu0 0
        %706 = vmatpush1.bf16.msra.mxu0 0
        %707 = vmatprep.subr.bf16.mxu0 0
        %708 = vmatpush1.bf16.msra.mxu0 0
        %709 = vmatprep.subr.bf16.mxu0 0
        %710 = vmatpush1.bf16.msra.mxu0 0
        %711 = vmatprep.subr.bf16.mxu0 0
        %712 = vmatpush1.bf16.msra.mxu0 0
        %713 = vmatprep.subr.bf16.mxu0 0
        %714 = vmatpush1.bf16.msra.mxu0 0
        %715 = vmatprep.subr.bf16.mxu0 0
        %716 = vmatpush1.bf16.msra.mxu0 0
        %717 = vmatprep.subr.bf16.mxu0 0
        %718 = vmatpush1.bf16.msra.mxu0 0
        %719 = vmatprep.subr.bf16.mxu0 0
        %720 = vmatpush1.bf16.msra.mxu0 0
        %721 = vmatprep.subr.bf16.mxu0 0
        %722 = vmatpush1.bf16.msra.mxu0 0
        %723 = vmatprep.subr.bf16.mxu0 0
        %724 = vmatpush1.bf16.msra.mxu0 0
        %725 = vmatprep.subr.bf16.mxu0 0
        %726 = vmatpush1.bf16.msra.mxu0 0
        %727 = vmatprep.mubr.bf16.mxu0 0
        %728 = vmatmul.mubr.bf16.gmra.mrb[0].mxu0 %v690
        %v729 = vpop.f32.mrb[0].mxu0
        %v730 = vadd.f32 0.0, %v729
        %v731 = vpop.f32.mrb[0].mxu0
        %v732 = vpop.f32.mrb[0].mxu0
        %v733 = vpop.f32.mrb[0].mxu0
        %734 = vdwg.mxu0
        %735 = vst.msk [vmem:[%s275] sm:$0xff] %vm302, %v592
        %736 = vst.msk [vmem:[%s275 + $0x8] sm:$0xff] %vm302, %v638
        %737 = vst.msk [vmem:[%s275 + $0x10] sm:$0xff] %vm302, %v684
        %738 = vst.msk [vmem:[%s275 + $0x18] sm:$0xff] %vm302, %v730
        %p739 = scmp.lt.s32.totalorder %s20, 1
        %s740 = scalar_select %p739, %s20, 1
        %s741 = smul.addr %s740, 4
        %s742 = smul.addr %s741, 8
        %s743 = scalar_lea.vmem %s4, %s742
        %s744 = sand.u32 %s153, 1
        %s745 = scalar_lea.sflag [#allocation3], %s744
        %s746 = sand.u32 %s153, 1
        %s747 = smul.addr %s746, 32
        %s748 = scalar_lea.vmem [#allocation2], %s747
        // Predicated region
        $region37: #{decoder_forward.18} parent=35 // pred_check
          %p749 = pneg %p137
        $region38: #{decoder_forward.18} parent=35 // pred_check_branch
          %751 = sbr.rel (%p749) target = $region40
        $region39: #{decoder_forward.18} parent=35 // pred_region
          _
        $region40: #{decoder_forward.18} parent=35 // pred_fallthru
          _
        // Predicated region
        $region41: #{decoder_forward.18} parent=35 // pred_check
          %p752 = pneg %p163
        $region42: #{decoder_forward.18} parent=35 // pred_check_branch
          %754 = sbr.rel (%p752) target = $region44
        $region43: #{decoder_forward.18} parent=35 // pred_region
          %s756 = ssub.s32 512, 512
          %757 = vsyncadd %s745, %s756
          %s758 = smul.addr %s20, 4
          %s759 = smul.addr %s758, 128
          %s760 = scalar_lea.hbm %s5, %s759
          %s761 = sshll.u32 %s748, 4
          %s762 = int_to_ptr.vmem [resolvable:$true] %s761
          %767 = dma.vmem_to_hbm [thread:$0]  %s762, 512, %s760, %s745, 128, 128, 8
        $region44: #{decoder_forward.18} parent=35 // pred_fallthru
          _
      $region36: #{decoder_forward.18} parent=5 // pred_fallthru
        _
      %p768 = scmp.le.s32.totalorder 2, %s15
      // Predicated region
      $region45: #{decoder_forward.18} parent=5 // pred_check
        %p769 = pneg %p768
      $region46: #{decoder_forward.18} parent=5 // pred_check_branch
        %771 = sbr.rel (%p769) target = $region48
      $region47: #{decoder_forward.18} parent=5 // pred_region
        %s772 = ssub.s32 %s15, 2
        // Predicated region
        $region49: #{decoder_forward.18} parent=47 // pred_check
          %p773 = pneg %p143
        $region50: #{decoder_forward.18} parent=47 // pred_check_branch
          %775 = sbr.rel (%p773) target = $region52
        $region51: #{decoder_forward.18} parent=47 // pred_region
          %p776 = scmp.lt.s32.totalorder %s21, 1
          %s777 = scalar_select %p776, %s21, 1
          %s778 = smul.addr %s777, 4
          %s779 = smul.addr %s778, 8
          %s780 = scalar_lea.vmem %s4, %s779
        $region52: #{decoder_forward.18} parent=47 // pred_fallthru
          _
        // Predicated region
        $region53: #{decoder_forward.18} parent=47 // pred_check
          %p781 = pneg %p169
        $region54: #{decoder_forward.18} parent=47 // pred_check_branch
          %783 = sbr.rel (%p781) target = $region56
        $region55: #{decoder_forward.18} parent=47 // pred_region
          %s784 = sand.u32 %s154, 1
          %s785 = scalar_lea.sflag [#allocation3], %s784
          %s786 = sand.u32 %s154, 1
          %s787 = smul.addr %s786, 32
          %s788 = scalar_lea.vmem [#allocation2], %s787
          %789 = dma.done %s785, 512
        $region56: #{decoder_forward.18} parent=47 // pred_fallthru
          _
      $region48: #{decoder_forward.18} parent=5 // pred_fallthru
        _
    $region6: #{decoder_forward.18} parent=1 // loop_footer
      %s19 = sadd.s32 1, %s15
    $region7: #{decoder_forward.18} parent=1 // loop_footer_branch
      %14 = sbr.rel target = $region3
    $region8: #{decoder_forward.18} parent=1 // loop_exit
      _
    %790 = vsyncpa [#allocation3], 1
    %s791 = scalar_lea.sflag [#allocation3], 1
    %792 = vsyncpa %s791, 1

// kernel: decoder_forward.21
$region0: #{decoder_forward.21}
  #allocation0 [shape = 'u32[]', space=smem, size = 0x4, offset = 0x4, fixed_abs, tag = 'smem constant byte address 0x4 - core index']
  #allocation1 [shape = 'u32[144,128]{1,0:T(1,128)}', space=vmem, size = 0x12000, scoped, tag = 'internal scratch']
  %s0 = inlined_call_operand.vmem [shape: f32[16,32], index: 0, kind: input, shape index: {}]
  %s1 = inlined_call_operand.vmem [shape: f32[32,64], index: 1, kind: input, shape index: {}]
  %s2 = inlined_call_operand.vmem [shape: f32[1,64], index: 2, kind: input, shape index: {}]
  %s3 = inlined_call_operand.vmem [shape: f32[16,64], index: 3, kind: output, shape index: {}]
  %s4 = sld [smem:[#allocation0]]
  $region45: #{decoder_forward.21} parent=0
    _
  %s6 = ssub.s32 1, %s4
  %s7 = scalar_select 0, %s6, %s4
  loop: start=0, step=1, limit=4
  $region2: #{decoder_forward.21} parent=0 // loop_pre_header
    _
  $region3: #{decoder_forward.21} parent=0 // loop_header
    %s9 = sphi 0, %s13
    %p10 = scmp.ge.s32.totalorder %s9, 4
    %s19 = sphi 0, %s21
    %s22 = sphi 0, %s19
    %s23 = sphi 0, %s22
    %s39 = sphi 0, %s23
    %s43 = sphi 0, %s43
    %s45 = sphi 0, %s43
    %s46 = sphi 0, %s45
    %s60 = sphi 0, %s46
    %s64 = sphi 0, %s64
    %s66 = sphi 0, %s64
    %s67 = sphi 0, %s66
    %s81 = sphi 0, %s67
    %s87 = sphi 0, %s89
    %s90 = sphi 0, %s87
    %s91 = sphi 0, %s90
    %s107 = sphi 0, %s91
  $region4: #{decoder_forward.21} parent=0 // loop_header_branch
    %12 = sbr.rel (%p10) target = $region8
  $region5: #{decoder_forward.21} parent=0 // loop_body
    %s14 = ssub.s32 %s9, 1
    %s15 = ssub.s32 %s9, 2
    %s16 = sadd.s32 %s9, 1
    %s17 = ssub.s32 %s9, %s16
    %p18 = scmp.eq.s32.totalorder %s17, 0
    %s20 = sadd.s32 %s19, 1
    %s21 = scalar_select %p18, %s19, %s20
    %p24 = pneg %p18
    %p25 = scmp.eq.s32.totalorder %s9, 1
    %p26 = por %p24, %p25
    %p27 = scmp.ne.s32.totalorder %s19, %s22
    %p28 = scmp.eq.s32.totalorder %s9, 0
    %p29 = por %p27, %p28
    %p30 = scmp.ne.s32.totalorder %s19, %s22
    %p31 = scmp.eq.s32.totalorder %s14, 1
    %p32 = por %p30, %p31
    %p33 = scmp.ne.s32.totalorder %s22, %s23
    %p34 = scmp.eq.s32.totalorder %s14, 0
    %p35 = por %p33, %p34
    %p36 = scmp.ne.s32.totalorder %s22, %s23
    %p37 = scmp.eq.s32.totalorder %s15, 1
    %p38 = por %p36, %p37
    %p40 = scmp.ne.s32.totalorder %s23, %s39
    %p41 = scmp.eq.s32.totalorder %s15, 0
    %p42 = por %p40, %p41
    %s44 = sadd.s32 %s43, 1
    %p47 = scmp.eq.s32.totalorder %s9, 1
    %p48 = scmp.ne.s32.totalorder %s43, %s45
    %p49 = scmp.eq.s32.totalorder %s9, 0
    %p50 = por %p48, %p49
    %p51 = scmp.ne.s32.totalorder %s43, %s45
    %p52 = scmp.eq.s32.totalorder %s14, 1
    %p53 = por %p51, %p52
    %p54 = scmp.ne.s32.totalorder %s45, %s46
    %p55 = scmp.eq.s32.totalorder %s14, 0
    %p56 = por %p54, %p55
    %p57 = scmp.ne.s32.totalorder %s45, %s46
    %p58 = scmp.eq.s32.totalorder %s15, 1
    %p59 = por %p57, %p58
    %p61 = scmp.ne.s32.totalorder %s46, %s60
    %p62 = scmp.eq.s32.totalorder %s15, 0
    %p63 = por %p61, %p62
    %s65 = sadd.s32 %s64, 1
    %p68 = scmp.eq.s32.totalorder %s9, 1
    %p69 = scmp.ne.s32.totalorder %s64, %s66
    %p70 = scmp.eq.s32.totalorder %s9, 0
    %p71 = por %p69, %p70
    %p72 = scmp.ne.s32.totalorder %s64, %s66
    %p73 = scmp.eq.s32.totalorder %s14, 1
    %p74 = por %p72, %p73
    %p75 = scmp.ne.s32.totalorder %s66, %s67
    %p76 = scmp.eq.s32.totalorder %s14, 0
    %p77 = por %p75, %p76
    %p78 = scmp.ne.s32.totalorder %s66, %s67
    %p79 = scmp.eq.s32.totalorder %s15, 1
    %p80 = por %p78, %p79
    %p82 = scmp.ne.s32.totalorder %s67, %s81
    %p83 = scmp.eq.s32.totalorder %s15, 0
    %p84 = por %p82, %p83
    %s85 = ssub.s32 %s9, %s16
    %p86 = scmp.eq.s32.totalorder %s85, 0
    %s88 = sadd.s32 %s87, 1
    %s89 = scalar_select %p86, %s87, %s88
    %p92 = pneg %p86
    %p93 = scmp.eq.s32.totalorder %s9, 1
    %p94 = por %p92, %p93
    %p95 = scmp.ne.s32.totalorder %s87, %s90
    %p96 = scmp.eq.s32.totalorder %s9, 0
    %p97 = por %p95, %p96
    %p98 = scmp.ne.s32.totalorder %s87, %s90
    %p99 = scmp.eq.s32.totalorder %s14, 1
    %p100 = por %p98, %p99
    %p101 = scmp.ne.s32.totalorder %s90, %s91
    %p102 = scmp.eq.s32.totalorder %s14, 0
    %p103 = por %p101, %p102
    %p104 = scmp.ne.s32.totalorder %s90, %s91
    %p105 = scmp.eq.s32.totalorder %s15, 1
    %p106 = por %p104, %p105
    %p108 = scmp.ne.s32.totalorder %s91, %s107
    %p109 = scmp.eq.s32.totalorder %s15, 0
    %p110 = por %p108, %p109
    %p111 = scmp.le.s32.totalorder 1, %s9
    %p112 = scmp.lt.s32.totalorder %s9, 3
    %p113 = pnand %p111, %p112
    %p114 = pneg %p113
    // Predicated region
    $region9: #{decoder_forward.21} parent=5 // pred_check
      _
    $region10: #{decoder_forward.21} parent=5 // pred_check_branch
      %116 = sbr.rel (%p113) target = $region12
    $region11: #{decoder_forward.21} parent=5 // pred_region
      %s117 = ssub.s32 %s9, 1
      // Predicated region
      $region13: #{decoder_forward.21} parent=11 // pred_check
        %p118 = pneg %p56
      $region14: #{decoder_forward.21} parent=11 // pred_check_branch
        %120 = sbr.rel (%p118) target = $region16
      $region15: #{decoder_forward.21} parent=11 // pred_region
        _
      $region16: #{decoder_forward.21} parent=11 // pred_fallthru
        _
      // Predicated region
      $region17: #{decoder_forward.21} parent=11 // pred_check
        %p121 = pneg %p77
      $region18: #{decoder_forward.21} parent=11 // pred_check_branch
        %123 = sbr.rel (%p121) target = $region20
      $region19: #{decoder_forward.21} parent=11 // pred_region
        _
      $region20: #{decoder_forward.21} parent=11 // pred_fallthru
        _
    $region12: #{decoder_forward.21} parent=5 // pred_fallthru
      _
    %p124 = scmp.lt.s32.totalorder %s9, 2
    // Predicated region
    $region21: #{decoder_forward.21} parent=5 // pred_check
      %p125 = pneg %p124
    $region22: #{decoder_forward.21} parent=5 // pred_check_branch
      %127 = sbr.rel (%p125) target = $region24
    $region23: #{decoder_forward.21} parent=5 // pred_region
      // Predicated region
      $region25: #{decoder_forward.21} parent=23 // pred_check
        %p128 = pneg %p29
      $region26: #{decoder_forward.21} parent=23 // pred_check_branch
        %130 = sbr.rel (%p128) target = $region28
      $region27: #{decoder_forward.21} parent=23 // pred_region
        %p131 = scmp.lt.s32.totalorder %s9, 1
        %s132 = scalar_select %p131, %s9, 1
        %s133 = smul.addr %s132, 8
        %s134 = scalar_lea.vmem %s0, %s133
      $region28: #{decoder_forward.21} parent=23 // pred_fallthru
        _
    $region24: #{decoder_forward.21} parent=5 // pred_fallthru
      _
    %p135 = scmp.le.s32.totalorder 1, %s9
    %p136 = scmp.lt.s32.totalorder %s9, 3
    %p137 = pnand %p135, %p136
    %p138 = pneg %p137
    // Predicated region
    $region29: #{decoder_forward.21} parent=5 // pred_check
      _
    $region30: #{decoder_forward.21} parent=5 // pred_check_branch
      %140 = sbr.rel (%p137) target = $region32
    $region31: #{decoder_forward.21} parent=5 // pred_region
      %s141 = ssub.s32 %s9, 1
      %p142 = scmp.lt.s32.totalorder %s14, 1
      %s143 = scalar_select %p142, %s14, 1
      %s144 = smul.addr %s143, 8
      %s145 = scalar_lea.vmem %s0, %s144
      %p146 = pneg %p35
      %p147 = pneg %p32
      %p148 = pneg %p56
      %p149 = pneg %p53
      %p150 = pneg %p77
      %p151 = pneg %p74
      %p152 = pneg %p103
      %p153 = pneg %p100
      %p154 = scmp.lt.s32.totalorder %s14, 1
      %s155 = scalar_select %p154, %s14, 1
      %s156 = smul.addr %s155, 8
      %s157 = scalar_lea.vmem %s3, %s156
      %p158 = scmp.lt.s32.totalorder %s14, 1
      %s159 = scalar_select %p158, %s14, 1
      %s160 = smul.addr %s159, 8
      %s161 = scalar_lea.vmem %s0, %s160
      %p162 = scmp.lt.s32.totalorder %s14, 1
      %s163 = scalar_select %p162, %s14, 1
      %s164 = smul.addr %s163, 8
      %s165 = scalar_lea.vmem %s3, %s164
      %v167 = vld [vmem:[%s161] sm:$0xff]
      %v168 = vpack.c.bf16 %v167, %v167
      %v169 = vld [vmem:[%s1] sm:$0xff]
      %v170 = vld [vmem:[%s1 + $0x8] sm:$0xff]
      %v171 = vld [vmem:[%s1 + $0x10] sm:$0xff]
      %v172 = vld [vmem:[%s1 + $0x18] sm:$0xff]
      %v173 = vpack.c.bf16 %v170, %v169
      %v174 = vpack.c.bf16 %v172, %v171
      %v175 = vld [vmem:[%s2] sm:$0x1]
      %v177 = vlaneseq
      %v178 = vshrl.u32 %v177, 7
      %v179 = vsub.s32 0, %v178
      %v180 = vrot.slane %v175, %v179
      %vm182 = vcmask 261120
      %v184 = vsel %vm182, %v168, 0
      %186 = vmatprep.subr.bf16.mxu0 0
      %187 = vmatpush1.bf16.msra.mxu0 %v173
      %188 = vmatprep.subr.bf16.mxu0 0
      %189 = vmatpush1.bf16.msra.mxu0 %v174
      %190 = vmatprep.subr.bf16.mxu0 0
      %191 = vmatpush1.bf16.msra.mxu0 0
      %192 = vmatprep.subr.bf16.mxu0 0
      %193 = vmatpush1.bf16.msra.mxu0 0
      %194 = vmatprep.subr.bf16.mxu0 0
      %195 = vmatpush1.bf16.msra.mxu0 0
      %196 = vmatprep.subr.bf16.mxu0 0
      %197 = vmatpush1.bf16.msra.mxu0 0
      %198 = vmatprep.subr.bf16.mxu0 0
      %199 = vmatpush1.bf16.msra.mxu0 0
      %200 = vmatprep.subr.bf16.mxu0 0
      %201 = vmatpush1.bf16.msra.mxu0 0
      %202 = vmatprep.subr.bf16.mxu0 0
      %203 = vmatpush1.bf16.msra.mxu0 0
      %204 = vmatprep.subr.bf16.mxu0 0
      %205 = vmatpush1.bf16.msra.mxu0 0
      %206 = vmatprep.subr.bf16.mxu0 0
      %207 = vmatpush1.bf16.msra.mxu0 0
      %208 = vmatprep.subr.bf16.mxu0 0
      %209 = vmatpush1.bf16.msra.mxu0 0
      %210 = vmatprep.subr.bf16.mxu0 0
      %211 = vmatpush1.bf16.msra.mxu0 0
      %212 = vmatprep.subr.bf16.mxu0 0
      %213 = vmatpush1.bf16.msra.mxu0 0
      %214 = vmatprep.subr.bf16.mxu0 0
      %215 = vmatpush1.bf16.msra.mxu0 0
      %216 = vmatprep.subr.bf16.mxu0 0
      %217 = vmatpush1.bf16.msra.mxu0 0
      %218 = vmatprep.mubr.bf16.mxu0 0
      %219 = vmatmul.mubr.bf16.gmra.mrb[0].mxu0 %v184
      %v220 = vpop.f32.mrb[0].mxu0
      %v221 = vadd.f32 %v180, %v220
      %v222 = vpop.f32.mrb[0].mxu0
      %v223 = vpop.f32.mrb[0].mxu0
      %v224 = vpop.f32.mrb[0].mxu0
      %225 = vdwg.mxu0
      %vm226 = vcmask 523264
      %227 = vst.msk [vmem:[%s165] sm:$0xff] %vm226, %v221
      %p228 = scmp.lt.s32.totalorder %s14, 1
      %s229 = scalar_select %p228, %s14, 1
      %s230 = smul.addr %s229, 8
      %s231 = scalar_lea.vmem %s3, %s230
      // Predicated region
      $region33: #{decoder_forward.21} parent=31 // pred_check
        %p232 = pneg %p100
      $region34: #{decoder_forward.21} parent=31 // pred_check_branch
        %234 = sbr.rel (%p232) target = $region36
      $region35: #{decoder_forward.21} parent=31 // pred_region
        _
      $region36: #{decoder_forward.21} parent=31 // pred_fallthru
        _
    $region32: #{decoder_forward.21} parent=5 // pred_fallthru
      _
    %p235 = scmp.le.s32.totalorder 2, %s9
    // Predicated region
    $region37: #{decoder_forward.21} parent=5 // pred_check
      %p236 = pneg %p235
    $region38: #{decoder_forward.21} parent=5 // pred_check_branch
      %238 = sbr.rel (%p236) target = $region40
    $region39: #{decoder_forward.21} parent=5 // pred_region
      %s239 = ssub.s32 %s9, 2
      // Predicated region
      $region41: #{decoder_forward.21} parent=39 // pred_check
        %p240 = pneg %p106
      $region42: #{decoder_forward.21} parent=39 // pred_check_branch
        %242 = sbr.rel (%p240) target = $region44
      $region43: #{decoder_forward.21} parent=39 // pred_region
        %p243 = scmp.lt.s32.totalorder %s15, 1
        %s244 = scalar_select %p243, %s15, 1
        %s245 = smul.addr %s244, 8
        %s246 = scalar_lea.vmem %s3, %s245
      $region44: #{decoder_forward.21} parent=39 // pred_fallthru
        _
    $region40: #{decoder_forward.21} parent=5 // pred_fallthru
      _
  $region6: #{decoder_forward.21} parent=0 // loop_footer
    %s13 = sadd.s32 1, %s9
  $region7: #{decoder_forward.21} parent=0 // loop_footer_branch
    %8 = sbr.rel target = $region3
  $region8: #{decoder_forward.21} parent=0 // loop_exit
    _

// kernel: decoder_forward.24
$region0: #{decoder_forward.24}
  #allocation0 [shape = 'u32[]', space=smem, size = 0x4, offset = 0x4, fixed_abs, tag = 'smem constant byte address 0x4 - core index']
  #allocation1 [shape = 'u32[144,128]{1,0:T(1,128)}', space=vmem, size = 0x12000, scoped, tag = 'internal scratch']
  %s0 = inlined_call_operand.vmem [shape: f32[16,32], index: 0, kind: input, shape index: {}]
  %s1 = inlined_call_operand.vmem [shape: f32[32,64], index: 1, kind: input, shape index: {}]
  %s2 = inlined_call_operand.vmem [shape: f32[1,64], index: 2, kind: input, shape index: {}]
  %s3 = inlined_call_operand.vmem [shape: f32[64,32], index: 3, kind: input, shape index: {}]
  %s4 = inlined_call_operand.vmem [shape: f32[1,32], index: 4, kind: input, shape index: {}]
  %s5 = inlined_call_operand.vmem [shape: f32[1,32], index: 5, kind: input, shape index: {}]
  %s6 = inlined_call_operand.vmem [shape: f32[1,32], index: 6, kind: input, shape index: {}]
  %s7 = inlined_call_operand.vmem [shape: f32[16,32], index: 7, kind: output, shape index: {}]
  %s8 = sld [smem:[#allocation0]]
  $region61: #{decoder_forward.24} parent=0
    _
  %s10 = ssub.s32 1, %s8
  %s11 = scalar_select 0, %s10, %s8
  loop: start=0, step=1, limit=4
  $region2: #{decoder_forward.24} parent=0 // loop_pre_header
    _
  $region3: #{decoder_forward.24} parent=0 // loop_header
    %s13 = sphi 0, %s17
    %p14 = scmp.ge.s32.totalorder %s13, 4
    %s23 = sphi 0, %s25
    %s26 = sphi 0, %s23
    %s27 = sphi 0, %s26
    %s43 = sphi 0, %s27
    %s47 = sphi 0, %s47
    %s49 = sphi 0, %s47
    %s50 = sphi 0, %s49
    %s64 = sphi 0, %s50
    %s68 = sphi 0, %s68
    %s70 = sphi 0, %s68
    %s71 = sphi 0, %s70
    %s85 = sphi 0, %s71
    %s89 = sphi 0, %s89
    %s91 = sphi 0, %s89
    %s92 = sphi 0, %s91
    %s106 = sphi 0, %s92
    %s110 = sphi 0, %s110
    %s112 = sphi 0, %s110
    %s113 = sphi 0, %s112
    %s127 = sphi 0, %s113
    %s131 = sphi 0, %s131
    %s133 = sphi 0, %s131
    %s134 = sphi 0, %s133
    %s148 = sphi 0, %s134
    %s152 = sphi 0, %s152
    %s154 = sphi 0, %s152
    %s155 = sphi 0, %s154
    %s169 = sphi 0, %s155
    %s175 = sphi 0, %s177
    %s178 = sphi 0, %s175
    %s179 = sphi 0, %s178
    %s195 = sphi 0, %s179
  $region4: #{decoder_forward.24} parent=0 // loop_header_branch
    %16 = sbr.rel (%p14) target = $region8
  $region5: #{decoder_forward.24} parent=0 // loop_body
    %s18 = ssub.s32 %s13, 1
    %s19 = ssub.s32 %s13, 2
    %s20 = sadd.s32 %s13, 1
    %s21 = ssub.s32 %s13, %s20
    %p22 = scmp.eq.s32.totalorder %s21, 0
    %s24 = sadd.s32 %s23, 1
    %s25 = scalar_select %p22, %s23, %s24
    %p28 = pneg %p22
    %p29 = scmp.eq.s32.totalorder %s13, 1
    %p30 = por %p28, %p29
    %p31 = scmp.ne.s32.totalorder %s23, %s26
    %p32 = scmp.eq.s32.totalorder %s13, 0
    %p33 = por %p31, %p32
    %p34 = scmp.ne.s32.totalorder %s23, %s26
    %p35 = scmp.eq.s32.totalorder %s18, 1
    %p36 = por %p34, %p35
    %p37 = scmp.ne.s32.totalorder %s26, %s27
    %p38 = scmp.eq.s32.totalorder %s18, 0
    %p39 = por %p37, %p38
    %p40 = scmp.ne.s32.totalorder %s26, %s27
    %p41 = scmp.eq.s32.totalorder %s19, 1
    %p42 = por %p40, %p41
    %p44 = scmp.ne.s32.totalorder %s27, %s43
    %p45 = scmp.eq.s32.totalorder %s19, 0
    %p46 = por %p44, %p45
    %s48 = sadd.s32 %s47, 1
    %p51 = scmp.eq.s32.totalorder %s13, 1
    %p52 = scmp.ne.s32.totalorder %s47, %s49
    %p53 = scmp.eq.s32.totalorder %s13, 0
    %p54 = por %p52, %p53
    %p55 = scmp.ne.s32.totalorder %s47, %s49
    %p56 = scmp.eq.s32.totalorder %s18, 1
    %p57 = por %p55, %p56
    %p58 = scmp.ne.s32.totalorder %s49, %s50
    %p59 = scmp.eq.s32.totalorder %s18, 0
    %p60 = por %p58, %p59
    %p61 = scmp.ne.s32.totalorder %s49, %s50
    %p62 = scmp.eq.s32.totalorder %s19, 1
    %p63 = por %p61, %p62
    %p65 = scmp.ne.s32.totalorder %s50, %s64
    %p66 = scmp.eq.s32.totalorder %s19, 0
    %p67 = por %p65, %p66
    %s69 = sadd.s32 %s68, 1
    %p72 = scmp.eq.s32.totalorder %s13, 1
    %p73 = scmp.ne.s32.totalorder %s68, %s70
    %p74 = scmp.eq.s32.totalorder %s13, 0
    %p75 = por %p73, %p74
    %p76 = scmp.ne.s32.totalorder %s68, %s70
    %p77 = scmp.eq.s32.totalorder %s18, 1
    %p78 = por %p76, %p77
    %p79 = scmp.ne.s32.totalorder %s70, %s71
    %p80 = scmp.eq.s32.totalorder %s18, 0
    %p81 = por %p79, %p80
    %p82 = scmp.ne.s32.totalorder %s70, %s71
    %p83 = scmp.eq.s32.totalorder %s19, 1
    %p84 = por %p82, %p83
    %p86 = scmp.ne.s32.totalorder %s71, %s85
    %p87 = scmp.eq.s32.totalorder %s19, 0
    %p88 = por %p86, %p87
    %s90 = sadd.s32 %s89, 1
    %p93 = scmp.eq.s32.totalorder %s13, 1
    %p94 = scmp.ne.s32.totalorder %s89, %s91
    %p95 = scmp.eq.s32.totalorder %s13, 0
    %p96 = por %p94, %p95
    %p97 = scmp.ne.s32.totalorder %s89, %s91
    %p98 = scmp.eq.s32.totalorder %s18, 1
    %p99 = por %p97, %p98
    %p100 = scmp.ne.s32.totalorder %s91, %s92
    %p101 = scmp.eq.s32.totalorder %s18, 0
    %p102 = por %p100, %p101
    %p103 = scmp.ne.s32.totalorder %s91, %s92
    %p104 = scmp.eq.s32.totalorder %s19, 1
    %p105 = por %p103, %p104
    %p107 = scmp.ne.s32.totalorder %s92, %s106
    %p108 = scmp.eq.s32.totalorder %s19, 0
    %p109 = por %p107, %p108
    %s111 = sadd.s32 %s110, 1
    %p114 = scmp.eq.s32.totalorder %s13, 1
    %p115 = scmp.ne.s32.totalorder %s110, %s112
    %p116 = scmp.eq.s32.totalorder %s13, 0
    %p117 = por %p115, %p116
    %p118 = scmp.ne.s32.totalorder %s110, %s112
    %p119 = scmp.eq.s32.totalorder %s18, 1
    %p120 = por %p118, %p119
    %p121 = scmp.ne.s32.totalorder %s112, %s113
    %p122 = scmp.eq.s32.totalorder %s18, 0
    %p123 = por %p121, %p122
    %p124 = scmp.ne.s32.totalorder %s112, %s113
    %p125 = scmp.eq.s32.totalorder %s19, 1
    %p126 = por %p124, %p125
    %p128 = scmp.ne.s32.totalorder %s113, %s127
    %p129 = scmp.eq.s32.totalorder %s19, 0
    %p130 = por %p128, %p129
    %s132 = sadd.s32 %s131, 1
    %p135 = scmp.eq.s32.totalorder %s13, 1
    %p136 = scmp.ne.s32.totalorder %s131, %s133
    %p137 = scmp.eq.s32.totalorder %s13, 0
    %p138 = por %p136, %p137
    %p139 = scmp.ne.s32.totalorder %s131, %s133
    %p140 = scmp.eq.s32.totalorder %s18, 1
    %p141 = por %p139, %p140
    %p142 = scmp.ne.s32.totalorder %s133, %s134
    %p143 = scmp.eq.s32.totalorder %s18, 0
    %p144 = por %p142, %p143
    %p145 = scmp.ne.s32.totalorder %s133, %s134
    %p146 = scmp.eq.s32.totalorder %s19, 1
    %p147 = por %p145, %p146
    %p149 = scmp.ne.s32.totalorder %s134, %s148
    %p150 = scmp.eq.s32.totalorder %s19, 0
    %p151 = por %p149, %p150
    %s153 = sadd.s32 %s152, 1
    %p156 = scmp.eq.s32.totalorder %s13, 1
    %p157 = scmp.ne.s32.totalorder %s152, %s154
    %p158 = scmp.eq.s32.totalorder %s13, 0
    %p159 = por %p157, %p158
    %p160 = scmp.ne.s32.totalorder %s152, %s154
    %p161 = scmp.eq.s32.totalorder %s18, 1
    %p162 = por %p160, %p161
    %p163 = scmp.ne.s32.totalorder %s154, %s155
    %p164 = scmp.eq.s32.totalorder %s18, 0
    %p165 = por %p163, %p164
    %p166 = scmp.ne.s32.totalorder %s154, %s155
    %p167 = scmp.eq.s32.totalorder %s19, 1
    %p168 = por %p166, %p167
    %p170 = scmp.ne.s32.totalorder %s155, %s169
    %p171 = scmp.eq.s32.totalorder %s19, 0
    %p172 = por %p170, %p171
    %s173 = ssub.s32 %s13, %s20
    %p174 = scmp.eq.s32.totalorder %s173, 0
    %s176 = sadd.s32 %s175, 1
    %s177 = scalar_select %p174, %s175, %s176
    %p180 = pneg %p174
    %p181 = scmp.eq.s32.totalorder %s13, 1
    %p182 = por %p180, %p181
    %p183 = scmp.ne.s32.totalorder %s175, %s178
    %p184 = scmp.eq.s32.totalorder %s13, 0
    %p185 = por %p183, %p184
    %p186 = scmp.ne.s32.totalorder %s175, %s178
    %p187 = scmp.eq.s32.totalorder %s18, 1
    %p188 = por %p186, %p187
    %p189 = scmp.ne.s32.totalorder %s178, %s179
    %p190 = scmp.eq.s32.totalorder %s18, 0
    %p191 = por %p189, %p190
    %p192 = scmp.ne.s32.totalorder %s178, %s179
    %p193 = scmp.eq.s32.totalorder %s19, 1
    %p194 = por %p192, %p193
    %p196 = scmp.ne.s32.totalorder %s179, %s195
    %p197 = scmp.eq.s32.totalorder %s19, 0
    %p198 = por %p196, %p197
    %p199 = scmp.le.s32.totalorder 1, %s13
    %p200 = scmp.lt.s32.totalorder %s13, 3
    %p201 = pnand %p199, %p200
    %p202 = pneg %p201
    // Predicated region
    $region9: #{decoder_forward.24} parent=5 // pred_check
      _
    $region10: #{decoder_forward.24} parent=5 // pred_check_branch
      %204 = sbr.rel (%p201) target = $region12
    $region11: #{decoder_forward.24} parent=5 // pred_region
      %s205 = ssub.s32 %s13, 1
      // Predicated region
      $region13: #{decoder_forward.24} parent=11 // pred_check
        %p206 = pneg %p60
      $region14: #{decoder_forward.24} parent=11 // pred_check_branch
        %208 = sbr.rel (%p206) target = $region16
      $region15: #{decoder_forward.24} parent=11 // pred_region
        _
      $region16: #{decoder_forward.24} parent=11 // pred_fallthru
        _
      // Predicated region
      $region17: #{decoder_forward.24} parent=11 // pred_check
        %p209 = pneg %p81
      $region18: #{decoder_forward.24} parent=11 // pred_check_branch
        %211 = sbr.rel (%p209) target = $region20
      $region19: #{decoder_forward.24} parent=11 // pred_region
        _
      $region20: #{decoder_forward.24} parent=11 // pred_fallthru
        _
      // Predicated region
      $region21: #{decoder_forward.24} parent=11 // pred_check
        %p212 = pneg %p102
      $region22: #{decoder_forward.24} parent=11 // pred_check_branch
        %214 = sbr.rel (%p212) target = $region24
      $region23: #{decoder_forward.24} parent=11 // pred_region
        _
      $region24: #{decoder_forward.24} parent=11 // pred_fallthru
        _
      // Predicated region
      $region25: #{decoder_forward.24} parent=11 // pred_check
        %p215 = pneg %p123
      $region26: #{decoder_forward.24} parent=11 // pred_check_branch
        %217 = sbr.rel (%p215) target = $region28
      $region27: #{decoder_forward.24} parent=11 // pred_region
        _
      $region28: #{decoder_forward.24} parent=11 // pred_fallthru
        _
      // Predicated region
      $region29: #{decoder_forward.24} parent=11 // pred_check
        %p218 = pneg %p144
      $region30: #{decoder_forward.24} parent=11 // pred_check_branch
        %220 = sbr.rel (%p218) target = $region32
      $region31: #{decoder_forward.24} parent=11 // pred_region
        _
      $region32: #{decoder_forward.24} parent=11 // pred_fallthru
        _
      // Predicated region
      $region33: #{decoder_forward.24} parent=11 // pred_check
        %p221 = pneg %p165
      $region34: #{decoder_forward.24} parent=11 // pred_check_branch
        %223 = sbr.rel (%p221) target = $region36
      $region35: #{decoder_forward.24} parent=11 // pred_region
        _
      $region36: #{decoder_forward.24} parent=11 // pred_fallthru
        _
    $region12: #{decoder_forward.24} parent=5 // pred_fallthru
      _
    %p224 = scmp.lt.s32.totalorder %s13, 2
    // Predicated region
    $region37: #{decoder_forward.24} parent=5 // pred_check
      %p225 = pneg %p224
    $region38: #{decoder_forward.24} parent=5 // pred_check_branch
      %227 = sbr.rel (%p225) target = $region40
    $region39: #{decoder_forward.24} parent=5 // pred_region
      // Predicated region
      $region41: #{decoder_forward.24} parent=39 // pred_check
        %p228 = pneg %p33
      $region42: #{decoder_forward.24} parent=39 // pred_check_branch
        %230 = sbr.rel (%p228) target = $region44
      $region43: #{decoder_forward.24} parent=39 // pred_region
        %p231 = scmp.lt.s32.totalorder %s13, 1
        %s232 = scalar_select %p231, %s13, 1
        %s233 = smul.addr %s232, 8
        %s234 = scalar_lea.vmem %s0, %s233
      $region44: #{decoder_forward.24} parent=39 // pred_fallthru
        _
    $region40: #{decoder_forward.24} parent=5 // pred_fallthru
      _
    %p235 = scmp.le.s32.totalorder 1, %s13
    %p236 = scmp.lt.s32.totalorder %s13, 3
    %p237 = pnand %p235, %p236
    %p238 = pneg %p237
    // Predicated region
    $region45: #{decoder_forward.24} parent=5 // pred_check
      _
    $region46: #{decoder_forward.24} parent=5 // pred_check_branch
      %240 = sbr.rel (%p237) target = $region48
    $region47: #{decoder_forward.24} parent=5 // pred_region
      %s241 = ssub.s32 %s13, 1
      %p242 = scmp.lt.s32.totalorder %s18, 1
      %s243 = scalar_select %p242, %s18, 1
      %s244 = smul.addr %s243, 8
      %s245 = scalar_lea.vmem %s0, %s244
      %p246 = pneg %p39
      %p247 = pneg %p36
      %p248 = pneg %p60
      %p249 = pneg %p57
      %p250 = pneg %p81
      %p251 = pneg %p78
      %p252 = pneg %p102
      %p253 = pneg %p99
      %p254 = pneg %p123
      %p255 = pneg %p120
      %p256 = pneg %p144
      %p257 = pneg %p141
      %p258 = pneg %p165
      %p259 = pneg %p162
      %p260 = pneg %p191
      %p261 = pneg %p188
      %p262 = scmp.lt.s32.totalorder %s18, 1
      %s263 = scalar_select %p262, %s18, 1
      %s264 = smul.addr %s263, 8
      %s265 = scalar_lea.vmem %s7, %s264
      %p266 = scmp.lt.s32.totalorder %s18, 1
      %s267 = scalar_select %p266, %s18, 1
      %s268 = smul.addr %s267, 8
      %s269 = scalar_lea.vmem %s0, %s268
      %p270 = scmp.lt.s32.totalorder %s18, 1
      %s271 = scalar_select %p270, %s18, 1
      %s272 = smul.addr %s271, 8
      %s273 = scalar_lea.vmem %s7, %s272
      %v275 = vld [vmem:[%s269] sm:$0xff]
      %v276 = vpack.c.bf16 %v275, %v275
      %v277 = vld [vmem:[%s1] sm:$0xff]
      %v278 = vld [vmem:[%s1 + $0x8] sm:$0xff]
      %v279 = vld [vmem:[%s1 + $0x10] sm:$0xff]
      %v280 = vld [vmem:[%s1 + $0x18] sm:$0xff]
      %v281 = vpack.c.bf16 %v278, %v277
      %v282 = vpack.c.bf16 %v280, %v279
      %v283 = vld [vmem:[%s2] sm:$0x1]
      %v285 = vlaneseq
      %v286 = vshrl.u32 %v285, 7
      %v287 = vsub.s32 0, %v286
      %v288 = vrot.slane %v283, %v287
      %vm290 = vcmask 261120
      %v292 = vsel %vm290, %v276, 0
      %294 = vmatprep.subr.bf16.mxu0 0
      %295 = vmatpush1.bf16.msra.mxu0 %v281
      %296 = vmatprep.subr.bf16.mxu0 0
      %297 = vmatpush1.bf16.msra.mxu0 %v282
      %298 = vmatprep.subr.bf16.mxu0 0
      %299 = vmatpush1.bf16.msra.mxu0 0
      %300 = vmatprep.subr.bf16.mxu0 0
      %301 = vmatpush1.bf16.msra.mxu0 0
      %302 = vmatprep.subr.bf16.mxu0 0
      %303 = vmatpush1.bf16.msra.mxu0 0
      %304 = vmatprep.subr.bf16.mxu0 0
      %305 = vmatpush1.bf16.msra.mxu0 0
      %306 = vmatprep.subr.bf16.mxu0 0
      %307 = vmatpush1.bf16.msra.mxu0 0
      %308 = vmatprep.subr.bf16.mxu0 0
      %309 = vmatpush1.bf16.msra.mxu0 0
      %310 = vmatprep.subr.bf16.mxu0 0
      %311 = vmatpush1.bf16.msra.mxu0 0
      %312 = vmatprep.subr.bf16.mxu0 0
      %313 = vmatpush1.bf16.msra.mxu0 0
      %314 = vmatprep.subr.bf16.mxu0 0
      %315 = vmatpush1.bf16.msra.mxu0 0
      %316 = vmatprep.subr.bf16.mxu0 0
      %317 = vmatpush1.bf16.msra.mxu0 0
      %318 = vmatprep.subr.bf16.mxu0 0
      %319 = vmatpush1.bf16.msra.mxu0 0
      %320 = vmatprep.subr.bf16.mxu0 0
      %321 = vmatpush1.bf16.msra.mxu0 0
      %322 = vmatprep.subr.bf16.mxu0 0
      %323 = vmatpush1.bf16.msra.mxu0 0
      %324 = vmatprep.subr.bf16.mxu0 0
      %325 = vmatpush1.bf16.msra.mxu0 0
      %326 = vmatprep.mubr.bf16.mxu0 0
      %327 = vmatmul.mubr.bf16.gmra.mrb[0].mxu0 %v292
      %v328 = vpop.f32.mrb[0].mxu0
      %v329 = vadd.f32 %v288, %v328
      %v330 = vpop.f32.mrb[0].mxu0
      %v331 = vpop.f32.mrb[0].mxu0
      %v332 = vpop.f32.mrb[0].mxu0
      %333 = vdwg.mxu0
      %v334 = vmax.f32 %v329, 0.0
      %v335 = vpack.c.bf16 %v334, %v334
      %v336 = vld [vmem:[%s3] sm:$0xff]
      %v337 = vld [vmem:[%s3 + $0x8] sm:$0xff]
      %v338 = vld [vmem:[%s3 + $0x10] sm:$0xff]
      %v339 = vld [vmem:[%s3 + $0x18] sm:$0xff]
      %v340 = vld [vmem:[%s3 + $0x20] sm:$0xff]
      %v341 = vld [vmem:[%s3 + $0x28] sm:$0xff]
      %v342 = vld [vmem:[%s3 + $0x30] sm:$0xff]
      %v343 = vld [vmem:[%s3 + $0x38] sm:$0xff]
      %v344 = vpack.c.bf16 %v337, %v336
      %v345 = vpack.c.bf16 %v339, %v338
      %v346 = vpack.c.bf16 %v341, %v340
      %v347 = vpack.c.bf16 %v343, %v342
      %v348 = vld [vmem:[%s4] sm:$0x1]
      %v350 = vlaneseq
      %v351 = vshrl.u32 %v350, 7
      %v352 = vsub.s32 0, %v351
      %v353 = vrot.slane %v348, %v352
      %vm355 = vcmask 523264
      %v357 = vsel %vm355, %v335, 0
      %359 = vmatprep.subr.bf16.mxu0 0
      %360 = vmatpush1.bf16.msra.mxu0 %v344
      %361 = vmatprep.subr.bf16.mxu0 0
      %362 = vmatpush1.bf16.msra.mxu0 %v345
      %363 = vmatprep.subr.bf16.mxu0 0
      %364 = vmatpush1.bf16.msra.mxu0 %v346
      %365 = vmatprep.subr.bf16.mxu0 0
      %366 = vmatpush1.bf16.msra.mxu0 %v347
      %367 = vmatprep.subr.bf16.mxu0 0
      %368 = vmatpush1.bf16.msra.mxu0 0
      %369 = vmatprep.subr.bf16.mxu0 0
      %370 = vmatpush1.bf16.msra.mxu0 0
      %371 = vmatprep.subr.bf16.mxu0 0
      %372 = vmatpush1.bf16.msra.mxu0 0
      %373 = vmatprep.subr.bf16.mxu0 0
      %374 = vmatpush1.bf16.msra.mxu0 0
      %375 = vmatprep.subr.bf16.mxu0 0
      %376 = vmatpush1.bf16.msra.mxu0 0
      %377 = vmatprep.subr.bf16.mxu0 0
      %378 = vmatpush1.bf16.msra.mxu0 0
      %379 = vmatprep.subr.bf16.mxu0 0
      %380 = vmatpush1.bf16.msra.mxu0 0
      %381 = vmatprep.subr.bf16.mxu0 0
      %382 = vmatpush1.bf16.msra.mxu0 0
      %383 = vmatprep.subr.bf16.mxu0 0
      %384 = vmatpush1.bf16.msra.mxu0 0
      %385 = vmatprep.subr.bf16.mxu0 0
      %386 = vmatpush1.bf16.msra.mxu0 0
      %387 = vmatprep.subr.bf16.mxu0 0
      %388 = vmatpush1.bf16.msra.mxu0 0
      %389 = vmatprep.subr.bf16.mxu0 0
      %390 = vmatpush1.bf16.msra.mxu0 0
      %391 = vmatprep.mubr.bf16.mxu0 0
      %392 = vmatmul.mubr.bf16.gmra.mrb[0].mxu0 %v357
      %v393 = vpop.f32.mrb[0].mxu0
      %v394 = vadd.f32 %v353, %v393
      %v395 = vpop.f32.mrb[0].mxu0
      %v396 = vpop.f32.mrb[0].mxu0
      %v397 = vpop.f32.mrb[0].mxu0
      %398 = vdwg.mxu0
      %v399 = vadd.f32 %v275, %v394
      %v400 = vsel %vm290, %v399, 0.0
      %401 = vadd.xlane.f32.xlu0 %v400
      %v402 = vpop.xlane.xlu0 %401
      %v403 = vrcp.pop 32.0
      %v404 = vmul.f32 %v402, %v403
      %v405 = vsub.f32 %v399, %v404
      %v406 = vmul.f32 %v405, %v405
      %v407 = vsel %vm290, %v406, 0.0
      %408 = vadd.xlane.f32.xlu0 %v407
      %v409 = vpop.xlane.xlu0 %408
      %v410 = vmul.f32 %v409, %v403
      %v411 = vadd.f32 %v410, 1e-05
      %v412 = vrsqrt.pop %v411
      %v413 = vmul.f32 %v405, %v412
      %v414 = vld [vmem:[%s5] sm:$0x1]
      %v416 = vlaneseq
      %v417 = vshrl.u32 %v416, 7
      %v418 = vsub.s32 0, %v417
      %v419 = vrot.slane %v414, %v418
      %v421 = vmul.f32 %v413, %v419
      %v422 = vld [vmem:[%s6] sm:$0x1]
      %v424 = vlaneseq
      %v425 = vshrl.u32 %v424, 7
      %v426 = vsub.s32 0, %v425
      %v427 = vrot.slane %v422, %v426
      %v429 = vadd.f32 %v421, %v427
      %430 = vst.msk [vmem:[%s273] sm:$0xff] %vm290, %v429
      %p431 = scmp.lt.s32.totalorder %s18, 1
      %s432 = scalar_select %p431, %s18, 1
      %s433 = smul.addr %s432, 8
      %s434 = scalar_lea.vmem %s7, %s433
      // Predicated region
      $region49: #{decoder_forward.24} parent=47 // pred_check
        %p435 = pneg %p188
      $region50: #{decoder_forward.24} parent=47 // pred_check_branch
        %437 = sbr.rel (%p435) target = $region52
      $region51: #{decoder_forward.24} parent=47 // pred_region
        _
      $region52: #{decoder_forward.24} parent=47 // pred_fallthru
        _
    $region48: #{decoder_forward.24} parent=5 // pred_fallthru
      _
    %p438 = scmp.le.s32.totalorder 2, %s13
    // Predicated region
    $region53: #{decoder_forward.24} parent=5 // pred_check
      %p439 = pneg %p438
    $region54: #{decoder_forward.24} parent=5 // pred_check_branch
      %441 = sbr.rel (%p439) target = $region56
    $region55: #{decoder_forward.24} parent=5 // pred_region
      %s442 = ssub.s32 %s13, 2
      // Predicated region
      $region57: #{decoder_forward.24} parent=55 // pred_check
        %p443 = pneg %p194
      $region58: #{decoder_forward.24} parent=55 // pred_check_branch
        %445 = sbr.rel (%p443) target = $region60
      $region59: #{decoder_forward.24} parent=55 // pred_region
        %p446 = scmp.lt.s32.totalorder %s19, 1
        %s447 = scalar_select %p446, %s19, 1
        %s448 = smul.addr %s447, 8
        %s449 = scalar_lea.vmem %s7, %s448
      $region60: #{decoder_forward.24} parent=55 // pred_fallthru
        _
    $region56: #{decoder_forward.24} parent=5 // pred_fallthru
      _
  $region6: #{decoder_forward.24} parent=0 // loop_footer
    %s17 = sadd.s32 1, %s13
  $region7: #{decoder_forward.24} parent=0 // loop_footer_branch
    %12 = sbr.rel target = $region3
  $region8: #{decoder_forward.24} parent=0 // loop_exit
    _

// kernel: decoder_forward.22
$region0: #{decoder_forward.22}
  #allocation0 [shape = 'u32[]', space=smem, size = 0x4, offset = 0x4, fixed_abs, tag = 'smem constant byte address 0x4 - core index']
  #allocation1 [shape = 'u32[144,128]{1,0:T(1,128)}', space=vmem, size = 0x12000, scoped, tag = 'internal scratch']
  %s0 = inlined_call_operand.vmem [shape: f32[2,4,8,8], index: 0, kind: input, shape index: {}]
  %s1 = inlined_call_operand.vmem [shape: f32[2,4,8,8], index: 1, kind: input, shape index: {}]
  %s2 = inlined_call_operand.vmem [shape: f32[2,4,8,8], index: 2, kind: input, shape index: {}]
  %s3 = inlined_call_operand.vmem [shape: f32[2,1,1,8], index: 3, kind: input, shape index: {}]
  %s4 = inlined_call_operand.vmem [shape: f32[2,4,8,8], index: 4, kind: output, shape index: {0}]
  %s5 = inlined_call_operand.hbm [shape: f32[2,4,8,8], index: 5, kind: output, shape index: {1}]
  %6 = xla_tuple %s4, %s5
  %s7 = sld [smem:[#allocation0]]
  $region57: #{decoder_forward.22} parent=0
    _
  %s9 = ssub.s32 1, %s7
  %s10 = scalar_select 0, %s9, %s7
  $region1: #{decoder_forward.22} parent=0
    #allocation2 [shape = 'u8[32768]{0}', space=vmem, size = 0x8000, scoped, tag = 'output window, operand 1']
    #allocation3 [shape = 's32[2]{0}', space=sflag, size = 0x8, scoped, tag = 'scoped memory for decoder_forward.22']
    %11 = vsyncpa [#allocation3], 0
    %s12 = scalar_lea.sflag [#allocation3], 1
    %13 = vsyncpa %s12, 0
    loop: start=0, step=1, limit=4
    $region2: #{decoder_forward.22} parent=1 // loop_pre_header
      _
    $region3: #{decoder_forward.22} parent=1 // loop_header
      %s15 = sphi 0, %s19
      %p16 = scmp.ge.s32.totalorder %s15, 4
      %s25 = sphi 0, %s27
      %s28 = sphi 0, %s25
      %s29 = sphi 0, %s28
      %s45 = sphi 0, %s29
      %s51 = sphi 0, %s53
      %s54 = sphi 0, %s51
      %s55 = sphi 0, %s54
      %s71 = sphi 0, %s55
      %s77 = sphi 0, %s79
      %s80 = sphi 0, %s77
      %s81 = sphi 0, %s80
      %s97 = sphi 0, %s81
      %s103 = sphi 0, %s105
      %s106 = sphi 0, %s103
      %s107 = sphi 0, %s106
      %s123 = sphi 0, %s107
      %s129 = sphi 0, %s131
      %s132 = sphi 0, %s129
      %s133 = sphi 0, %s132
      %s149 = sphi 0, %s133
      %s155 = sphi 0, %s157
      %s158 = sphi 0, %s155
      %s159 = sphi 0, %s158
      %s175 = sphi 0, %s159
    $region4: #{decoder_forward.22} parent=1 // loop_header_branch
      %18 = sbr.rel (%p16) target = $region8
    $region5: #{decoder_forward.22} parent=1 // loop_body
      %s20 = ssub.s32 %s15, 1
      %s21 = ssub.s32 %s15, 2
      %s22 = sadd.s32 %s15, 1
      %s23 = ssub.s32 %s15, %s22
      %p24 = scmp.eq.s32.totalorder %s23, 0
      %s26 = sadd.s32 %s25, 1
      %s27 = scalar_select %p24, %s25, %s26
      %p30 = pneg %p24
      %p31 = scmp.eq.s32.totalorder %s15, 1
      %p32 = por %p30, %p31
      %p33 = scmp.ne.s32.totalorder %s25, %s28
      %p34 = scmp.eq.s32.totalorder %s15, 0
      %p35 = por %p33, %p34
      %p36 = scmp.ne.s32.totalorder %s25, %s28
      %p37 = scmp.eq.s32.totalorder %s20, 1
      %p38 = por %p36, %p37
      %p39 = scmp.ne.s32.totalorder %s28, %s29
      %p40 = scmp.eq.s32.totalorder %s20, 0
      %p41 = por %p39, %p40
      %p42 = scmp.ne.s32.totalorder %s28, %s29
      %p43 = scmp.eq.s32.totalorder %s21, 1
      %p44 = por %p42, %p43
      %p46 = scmp.ne.s32.totalorder %s29, %s45
      %p47 = scmp.eq.s32.totalorder %s21, 0
      %p48 = por %p46, %p47
      %s49 = ssub.s32 %s15, %s22
      %p50 = scmp.eq.s32.totalorder %s49, 0
      %s52 = sadd.s32 %s51, 1
      %s53 = scalar_select %p50, %s51, %s52
      %p56 = pneg %p50
      %p57 = scmp.eq.s32.totalorder %s15, 1
      %p58 = por %p56, %p57
      %p59 = scmp.ne.s32.totalorder %s51, %s54
      %p60 = scmp.eq.s32.totalorder %s15, 0
      %p61 = por %p59, %p60
      %p62 = scmp.ne.s32.totalorder %s51, %s54
      %p63 = scmp.eq.s32.totalorder %s20, 1
      %p64 = por %p62, %p63
      %p65 = scmp.ne.s32.totalorder %s54, %s55
      %p66 = scmp.eq.s32.totalorder %s20, 0
      %p67 = por %p65, %p66
      %p68 = scmp.ne.s32.totalorder %s54, %s55
      %p69 = scmp.eq.s32.totalorder %s21, 1
      %p70 = por %p68, %p69
      %p72 = scmp.ne.s32.totalorder %s55, %s71
      %p73 = scmp.eq.s32.totalorder %s21, 0
      %p74 = por %p72, %p73
      %s75 = ssub.s32 %s15, %s22
      %p76 = scmp.eq.s32.totalorder %s75, 0
      %s78 = sadd.s32 %s77, 1
      %s79 = scalar_select %p76, %s77, %s78
      %p82 = pneg %p76
      %p83 = scmp.eq.s32.totalorder %s15, 1
      %p84 = por %p82, %p83
      %p85 = scmp.ne.s32.totalorder %s77, %s80
      %p86 = scmp.eq.s32.totalorder %s15, 0
      %p87 = por %p85, %p86
      %p88 = scmp.ne.s32.totalorder %s77, %s80
      %p89 = scmp.eq.s32.totalorder %s20, 1
      %p90 = por %p88, %p89
      %p91 = scmp.ne.s32.totalorder %s80, %s81
      %p92 = scmp.eq.s32.totalorder %s20, 0
      %p93 = por %p91, %p92
      %p94 = scmp.ne.s32.totalorder %s80, %s81
      %p95 = scmp.eq.s32.totalorder %s21, 1
      %p96 = por %p94, %p95
      %p98 = scmp.ne.s32.totalorder %s81, %s97
      %p99 = scmp.eq.s32.totalorder %s21, 0
      %p100 = por %p98, %p99
      %s101 = ssub.s32 %s15, %s22
      %p102 = scmp.eq.s32.totalorder %s101, 0
      %s104 = sadd.s32 %s103, 1
      %s105 = scalar_select %p102, %s103, %s104
      %p108 = pneg %p102
      %p109 = scmp.eq.s32.totalorder %s15, 1
      %p110 = por %p108, %p109
      %p111 = scmp.ne.s32.totalorder %s103, %s106
      %p112 = scmp.eq.s32.totalorder %s15, 0
      %p113 = por %p111, %p112
      %p114 = scmp.ne.s32.totalorder %s103, %s106
      %p115 = scmp.eq.s32.totalorder %s20, 1
      %p116 = por %p114, %p115
      %p117 = scmp.ne.s32.totalorder %s106, %s107
      %p118 = scmp.eq.s32.totalorder %s20, 0
      %p119 = por %p117, %p118
      %p120 = scmp.ne.s32.totalorder %s106, %s107
      %p121 = scmp.eq.s32.totalorder %s21, 1
      %p122 = por %p120, %p121
      %p124 = scmp.ne.s32.totalorder %s107, %s123
      %p125 = scmp.eq.s32.totalorder %s21, 0
      %p126 = por %p124, %p125
      %s127 = ssub.s32 %s15, %s22
      %p128 = scmp.eq.s32.totalorder %s127, 0
      %s130 = sadd.s32 %s129, 1
      %s131 = scalar_select %p128, %s129, %s130
      %p134 = pneg %p128
      %p135 = scmp.eq.s32.totalorder %s15, 1
      %p136 = por %p134, %p135
      %p137 = scmp.ne.s32.totalorder %s129, %s132
      %p138 = scmp.eq.s32.totalorder %s15, 0
      %p139 = por %p137, %p138
      %p140 = scmp.ne.s32.totalorder %s129, %s132
      %p141 = scmp.eq.s32.totalorder %s20, 1
      %p142 = por %p140, %p141
      %p143 = scmp.ne.s32.totalorder %s132, %s133
      %p144 = scmp.eq.s32.totalorder %s20, 0
      %p145 = por %p143, %p144
      %p146 = scmp.ne.s32.totalorder %s132, %s133
      %p147 = scmp.eq.s32.totalorder %s21, 1
      %p148 = por %p146, %p147
      %p150 = scmp.ne.s32.totalorder %s133, %s149
      %p151 = scmp.eq.s32.totalorder %s21, 0
      %p152 = por %p150, %p151
      %s153 = ssub.s32 %s15, %s22
      %p154 = scmp.eq.s32.totalorder %s153, 0
      %s156 = sadd.s32 %s155, 1
      %s157 = scalar_select %p154, %s155, %s156
      %p160 = pneg %p154
      %p161 = scmp.eq.s32.totalorder %s15, 1
      %p162 = por %p160, %p161
      %p163 = scmp.ne.s32.totalorder %s155, %s158
      %p164 = scmp.eq.s32.totalorder %s15, 0
      %p165 = por %p163, %p164
      %p166 = scmp.ne.s32.totalorder %s155, %s158
      %p167 = scmp.eq.s32.totalorder %s20, 1
      %p168 = por %p166, %p167
      %p169 = scmp.ne.s32.totalorder %s158, %s159
      %p170 = scmp.eq.s32.totalorder %s20, 0
      %p171 = por %p169, %p170
      %p172 = scmp.ne.s32.totalorder %s158, %s159
      %p173 = scmp.eq.s32.totalorder %s21, 1
      %p174 = por %p172, %p173
      %p176 = scmp.ne.s32.totalorder %s159, %s175
      %p177 = scmp.eq.s32.totalorder %s21, 0
      %p178 = por %p176, %p177
      %p179 = scmp.le.s32.totalorder 1, %s15
      %p180 = scmp.lt.s32.totalorder %s15, 3
      %p181 = pnand %p179, %p180
      %p182 = pneg %p181
      // Predicated region
      $region9: #{decoder_forward.22} parent=5 // pred_check
        _
      $region10: #{decoder_forward.22} parent=5 // pred_check_branch
        %184 = sbr.rel (%p181) target = $region12
      $region11: #{decoder_forward.22} parent=5 // pred_region
        %s185 = ssub.s32 %s15, 1
      $region12: #{decoder_forward.22} parent=5 // pred_fallthru
        _
      %p186 = scmp.lt.s32.totalorder %s15, 2
      // Predicated region
      $region13: #{decoder_forward.22} parent=5 // pred_check
        %p187 = pneg %p186
      $region14: #{decoder_forward.22} parent=5 // pred_check_branch
        %189 = sbr.rel (%p187) target = $region16
      $region15: #{decoder_forward.22} parent=5 // pred_region
        // Predicated region
        $region17: #{decoder_forward.22} parent=15 // pred_check
          %p190 = pneg %p35
        $region18: #{decoder_forward.22} parent=15 // pred_check_branch
          %192 = sbr.rel (%p190) target = $region20
        $region19: #{decoder_forward.22} parent=15 // pred_region
          %p193 = scmp.lt.s32.totalorder %s15, 1
          %s194 = scalar_select %p193, %s15, 1
          %s195 = smul.addr %s194, 4
          %s196 = smul.addr %s195, 8
          %s197 = scalar_lea.vmem %s0, %s196
        $region20: #{decoder_forward.22} parent=15 // pred_fallthru
          _
        // Predicated region
        $region21: #{decoder_forward.22} parent=15 // pred_check
          %p198 = pneg %p61
        $region22: #{decoder_forward.22} parent=15 // pred_check_branch
          %200 = sbr.rel (%p198) target = $region24
        $region23: #{decoder_forward.22} parent=15 // pred_region
          %p201 = scmp.lt.s32.totalorder %s15, 1
          %s202 = scalar_select %p201, %s15, 1
          %s203 = smul.addr %s202, 4
          %s204 = smul.addr %s203, 8
          %s205 = scalar_lea.vmem %s1, %s204
        $region24: #{decoder_forward.22} parent=15 // pred_fallthru
          _
        // Predicated region
        $region25: #{decoder_forward.22} parent=15 // pred_check
          %p206 = pneg %p87
        $region26: #{decoder_forward.22} parent=15 // pred_check_branch
          %208 = sbr.rel (%p206) target = $region28
        $region27: #{decoder_forward.22} parent=15 // pred_region
          %p209 = scmp.lt.s32.totalorder %s15, 1
          %s210 = scalar_select %p209, %s15, 1
          %s211 = smul.addr %s210, 4
          %s212 = smul.addr %s211, 8
          %s213 = scalar_lea.vmem %s2, %s212
        $region28: #{decoder_forward.22} parent=15 // pred_fallthru
          _
        // Predicated region
        $region29: #{decoder_forward.22} parent=15 // pred_check
          %p214 = pneg %p113
        $region30: #{decoder_forward.22} parent=15 // pred_check_branch
          %216 = sbr.rel (%p214) target = $region32
        $region31: #{decoder_forward.22} parent=15 // pred_region
          %p217 = scmp.lt.s32.totalorder %s15, 1
          %s218 = scalar_select %p217, %s15, 1
          %s219 = scalar_lea.vmem %s3, %s218
        $region32: #{decoder_forward.22} parent=15 // pred_fallthru
          _
      $region16: #{decoder_forward.22} parent=5 // pred_fallthru
        _
      %p220 = scmp.le.s32.totalorder 1, %s15
      %p221 = scmp.lt.s32.totalorder %s15, 3
      %p222 = pnand %p220, %p221
      %p223 = pneg %p222
      // Predicated region
      $region33: #{decoder_forward.22} parent=5 // pred_check
        _
      $region34: #{decoder_forward.22} parent=5 // pred_check_branch
        %225 = sbr.rel (%p222) target = $region36
      $region35: #{decoder_forward.22} parent=5 // pred_region
        %s226 = ssub.s32 %s15, 1
        %p227 = scmp.lt.s32.totalorder %s20, 1
        %s228 = scalar_select %p227, %s20, 1
        %s229 = smul.addr %s228, 4
        %s230 = smul.addr %s229, 8
        %s231 = scalar_lea.vmem %s0, %s230
        %p232 = pneg %p41
        %p233 = pneg %p38
        %p234 = scmp.lt.s32.totalorder %s20, 1
        %s235 = scalar_select %p234, %s20, 1
        %s236 = smul.addr %s235, 4
        %s237 = smul.addr %s236, 8
        %s238 = scalar_lea.vmem %s1, %s237
        %p239 = pneg %p67
        %p240 = pneg %p64
        %p241 = scmp.lt.s32.totalorder %s20, 1
        %s242 = scalar_select %p241, %s20, 1
        %s243 = smul.addr %s242, 4
        %s244 = smul.addr %s243, 8
        %s245 = scalar_lea.vmem %s2, %s244
        %p246 = pneg %p93
        %p247 = pneg %p90
        %p248 = scmp.lt.s32.totalorder %s20, 1
        %s249 = scalar_select %p248, %s20, 1
        %s250 = scalar_lea.vmem %s3, %s249
        %p251 = pneg %p119
        %p252 = pneg %p116
        %p253 = pneg %p145
        %p254 = pneg %p142
        %p255 = scmp.lt.s32.totalorder %s20, 1
        %s256 = scalar_select %p255, %s20, 1
        %s257 = smul.addr %s256, 4
        %s258 = smul.addr %s257, 8
        %s259 = scalar_lea.vmem %s4, %s258
        %p260 = pneg %p171
        %p261 = pneg %p168
        %s262 = sand.u32 %s158, 1
        %s263 = scalar_lea.sflag [#allocation3], %s262
        %s264 = sand.u32 %s158, 1
        %s265 = smul.addr %s264, 32
        %s266 = scalar_lea.vmem [#allocation2], %s265
        %p267 = scmp.lt.s32.totalorder %s20, 1
        %s268 = scalar_select %p267, %s20, 1
        %s269 = smul.addr %s268, 4
        %s270 = smul.addr %s269, 8
        %s271 = scalar_lea.vmem %s0, %s270
        %p272 = scmp.lt.s32.totalorder %s20, 1
        %s273 = scalar_select %p272, %s20, 1
        %s274 = smul.addr %s273, 4
        %s275 = smul.addr %s274, 8
        %s276 = scalar_lea.vmem %s1, %s275
        %p277 = scmp.lt.s32.totalorder %s20, 1
        %s278 = scalar_select %p277, %s20, 1
        %s279 = smul.addr %s278, 4
        %s280 = smul.addr %s279, 8
        %s281 = scalar_lea.vmem %s2, %s280
        %p282 = scmp.lt.s32.totalorder %s20, 1
        %s283 = scalar_select %p282, %s20, 1
        %s284 = scalar_lea.vmem %s3, %s283
        %p285 = scmp.lt.s32.totalorder %s20, 1
        %s286 = scalar_select %p285, %s20, 1
        %s287 = smul.addr %s286, 4
        %s288 = smul.addr %s287, 8
        %s289 = scalar_lea.vmem %s4, %s288
        %v291 = vld [vmem:[%s271] sm:$0xff]
        %v292 = vld [vmem:[%s271 + $0x8] sm:$0xff]
        %v293 = vld [vmem:[%s271 + $0x10] sm:$0xff]
        %v294 = vld [vmem:[%s271 + $0x18] sm:$0xff]
        %v295 = vpack.c.bf16 %v291, %v291
        %v296 = vpack.c.bf16 %v292, %v292
        %v297 = vpack.c.bf16 %v293, %v293
        %v298 = vpack.c.bf16 %v294, %v294
        %v299 = vld [vmem:[%s276] sm:$0xff]
        %v300 = vld [vmem:[%s276 + $0x8] sm:$0xff]
        %v301 = vld [vmem:[%s276 + $0x10] sm:$0xff]
        %v302 = vld [vmem:[%s276 + $0x18] sm:$0xff]
        %v303 = vpack.c.bf16 %v299, %v299
        %v304 = vpack.c.bf16 %v300, %v300
        %v305 = vpack.c.bf16 %v301, %v301
        %v306 = vpack.c.bf16 %v302, %v302
        %v307 = vld [vmem:[%s281] sm:$0xff]
        %v308 = vld [vmem:[%s281 + $0x8] sm:$0xff]
        %v309 = vld [vmem:[%s281 + $0x10] sm:$0xff]
        %v310 = vld [vmem:[%s281 + $0x18] sm:$0xff]
        %v311 = vpack.c.bf16 %v307, %v307
        %v312 = vpack.c.bf16 %v308, %v308
        %v313 = vpack.c.bf16 %v309, %v309
        %v314 = vpack.c.bf16 %v310, %v310
        %v315 = vld [vmem:[%s284] sm:$0x1]
        %vm316 = vcmask 64512
        %v318 = vsel %vm316, %v295, 0
        %v321 = vsel %vm316, %v303, 0
        %323 = vmatprep.subr.bf16.mxu0 0
        %324 = vmatpush1.bf16.xpose.msra.mxu0 %v321
        %325 = vmatprep.subr.bf16.mxu0 0
        %326 = vmatpush1.bf16.xpose.msra.mxu0 0
        %327 = vmatprep.subr.bf16.mxu0 0
        %328 = vmatpush1.bf16.xpose.msra.mxu0 0
        %329 = vmatprep.subr.bf16.mxu0 0
        %330 = vmatpush1.bf16.xpose.msra.mxu0 0
        %331 = vmatprep.subr.bf16.mxu0 0
        %332 = vmatpush1.bf16.xpose.msra.mxu0 0
        %333 = vmatprep.subr.bf16.mxu0 0
        %334 = vmatpush1.bf16.xpose.msra.mxu0 0
        %335 = vmatprep.subr.bf16.mxu0 0
        %336 = vmatpush1.bf16.xpose.msra.mxu0 0
        %337 = vmatprep.subr.bf16.mxu0 0
        %338 = vmatpush1.bf16.xpose.msra.mxu0 0
        %339 = vmatprep.subr.bf16.mxu0 0
        %340 = vmatpush1.bf16.xpose.msra.mxu0 0
        %341 = vmatprep.subr.bf16.mxu0 0
        %342 = vmatpush1.bf16.xpose.msra.mxu0 0
        %343 = vmatprep.subr.bf16.mxu0 0
        %344 = vmatpush1.bf16.xpose.msra.mxu0 0
        %345 = vmatprep.subr.bf16.mxu0 0
        %346 = vmatpush1.bf16.xpose.msra.mxu0 0
        %347 = vmatprep.subr.bf16.mxu0 0
        %348 = vmatpush1.bf16.xpose.msra.mxu0 0
        %349 = vmatprep.subr.bf16.mxu0 0
        %350 = vmatpush1.bf16.xpose.msra.mxu0 0
        %351 = vmatprep.subr.bf16.mxu0 0
        %352 = vmatpush1.bf16.xpose.msra.mxu0 0
        %353 = vmatprep.subr.bf16.mxu0 0
        %354 = vmatpush1.bf16.xpose.msra.mxu0 0
        %355 = vmatprep.mubr.bf16.mxu0 0
        %356 = vmatmul.mubr.bf16.gmra.mrb[0].mxu0 %v318
        %v357 = vpop.f32.mrb[0].mxu0
        %v358 = vadd.f32 0.0, %v357
        %v359 = vpop.f32.mrb[0].mxu0
        %v360 = vpop.f32.mrb[0].mxu0
        %v361 = vpop.f32.mrb[0].mxu0
        %362 = vdwg.mxu0
        %v364 = vsel %vm316, %v296, 0
        %v367 = vsel %vm316, %v304, 0
        %369 = vmatprep.subr.bf16.mxu0 0
        %370 = vmatpush1.bf16.xpose.msra.mxu0 %v367
        %371 = vmatprep.subr.bf16.mxu0 0
        %372 = vmatpush1.bf16.xpose.msra.mxu0 0
        %373 = vmatprep.subr.bf16.mxu0 0
        %374 = vmatpush1.bf16.xpose.msra.mxu0 0
        %375 = vmatprep.subr.bf16.mxu0 0
        %376 = vmatpush1.bf16.xpose.msra.mxu0 0
        %377 = vmatprep.subr.bf16.mxu0 0
        %378 = vmatpush1.bf16.xpose.msra.mxu0 0
        %379 = vmatprep.subr.bf16.mxu0 0
        %380 = vmatpush1.bf16.xpose.msra.mxu0 0
        %381 = vmatprep.subr.bf16.mxu0 0
        %382 = vmatpush1.bf16.xpose.msra.mxu0 0
        %383 = vmatprep.subr.bf16.mxu0 0
        %384 = vmatpush1.bf16.xpose.msra.mxu0 0
        %385 = vmatprep.subr.bf16.mxu0 0
        %386 = vmatpush1.bf16.xpose.msra.mxu0 0
        %387 = vmatprep.subr.bf16.mxu0 0
        %388 = vmatpush1.bf16.xpose.msra.mxu0 0
        %389 = vmatprep.subr.bf16.mxu0 0
        %390 = vmatpush1.bf16.xpose.msra.mxu0 0
        %391 = vmatprep.subr.bf16.mxu0 0
        %392 = vmatpush1.bf16.xpose.msra.mxu0 0
        %393 = vmatprep.subr.bf16.mxu0 0
        %394 = vmatpush1.bf16.xpose.msra.mxu0 0
        %395 = vmatprep.subr.bf16.mxu0 0
        %396 = vmatpush1.bf16.xpose.msra.mxu0 0
        %397 = vmatprep.subr.bf16.mxu0 0
        %398 = vmatpush1.bf16.xpose.msra.mxu0 0
        %399 = vmatprep.subr.bf16.mxu0 0
        %400 = vmatpush1.bf16.xpose.msra.mxu0 0
        %401 = vmatprep.mubr.bf16.mxu0 0
        %402 = vmatmul.mubr.bf16.gmra.mrb[0].mxu0 %v364
        %v403 = vpop.f32.mrb[0].mxu0
        %v404 = vadd.f32 0.0, %v403
        %v405 = vpop.f32.mrb[0].mxu0
        %v406 = vpop.f32.mrb[0].mxu0
        %v407 = vpop.f32.mrb[0].mxu0
        %408 = vdwg.mxu0
        %v410 = vsel %vm316, %v297, 0
        %v413 = vsel %vm316, %v305, 0
        %415 = vmatprep.subr.bf16.mxu0 0
        %416 = vmatpush1.bf16.xpose.msra.mxu0 %v413
        %417 = vmatprep.subr.bf16.mxu0 0
        %418 = vmatpush1.bf16.xpose.msra.mxu0 0
        %419 = vmatprep.subr.bf16.mxu0 0
        %420 = vmatpush1.bf16.xpose.msra.mxu0 0
        %421 = vmatprep.subr.bf16.mxu0 0
        %422 = vmatpush1.bf16.xpose.msra.mxu0 0
        %423 = vmatprep.subr.bf16.mxu0 0
        %424 = vmatpush1.bf16.xpose.msra.mxu0 0
        %425 = vmatprep.subr.bf16.mxu0 0
        %426 = vmatpush1.bf16.xpose.msra.mxu0 0
        %427 = vmatprep.subr.bf16.mxu0 0
        %428 = vmatpush1.bf16.xpose.msra.mxu0 0
        %429 = vmatprep.subr.bf16.mxu0 0
        %430 = vmatpush1.bf16.xpose.msra.mxu0 0
        %431 = vmatprep.subr.bf16.mxu0 0
        %432 = vmatpush1.bf16.xpose.msra.mxu0 0
        %433 = vmatprep.subr.bf16.mxu0 0
        %434 = vmatpush1.bf16.xpose.msra.mxu0 0
        %435 = vmatprep.subr.bf16.mxu0 0
        %436 = vmatpush1.bf16.xpose.msra.mxu0 0
        %437 = vmatprep.subr.bf16.mxu0 0
        %438 = vmatpush1.bf16.xpose.msra.mxu0 0
        %439 = vmatprep.subr.bf16.mxu0 0
        %440 = vmatpush1.bf16.xpose.msra.mxu0 0
        %441 = vmatprep.subr.bf16.mxu0 0
        %442 = vmatpush1.bf16.xpose.msra.mxu0 0
        %443 = vmatprep.subr.bf16.mxu0 0
        %444 = vmatpush1.bf16.xpose.msra.mxu0 0
        %445 = vmatprep.subr.bf16.mxu0 0
        %446 = vmatpush1.bf16.xpose.msra.mxu0 0
        %447 = vmatprep.mubr.bf16.mxu0 0
        %448 = vmatmul.mubr.bf16.gmra.mrb[0].mxu0 %v410
        %v449 = vpop.f32.mrb[0].mxu0
        %v450 = vadd.f32 0.0, %v449
        %v451 = vpop.f32.mrb[0].mxu0
        %v452 = vpop.f32.mrb[0].mxu0
        %v453 = vpop.f32.mrb[0].mxu0
        %454 = vdwg.mxu0
        %v456 = vsel %vm316, %v298, 0
        %v459 = vsel %vm316, %v306, 0
        %461 = vmatprep.subr.bf16.mxu0 0
        %462 = vmatpush1.bf16.xpose.msra.mxu0 %v459
        %463 = vmatprep.subr.bf16.mxu0 0
        %464 = vmatpush1.bf16.xpose.msra.mxu0 0
        %465 = vmatprep.subr.bf16.mxu0 0
        %466 = vmatpush1.bf16.xpose.msra.mxu0 0
        %467 = vmatprep.subr.bf16.mxu0 0
        %468 = vmatpush1.bf16.xpose.msra.mxu0 0
        %469 = vmatprep.subr.bf16.mxu0 0
        %470 = vmatpush1.bf16.xpose.msra.mxu0 0
        %471 = vmatprep.subr.bf16.mxu0 0
        %472 = vmatpush1.bf16.xpose.msra.mxu0 0
        %473 = vmatprep.subr.bf16.mxu0 0
        %474 = vmatpush1.bf16.xpose.msra.mxu0 0
        %475 = vmatprep.subr.bf16.mxu0 0
        %476 = vmatpush1.bf16.xpose.msra.mxu0 0
        %477 = vmatprep.subr.bf16.mxu0 0
        %478 = vmatpush1.bf16.xpose.msra.mxu0 0
        %479 = vmatprep.subr.bf16.mxu0 0
        %480 = vmatpush1.bf16.xpose.msra.mxu0 0
        %481 = vmatprep.subr.bf16.mxu0 0
        %482 = vmatpush1.bf16.xpose.msra.mxu0 0
        %483 = vmatprep.subr.bf16.mxu0 0
        %484 = vmatpush1.bf16.xpose.msra.mxu0 0
        %485 = vmatprep.subr.bf16.mxu0 0
        %486 = vmatpush1.bf16.xpose.msra.mxu0 0
        %487 = vmatprep.subr.bf16.mxu0 0
        %488 = vmatpush1.bf16.xpose.msra.mxu0 0
        %489 = vmatprep.subr.bf16.mxu0 0
        %490 = vmatpush1.bf16.xpose.msra.mxu0 0
        %491 = vmatprep.subr.bf16.mxu0 0
        %492 = vmatpush1.bf16.xpose.msra.mxu0 0
        %493 = vmatprep.mubr.bf16.mxu0 0
        %494 = vmatmul.mubr.bf16.gmra.mrb[0].mxu0 %v456
        %v495 = vpop.f32.mrb[0].mxu0
        %v496 = vadd.f32 0.0, %v495
        %v497 = vpop.f32.mrb[0].mxu0
        %v498 = vpop.f32.mrb[0].mxu0
        %v499 = vpop.f32.mrb[0].mxu0
        %500 = vdwg.mxu0
        %v501 = vmul.f32 %v358, 0.35355338
        %v502 = vmul.f32 %v404, 0.35355338
        %v503 = vmul.f32 %v450, 0.35355338
        %v504 = vmul.f32 %v496, 0.35355338
        %vm505 = vcmp.eq.f32.partialorder %v315, 0.0
        %v506 = vsel %vm505, 1, 0
        %v507 = vlaneseq
        %v508 = vshrl.u32 %v507, 7
        %v509 = vsub.s32 0, %v508
        %v510 = vrot.slane %v506, %v509
        %vm511 = vcmp.eq.s32.totalorder %v510, 1
        %v512 = vsel %vm511, -1e+09, %v501
        %v513 = vsel %vm511, -1e+09, %v502
        %v514 = vsel %vm511, -1e+09, %v503
        %v515 = vsel %vm511, -1e+09, %v504
        %v516 = vsel %vm316, %v512, -inf
        %517 = vmax.xlane.f32.xlu0 %v516
        %v518 = vpop.xlane.xlu0 %517
        %v519 = vsel %vm316, %v513, -inf
        %520 = vmax.xlane.f32.xlu0 %v519
        %v521 = vpop.xlane.xlu0 %520
        %v522 = vsel %vm316, %v514, -inf
        %523 = vmax.xlane.f32.xlu0 %v522
        %v524 = vpop.xlane.xlu0 %523
        %v525 = vsel %vm316, %v515, -inf
        %526 = vmax.xlane.f32.xlu0 %v525
        %v527 = vpop.xlane.xlu0 %526
        %v528 = vsub.f32 %v512, %v518
        %v529 = vsub.f32 %v513, %v521
        %v530 = vsub.f32 %v514, %v524
        %v531 = vsub.f32 %v515, %v527
        %v532 = vmul.f32 %v528, 1.442695
        %v533 = vpow.pop %v532
        %v534 = vmul.f32 %v529, 1.442695
        %v535 = vpow.pop %v534
        %v536 = vmul.f32 %v530, 1.442695
        %v537 = vpow.pop %v536
        %v538 = vmul.f32 %v531, 1.442695
        %v539 = vpow.pop %v538
        %v540 = vsel %vm316, %v533, 0.0
        %541 = vadd.xlane.f32.xlu0 %v540
        %v542 = vpop.xlane.xlu0 %541
        %v543 = vsel %vm316, %v535, 0.0
        %544 = vadd.xlane.f32.xlu0 %v543
        %v545 = vpop.xlane.xlu0 %544
        %v546 = vsel %vm316, %v537, 0.0
        %547 = vadd.xlane.f32.xlu0 %v546
        %v548 = vpop.xlane.xlu0 %547
        %v549 = vsel %vm316, %v539, 0.0
        %550 = vadd.xlane.f32.xlu0 %v549
        %v551 = vpop.xlane.xlu0 %550
        %v552 = vrcp.pop %v542
        %v553 = vmul.f32 %v533, %v552
        %v554 = vrcp.pop %v545
        %v555 = vmul.f32 %v535, %v554
        %v556 = vrcp.pop %v548
        %v557 = vmul.f32 %v537, %v556
        %v558 = vrcp.pop %v551
        %v559 = vmul.f32 %v539, %v558
        %560 = vst.msk [vmem:[%s266] sm:$0xff] %vm316, %v553
        %561 = vst.msk [vmem:[%s266 + $0x8] sm:$0xff] %vm316, %v555
        %562 = vst.msk [vmem:[%s266 + $0x10] sm:$0xff] %vm316, %v557
        %563 = vst.msk [vmem:[%s266 + $0x18] sm:$0xff] %vm316, %v559
        %v564 = vpack.c.bf16 %v553, %v553
        %v565 = vpack.c.bf16 %v555, %v555
        %v566 = vpack.c.bf16 %v557, %v557
        %v567 = vpack.c.bf16 %v559, %v559
        %v569 = vsel %vm316, %v564, 0
        %vm571 = vcmask 1043456
        %v573 = vsel %vm571, %v311, 0
        %575 = vmatprep.subr.bf16.mxu0 0
        %576 = vmatpush1.bf16.msra.mxu0 %v573
        %577 = vmatprep.subr.bf16.mxu0 0
        %578 = vmatpush1.bf16.msra.mxu0 0
        %579 = vmatprep.subr.bf16.mxu0 0
        %580 = vmatpush1.bf16.msra.mxu0 0
        %581 = vmatprep.subr.bf16.mxu0 0
        %582 = vmatpush1.bf16.msra.mxu0 0
        %583 = vmatprep.subr.bf16.mxu0 0
        %584 = vmatpush1.bf16.msra.mxu0 0
        %585 = vmatprep.subr.bf16.mxu0 0
        %586 = vmatpush1.bf16.msra.mxu0 0
        %587 = vmatprep.subr.bf16.mxu0 0
        %588 = vmatpush1.bf16.msra.mxu0 0
        %589 = vmatprep.subr.bf16.mxu0 0
        %590 = vmatpush1.bf16.msra.mxu0 0
        %591 = vmatprep.subr.bf16.mxu0 0
        %592 = vmatpush1.bf16.msra.mxu0 0
        %593 = vmatprep.subr.bf16.mxu0 0
        %594 = vmatpush1.bf16.msra.mxu0 0
        %595 = vmatprep.subr.bf16.mxu0 0
        %596 = vmatpush1.bf16.msra.mxu0 0
        %597 = vmatprep.subr.bf16.mxu0 0
        %598 = vmatpush1.bf16.msra.mxu0 0
        %599 = vmatprep.subr.bf16.mxu0 0
        %600 = vmatpush1.bf16.msra.mxu0 0
        %601 = vmatprep.subr.bf16.mxu0 0
        %602 = vmatpush1.bf16.msra.mxu0 0
        %603 = vmatprep.subr.bf16.mxu0 0
        %604 = vmatpush1.bf16.msra.mxu0 0
        %605 = vmatprep.subr.bf16.mxu0 0
        %606 = vmatpush1.bf16.msra.mxu0 0
        %607 = vmatprep.mubr.bf16.mxu0 0
        %608 = vmatmul.mubr.bf16.gmra.mrb[0].mxu0 %v569
        %v609 = vpop.f32.mrb[0].mxu0
        %v610 = vadd.f32 0.0, %v609
        %v611 = vpop.f32.mrb[0].mxu0
        %v612 = vpop.f32.mrb[0].mxu0
        %v613 = vpop.f32.mrb[0].mxu0
        %614 = vdwg.mxu0
        %v616 = vsel %vm316, %v565, 0
        %v619 = vsel %vm571, %v312, 0
        %621 = vmatprep.subr.bf16.mxu0 0
        %622 = vmatpush1.bf16.msra.mxu0 %v619
        %623 = vmatprep.subr.bf16.mxu0 0
        %624 = vmatpush1.bf16.msra.mxu0 0
        %625 = vmatprep.subr.bf16.mxu0 0
        %626 = vmatpush1.bf16.msra.mxu0 0
        %627 = vmatprep.subr.bf16.mxu0 0
        %628 = vmatpush1.bf16.msra.mxu0 0
        %629 = vmatprep.subr.bf16.mxu0 0
        %630 = vmatpush1.bf16.msra.mxu0 0
        %631 = vmatprep.subr.bf16.mxu0 0
        %632 = vmatpush1.bf16.msra.mxu0 0
        %633 = vmatprep.subr.bf16.mxu0 0
        %634 = vmatpush1.bf16.msra.mxu0 0
        %635 = vmatprep.subr.bf16.mxu0 0
        %636 = vmatpush1.bf16.msra.mxu0 0
        %637 = vmatprep.subr.bf16.mxu0 0
        %638 = vmatpush1.bf16.msra.mxu0 0
        %639 = vmatprep.subr.bf16.mxu0 0
        %640 = vmatpush1.bf16.msra.mxu0 0
        %641 = vmatprep.subr.bf16.mxu0 0
        %642 = vmatpush1.bf16.msra.mxu0 0
        %643 = vmatprep.subr.bf16.mxu0 0
        %644 = vmatpush1.bf16.msra.mxu0 0
        %645 = vmatprep.subr.bf16.mxu0 0
        %646 = vmatpush1.bf16.msra.mxu0 0
        %647 = vmatprep.subr.bf16.mxu0 0
        %648 = vmatpush1.bf16.msra.mxu0 0
        %649 = vmatprep.subr.bf16.mxu0 0
        %650 = vmatpush1.bf16.msra.mxu0 0
        %651 = vmatprep.subr.bf16.mxu0 0
        %652 = vmatpush1.bf16.msra.mxu0 0
        %653 = vmatprep.mubr.bf16.mxu0 0
        %654 = vmatmul.mubr.bf16.gmra.mrb[0].mxu0 %v616
        %v655 = vpop.f32.mrb[0].mxu0
        %v656 = vadd.f32 0.0, %v655
        %v657 = vpop.f32.mrb[0].mxu0
        %v658 = vpop.f32.mrb[0].mxu0
        %v659 = vpop.f32.mrb[0].mxu0
        %660 = vdwg.mxu0
        %v662 = vsel %vm316, %v566, 0
        %v665 = vsel %vm571, %v313, 0
        %667 = vmatprep.subr.bf16.mxu0 0
        %668 = vmatpush1.bf16.msra.mxu0 %v665
        %669 = vmatprep.subr.bf16.mxu0 0
        %670 = vmatpush1.bf16.msra.mxu0 0
        %671 = vmatprep.subr.bf16.mxu0 0
        %672 = vmatpush1.bf16.msra.mxu0 0
        %673 = vmatprep.subr.bf16.mxu0 0
        %674 = vmatpush1.bf16.msra.mxu0 0
        %675 = vmatprep.subr.bf16.mxu0 0
        %676 = vmatpush1.bf16.msra.mxu0 0
        %677 = vmatprep.subr.bf16.mxu0 0
        %678 = vmatpush1.bf16.msra.mxu0 0
        %679 = vmatprep.subr.bf16.mxu0 0
        %680 = vmatpush1.bf16.msra.mxu0 0
        %681 = vmatprep.subr.bf16.mxu0 0
        %682 = vmatpush1.bf16.msra.mxu0 0
        %683 = vmatprep.subr.bf16.mxu0 0
        %684 = vmatpush1.bf16.msra.mxu0 0
        %685 = vmatprep.subr.bf16.mxu0 0
        %686 = vmatpush1.bf16.msra.mxu0 0
        %687 = vmatprep.subr.bf16.mxu0 0
        %688 = vmatpush1.bf16.msra.mxu0 0
        %689 = vmatprep.subr.bf16.mxu0 0
        %690 = vmatpush1.bf16.msra.mxu0 0
        %691 = vmatprep.subr.bf16.mxu0 0
        %692 = vmatpush1.bf16.msra.mxu0 0
        %693 = vmatprep.subr.bf16.mxu0 0
        %694 = vmatpush1.bf16.msra.mxu0 0
        %695 = vmatprep.subr.bf16.mxu0 0
        %696 = vmatpush1.bf16.msra.mxu0 0
        %697 = vmatprep.subr.bf16.mxu0 0
        %698 = vmatpush1.bf16.msra.mxu0 0
        %699 = vmatprep.mubr.bf16.mxu0 0
        %700 = vmatmul.mubr.bf16.gmra.mrb[0].mxu0 %v662
        %v701 = vpop.f32.mrb[0].mxu0
        %v702 = vadd.f32 0.0, %v701
        %v703 = vpop.f32.mrb[0].mxu0
        %v704 = vpop.f32.mrb[0].mxu0
        %v705 = vpop.f32.mrb[0].mxu0
        %706 = vdwg.mxu0
        %v708 = vsel %vm316, %v567, 0
        %v711 = vsel %vm571, %v314, 0
        %713 = vmatprep.subr.bf16.mxu0 0
        %714 = vmatpush1.bf16.msra.mxu0 %v711
        %715 = vmatprep.subr.bf16.mxu0 0
        %716 = vmatpush1.bf16.msra.mxu0 0
        %717 = vmatprep.subr.bf16.mxu0 0
        %718 = vmatpush1.bf16.msra.mxu0 0
        %719 = vmatprep.subr.bf16.mxu0 0
        %720 = vmatpush1.bf16.msra.mxu0 0
        %721 = vmatprep.subr.bf16.mxu0 0
        %722 = vmatpush1.bf16.msra.mxu0 0
        %723 = vmatprep.subr.bf16.mxu0 0
        %724 = vmatpush1.bf16.msra.mxu0 0
        %725 = vmatprep.subr.bf16.mxu0 0
        %726 = vmatpush1.bf16.msra.mxu0 0
        %727 = vmatprep.subr.bf16.mxu0 0
        %728 = vmatpush1.bf16.msra.mxu0 0
        %729 = vmatprep.subr.bf16.mxu0 0
        %730 = vmatpush1.bf16.msra.mxu0 0
        %731 = vmatprep.subr.bf16.mxu0 0
        %732 = vmatpush1.bf16.msra.mxu0 0
        %733 = vmatprep.subr.bf16.mxu0 0
        %734 = vmatpush1.bf16.msra.mxu0 0
        %735 = vmatprep.subr.bf16.mxu0 0
        %736 = vmatpush1.bf16.msra.mxu0 0
        %737 = vmatprep.subr.bf16.mxu0 0
        %738 = vmatpush1.bf16.msra.mxu0 0
        %739 = vmatprep.subr.bf16.mxu0 0
        %740 = vmatpush1.bf16.msra.mxu0 0
        %741 = vmatprep.subr.bf16.mxu0 0
        %742 = vmatpush1.bf16.msra.mxu0 0
        %743 = vmatprep.subr.bf16.mxu0 0
        %744 = vmatpush1.bf16.msra.mxu0 0
        %745 = vmatprep.mubr.bf16.mxu0 0
        %746 = vmatmul.mubr.bf16.gmra.mrb[0].mxu0 %v708
        %v747 = vpop.f32.mrb[0].mxu0
        %v748 = vadd.f32 0.0, %v747
        %v749 = vpop.f32.mrb[0].mxu0
        %v750 = vpop.f32.mrb[0].mxu0
        %v751 = vpop.f32.mrb[0].mxu0
        %752 = vdwg.mxu0
        %753 = vst.msk [vmem:[%s289] sm:$0xff] %vm316, %v610
        %754 = vst.msk [vmem:[%s289 + $0x8] sm:$0xff] %vm316, %v656
        %755 = vst.msk [vmem:[%s289 + $0x10] sm:$0xff] %vm316, %v702
        %756 = vst.msk [vmem:[%s289 + $0x18] sm:$0xff] %vm316, %v748
        %p757 = scmp.lt.s32.totalorder %s20, 1
        %s758 = scalar_select %p757, %s20, 1
        %s759 = smul.addr %s758, 4
        %s760 = smul.addr %s759, 8
        %s761 = scalar_lea.vmem %s4, %s760
        %s762 = sand.u32 %s158, 1
        %s763 = scalar_lea.sflag [#allocation3], %s762
        %s764 = sand.u32 %s158, 1
        %s765 = smul.addr %s764, 32
        %s766 = scalar_lea.vmem [#allocation2], %s765
        // Predicated region
        $region37: #{decoder_forward.22} parent=35 // pred_check
          %p767 = pneg %p142
        $region38: #{decoder_forward.22} parent=35 // pred_check_branch
          %769 = sbr.rel (%p767) target = $region40
        $region39: #{decoder_forward.22} parent=35 // pred_region
          _
        $region40: #{decoder_forward.22} parent=35 // pred_fallthru
          _
        // Predicated region
        $region41: #{decoder_forward.22} parent=35 // pred_check
          %p770 = pneg %p168
        $region42: #{decoder_forward.22} parent=35 // pred_check_branch
          %772 = sbr.rel (%p770) target = $region44
        $region43: #{decoder_forward.22} parent=35 // pred_region
          %s774 = ssub.s32 512, 512
          %775 = vsyncadd %s763, %s774
          %s776 = smul.addr %s20, 4
          %s777 = smul.addr %s776, 128
          %s778 = scalar_lea.hbm %s5, %s777
          %s779 = sshll.u32 %s766, 4
          %s780 = int_to_ptr.vmem [resolvable:$true] %s779
          %785 = dma.vmem_to_hbm [thread:$0]  %s780, 512, %s778, %s763, 128, 128, 8
        $region44: #{decoder_forward.22} parent=35 // pred_fallthru
          _
      $region36: #{decoder_forward.22} parent=5 // pred_fallthru
        _
      %p786 = scmp.le.s32.totalorder 2, %s15
      // Predicated region
      $region45: #{decoder_forward.22} parent=5 // pred_check
        %p787 = pneg %p786
      $region46: #{decoder_forward.22} parent=5 // pred_check_branch
        %789 = sbr.rel (%p787) target = $region48
      $region47: #{decoder_forward.22} parent=5 // pred_region
        %s790 = ssub.s32 %s15, 2
        // Predicated region
        $region49: #{decoder_forward.22} parent=47 // pred_check
          %p791 = pneg %p148
        $region50: #{decoder_forward.22} parent=47 // pred_check_branch
          %793 = sbr.rel (%p791) target = $region52
        $region51: #{decoder_forward.22} parent=47 // pred_region
          %p794 = scmp.lt.s32.totalorder %s21, 1
          %s795 = scalar_select %p794, %s21, 1
          %s796 = smul.addr %s795, 4
          %s797 = smul.addr %s796, 8
          %s798 = scalar_lea.vmem %s4, %s797
        $region52: #{decoder_forward.22} parent=47 // pred_fallthru
          _
        // Predicated region
        $region53: #{decoder_forward.22} parent=47 // pred_check
          %p799 = pneg %p174
        $region54: #{decoder_forward.22} parent=47 // pred_check_branch
          %801 = sbr.rel (%p799) target = $region56
        $region55: #{decoder_forward.22} parent=47 // pred_region
          %s802 = sand.u32 %s159, 1
          %s803 = scalar_lea.sflag [#allocation3], %s802
          %s804 = sand.u32 %s159, 1
          %s805 = smul.addr %s804, 32
          %s806 = scalar_lea.vmem [#allocation2], %s805
          %807 = dma.done %s803, 512
        $region56: #{decoder_forward.22} parent=47 // pred_fallthru
          _
      $region48: #{decoder_forward.22} parent=5 // pred_fallthru
        _
    $region6: #{decoder_forward.22} parent=1 // loop_footer
      %s19 = sadd.s32 1, %s15
    $region7: #{decoder_forward.22} parent=1 // loop_footer_branch
      %14 = sbr.rel target = $region3
    $region8: #{decoder_forward.22} parent=1 // loop_exit
      _
    %808 = vsyncpa [#allocation3], 1
    %s809 = scalar_lea.sflag [#allocation3], 1
    %810 = vsyncpa %s809, 1

// kernel: decoder_forward.33
$region0: #{decoder_forward.33}
  #allocation0 [shape = 'u32[]', space=smem, size = 0x4, offset = 0x4, fixed_abs, tag = 'smem constant byte address 0x4 - core index']
  #allocation1 [shape = 'u32[144,128]{1,0:T(1,128)}', space=vmem, size = 0x12000, scoped, tag = 'internal scratch']
  %s0 = inlined_call_operand.vmem [shape: f32[16,32], index: 0, kind: input, shape index: {}]
  %s1 = inlined_call_operand.vmem [shape: f32[32,128], index: 1, kind: input, shape index: {}]
  %s2 = inlined_call_operand.vmem [shape: f32[1,128], index: 2, kind: input, shape index: {}]
  %s3 = inlined_call_operand.vmem [shape: f32[16,128], index: 3, kind: output, shape index: {}]
  %s4 = sld [smem:[#allocation0]]
  $region45: #{decoder_forward.33} parent=0
    _
  %s6 = ssub.s32 1, %s4
  %s7 = scalar_select 0, %s6, %s4
  loop: start=0, step=1, limit=4
  $region2: #{decoder_forward.33} parent=0 // loop_pre_header
    _
  $region3: #{decoder_forward.33} parent=0 // loop_header
    %s9 = sphi 0, %s13
    %p10 = scmp.ge.s32.totalorder %s9, 4
    %s19 = sphi 0, %s21
    %s22 = sphi 0, %s19
    %s23 = sphi 0, %s22
    %s39 = sphi 0, %s23
    %s43 = sphi 0, %s43
    %s45 = sphi 0, %s43
    %s46 = sphi 0, %s45
    %s60 = sphi 0, %s46
    %s64 = sphi 0, %s64
    %s66 = sphi 0, %s64
    %s67 = sphi 0, %s66
    %s81 = sphi 0, %s67
    %s87 = sphi 0, %s89
    %s90 = sphi 0, %s87
    %s91 = sphi 0, %s90
    %s107 = sphi 0, %s91
  $region4: #{decoder_forward.33} parent=0 // loop_header_branch
    %12 = sbr.rel (%p10) target = $region8
  $region5: #{decoder_forward.33} parent=0 // loop_body
    %s14 = ssub.s32 %s9, 1
    %s15 = ssub.s32 %s9, 2
    %s16 = sadd.s32 %s9, 1
    %s17 = ssub.s32 %s9, %s16
    %p18 = scmp.eq.s32.totalorder %s17, 0
    %s20 = sadd.s32 %s19, 1
    %s21 = scalar_select %p18, %s19, %s20
    %p24 = pneg %p18
    %p25 = scmp.eq.s32.totalorder %s9, 1
    %p26 = por %p24, %p25
    %p27 = scmp.ne.s32.totalorder %s19, %s22
    %p28 = scmp.eq.s32.totalorder %s9, 0
    %p29 = por %p27, %p28
    %p30 = scmp.ne.s32.totalorder %s19, %s22
    %p31 = scmp.eq.s32.totalorder %s14, 1
    %p32 = por %p30, %p31
    %p33 = scmp.ne.s32.totalorder %s22, %s23
    %p34 = scmp.eq.s32.totalorder %s14, 0
    %p35 = por %p33, %p34
    %p36 = scmp.ne.s32.totalorder %s22, %s23
    %p37 = scmp.eq.s32.totalorder %s15, 1
    %p38 = por %p36, %p37
    %p40 = scmp.ne.s32.totalorder %s23, %s39
    %p41 = scmp.eq.s32.totalorder %s15, 0
    %p42 = por %p40, %p41
    %s44 = sadd.s32 %s43, 1
    %p47 = scmp.eq.s32.totalorder %s9, 1
    %p48 = scmp.ne.s32.totalorder %s43, %s45
    %p49 = scmp.eq.s32.totalorder %s9, 0
    %p50 = por %p48, %p49
    %p51 = scmp.ne.s32.totalorder %s43, %s45
    %p52 = scmp.eq.s32.totalorder %s14, 1
    %p53 = por %p51, %p52
    %p54 = scmp.ne.s32.totalorder %s45, %s46
    %p55 = scmp.eq.s32.totalorder %s14, 0
    %p56 = por %p54, %p55
    %p57 = scmp.ne.s32.totalorder %s45, %s46
    %p58 = scmp.eq.s32.totalorder %s15, 1
    %p59 = por %p57, %p58
    %p61 = scmp.ne.s32.totalorder %s46, %s60
    %p62 = scmp.eq.s32.totalorder %s15, 0
    %p63 = por %p61, %p62
    %s65 = sadd.s32 %s64, 1
    %p68 = scmp.eq.s32.totalorder %s9, 1
    %p69 = scmp.ne.s32.totalorder %s64, %s66
    %p70 = scmp.eq.s32.totalorder %s9, 0
    %p71 = por %p69, %p70
    %p72 = scmp.ne.s32.totalorder %s64, %s66
    %p73 = scmp.eq.s32.totalorder %s14, 1
    %p74 = por %p72, %p73
    %p75 = scmp.ne.s32.totalorder %s66, %s67
    %p76 = scmp.eq.s32.totalorder %s14, 0
    %p77 = por %p75, %p76
    %p78 = scmp.ne.s32.totalorder %s66, %s67
    %p79 = scmp.eq.s32.totalorder %s15, 1
    %p80 = por %p78, %p79
    %p82 = scmp.ne.s32.totalorder %s67, %s81
    %p83 = scmp.eq.s32.totalorder %s15, 0
    %p84 = por %p82, %p83
    %s85 = ssub.s32 %s9, %s16
    %p86 = scmp.eq.s32.totalorder %s85, 0
    %s88 = sadd.s32 %s87, 1
    %s89 = scalar_select %p86, %s87, %s88
    %p92 = pneg %p86
    %p93 = scmp.eq.s32.totalorder %s9, 1
    %p94 = por %p92, %p93
    %p95 = scmp.ne.s32.totalorder %s87, %s90
    %p96 = scmp.eq.s32.totalorder %s9, 0
    %p97 = por %p95, %p96
    %p98 = scmp.ne.s32.totalorder %s87, %s90
    %p99 = scmp.eq.s32.totalorder %s14, 1
    %p100 = por %p98, %p99
    %p101 = scmp.ne.s32.totalorder %s90, %s91
    %p102 = scmp.eq.s32.totalorder %s14, 0
    %p103 = por %p101, %p102
    %p104 = scmp.ne.s32.totalorder %s90, %s91
    %p105 = scmp.eq.s32.totalorder %s15, 1
    %p106 = por %p104, %p105
    %p108 = scmp.ne.s32.totalorder %s91, %s107
    %p109 = scmp.eq.s32.totalorder %s15, 0
    %p110 = por %p108, %p109
    %p111 = scmp.le.s32.totalorder 1, %s9
    %p112 = scmp.lt.s32.totalorder %s9, 3
    %p113 = pnand %p111, %p112
    %p114 = pneg %p113
    // Predicated region
    $region9: #{decoder_forward.33} parent=5 // pred_check
      _
    $region10: #{decoder_forward.33} parent=5 // pred_check_branch
      %116 = sbr.rel (%p113) target = $region12
    $region11: #{decoder_forward.33} parent=5 // pred_region
      %s117 = ssub.s32 %s9, 1
      // Predicated region
      $region13: #{decoder_forward.33} parent=11 // pred_check
        %p118 = pneg %p56
      $region14: #{decoder_forward.33} parent=11 // pred_check_branch
        %120 = sbr.rel (%p118) target = $region16
      $region15: #{decoder_forward.33} parent=11 // pred_region
        _
      $region16: #{decoder_forward.33} parent=11 // pred_fallthru
        _
      // Predicated region
      $region17: #{decoder_forward.33} parent=11 // pred_check
        %p121 = pneg %p77
      $region18: #{decoder_forward.33} parent=11 // pred_check_branch
        %123 = sbr.rel (%p121) target = $region20
      $region19: #{decoder_forward.33} parent=11 // pred_region
        _
      $region20: #{decoder_forward.33} parent=11 // pred_fallthru
        _
    $region12: #{decoder_forward.33} parent=5 // pred_fallthru
      _
    %p124 = scmp.lt.s32.totalorder %s9, 2
    // Predicated region
    $region21: #{decoder_forward.33} parent=5 // pred_check
      %p125 = pneg %p124
    $region22: #{decoder_forward.33} parent=5 // pred_check_branch
      %127 = sbr.rel (%p125) target = $region24
    $region23: #{decoder_forward.33} parent=5 // pred_region
      // Predicated region
      $region25: #{decoder_forward.33} parent=23 // pred_check
        %p128 = pneg %p29
      $region26: #{decoder_forward.33} parent=23 // pred_check_branch
        %130 = sbr.rel (%p128) target = $region28
      $region27: #{decoder_forward.33} parent=23 // pred_region
        %p131 = scmp.lt.s32.totalorder %s9, 1
        %s132 = scalar_select %p131, %s9, 1
        %s133 = smul.addr %s132, 8
        %s134 = scalar_lea.vmem %s0, %s133
      $region28: #{decoder_forward.33} parent=23 // pred_fallthru
        _
    $region24: #{decoder_forward.33} parent=5 // pred_fallthru
      _
    %p135 = scmp.le.s32.totalorder 1, %s9
    %p136 = scmp.lt.s32.totalorder %s9, 3
    %p137 = pnand %p135, %p136
    %p138 = pneg %p137
    // Predicated region
    $region29: #{decoder_forward.33} parent=5 // pred_check
      _
    $region30: #{decoder_forward.33} parent=5 // pred_check_branch
      %140 = sbr.rel (%p137) target = $region32
    $region31: #{decoder_forward.33} parent=5 // pred_region
      %s141 = ssub.s32 %s9, 1
      %p142 = scmp.lt.s32.totalorder %s14, 1
      %s143 = scalar_select %p142, %s14, 1
      %s144 = smul.addr %s143, 8
      %s145 = scalar_lea.vmem %s0, %s144
      %p146 = pneg %p35
      %p147 = pneg %p32
      %p148 = pneg %p56
      %p149 = pneg %p53
      %p150 = pneg %p77
      %p151 = pneg %p74
      %p152 = pneg %p103
      %p153 = pneg %p100
      %p154 = scmp.lt.s32.totalorder %s14, 1
      %s155 = scalar_select %p154, %s14, 1
      %s156 = smul.addr %s155, 8
      %s157 = scalar_lea.vmem %s3, %s156
      %p158 = scmp.lt.s32.totalorder %s14, 1
      %s159 = scalar_select %p158, %s14, 1
      %s160 = smul.addr %s159, 8
      %s161 = scalar_lea.vmem %s0, %s160
      %p162 = scmp.lt.s32.totalorder %s14, 1
      %s163 = scalar_select %p162, %s14, 1
      %s164 = smul.addr %s163, 8
      %s165 = scalar_lea.vmem %s3, %s164
      %v167 = vld [vmem:[%s161] sm:$0xff]
      %v168 = vpack.c.bf16 %v167, %v167
      %v169 = vld [vmem:[%s1] sm:$0xff]
      %v170 = vld [vmem:[%s1 + $0x8] sm:$0xff]
      %v171 = vld [vmem:[%s1 + $0x10] sm:$0xff]
      %v172 = vld [vmem:[%s1 + $0x18] sm:$0xff]
      %v173 = vpack.c.bf16 %v170, %v169
      %v174 = vpack.c.bf16 %v172, %v171
      %v175 = vld [vmem:[%s2] sm:$0x1]
      %v177 = vlaneseq
      %v178 = vshrl.u32 %v177, 7
      %v179 = vsub.s32 0, %v178
      %v180 = vrot.slane %v175, %v179
      %vm182 = vcmask 261120
      %v184 = vsel %vm182, %v168, 0
      %186 = vmatprep.subr.bf16.mxu0 0
      %187 = vmatpush1.bf16.msra.mxu0 %v173
      %188 = vmatprep.subr.bf16.mxu0 0
      %189 = vmatpush1.bf16.msra.mxu0 %v174
      %190 = vmatprep.subr.bf16.mxu0 0
      %191 = vmatpush1.bf16.msra.mxu0 0
      %192 = vmatprep.subr.bf16.mxu0 0
      %193 = vmatpush1.bf16.msra.mxu0 0
      %194 = vmatprep.subr.bf16.mxu0 0
      %195 = vmatpush1.bf16.msra.mxu0 0
      %196 = vmatprep.subr.bf16.mxu0 0
      %197 = vmatpush1.bf16.msra.mxu0 0
      %198 = vmatprep.subr.bf16.mxu0 0
      %199 = vmatpush1.bf16.msra.mxu0 0
      %200 = vmatprep.subr.bf16.mxu0 0
      %201 = vmatpush1.bf16.msra.mxu0 0
      %202 = vmatprep.subr.bf16.mxu0 0
      %203 = vmatpush1.bf16.msra.mxu0 0
      %204 = vmatprep.subr.bf16.mxu0 0
      %205 = vmatpush1.bf16.msra.mxu0 0
      %206 = vmatprep.subr.bf16.mxu0 0
      %207 = vmatpush1.bf16.msra.mxu0 0
      %208 = vmatprep.subr.bf16.mxu0 0
      %209 = vmatpush1.bf16.msra.mxu0 0
      %210 = vmatprep.subr.bf16.mxu0 0
      %211 = vmatpush1.bf16.msra.mxu0 0
      %212 = vmatprep.subr.bf16.mxu0 0
      %213 = vmatpush1.bf16.msra.mxu0 0
      %214 = vmatprep.subr.bf16.mxu0 0
      %215 = vmatpush1.bf16.msra.mxu0 0
      %216 = vmatprep.subr.bf16.mxu0 0
      %217 = vmatpush1.bf16.msra.mxu0 0
      %218 = vmatprep.mubr.bf16.mxu0 0
      %219 = vmatmul.mubr.bf16.gmra.mrb[0].mxu0 %v184
      %v220 = vpop.f32.mrb[0].mxu0
      %v221 = vadd.f32 %v180, %v220
      %v222 = vpop.f32.mrb[0].mxu0
      %v223 = vpop.f32.mrb[0].mxu0
      %v224 = vpop.f32.mrb[0].mxu0
      %225 = vdwg.mxu0
      %226 = vst [vmem:[%s165] sm:$0xff] %v221
      %p227 = scmp.lt.s32.totalorder %s14, 1
      %s228 = scalar_select %p227, %s14, 1
      %s229 = smul.addr %s228, 8
      %s230 = scalar_lea.vmem %s3, %s229
      // Predicated region
      $region33: #{decoder_forward.33} parent=31 // pred_check
        %p231 = pneg %p100
      $region34: #{decoder_forward.33} parent=31 // pred_check_branch
        %233 = sbr.rel (%p231) target = $region36
      $region35: #{decoder_forward.33} parent=31 // pred_region
        _
      $region36: #{decoder_forward.33} parent=31 // pred_fallthru
        _
    $region32: #{decoder_forward.33} parent=5 // pred_fallthru
      _
    %p234 = scmp.le.s32.totalorder 2, %s9
    // Predicated region
    $region37: #{decoder_forward.33} parent=5 // pred_check
      %p235 = pneg %p234
    $region38: #{decoder_forward.33} parent=5 // pred_check_branch
      %237 = sbr.rel (%p235) target = $region40
    $region39: #{decoder_forward.33} parent=5 // pred_region
      %s238 = ssub.s32 %s9, 2
      // Predicated region
      $region41: #{decoder_forward.33} parent=39 // pred_check
        %p239 = pneg %p106
      $region42: #{decoder_forward.33} parent=39 // pred_check_branch
        %241 = sbr.rel (%p239) target = $region44
      $region43: #{decoder_forward.33} parent=39 // pred_region
        %p242 = scmp.lt.s32.totalorder %s15, 1
        %s243 = scalar_select %p242, %s15, 1
        %s244 = smul.addr %s243, 8
        %s245 = scalar_lea.vmem %s3, %s244
      $region44: #{decoder_forward.33} parent=39 // pred_fallthru
        _
    $region40: #{decoder_forward.33} parent=5 // pred_fallthru
      _
  $region6: #{decoder_forward.33} parent=0 // loop_footer
    %s13 = sadd.s32 1, %s9
  $region7: #{decoder_forward.33} parent=0 // loop_footer_branch
    %8 = sbr.rel target = $region3
  $region8: #{decoder_forward.33} parent=0 // loop_exit
    _

</llo_original>
